<compile_context>
chip_gen: v7x
topology: tpu7x:2x2x1
jax: 0.10.0
libtpu: 0.0.40
codegen_flags: <defaults>
</compile_context>

<pallas_src>
import functools
import math

import jax
import jax.numpy as jnp
from jax import lax
from jax.experimental import pallas as pl
from jax.experimental.pallas import tpu as pltpu

# ----------------------- scaled-down ViT configuration -----------------------
IMG = 32          # image spatial size (224 in the real model)
PATCH = 16        # patch size (same as vit_base_patch16)
IN_CH = 3
EMBED = 64        # embed dim (768 in the real model)
DEPTH = 2         # transformer blocks (12 in the real model)
HEADS = 4         # attention heads (12 in the real model)
MLP_RATIO = 4
HEAD_DIM = EMBED // HEADS
MLP_HIDDEN = EMBED * MLP_RATIO
N_PATCH = (IMG // PATCH) ** 2
SEQ = N_PATCH + 1                  # + cls token
PATCH_DIM = IN_CH * PATCH * PATCH  # conv-as-matmul input dim
LN_EPS = 1e-6                      # timm ViT LayerNorm eps
ATTN_SCALE = HEAD_DIM ** -0.5

# head output sizes (= data['style'].x.shape[0] etc. in the original module)
STYLE_OUT, GENRE_OUT, EMOTION_OUT = 7, 5, 3
HEADS_OUT = STYLE_OUT + GENRE_OUT + EMOTION_OUT
HEADS_PAD = 128                    # lane-dense padded head-output width

N_BLOCK_PARAMS = 12                # refs per transformer block


# ------------------------- in-kernel math helpers -----------------------------
def _layernorm(x, g, b, eps=LN_EPS):
    x = x.astype(jnp.float32)
    mu = jnp.mean(x, axis=-1, keepdims=True)
    var = jnp.mean((x - mu) ** 2, axis=-1, keepdims=True)
    return (x - mu) * lax.rsqrt(var + eps) * g + b


def _gelu(x):
    # exact (erf) GELU, matching torch.nn.GELU default
    return 0.5 * x * (1.0 + lax.erf(x * (1.0 / math.sqrt(2.0))))


# ------------------------------ fused ViT kernel ------------------------------
def _vit_fused_kernel(*refs, depth):
    """One grid step = one batch element; the whole model stays in VMEM."""
    assert len(refs) == 5 + N_BLOCK_PARAMS * depth + 4 + 1
    patches_ref, cls_ref, pos_ref, patch_w_ref, patch_b_ref = refs[:5]
    idx = 5
    blocks = []
    for _ in range(depth):
        blocks.append(refs[idx:idx + N_BLOCK_PARAMS])
        idx += N_BLOCK_PARAMS
    norm_g_ref, norm_b_ref, heads_w_ref, heads_b_ref = refs[idx:idx + 4]
    out_ref = refs[idx + 4]

    # ---- patch embedding + cls token + positional embedding ----
    # patches_ref block is [1, SEQ, PATCH_DIM]; row 0 is a zero row (cls slot).
    patches = patches_ref[0]                                       # [SEQ, PDIM]
    tok = jnp.dot(patches, patch_w_ref[...],
                  preferred_element_type=jnp.float32) + patch_b_ref[...]
    seq_ids = lax.broadcasted_iota(jnp.int32, (SEQ, EMBED), 0)
    h = jnp.where(seq_ids == 0, cls_ref[...], tok) + pos_ref[...]  # [SEQ, EMBED]

    # ---- transformer blocks (pre-norm), fully unrolled ----
    for (ln1_g, ln1_b, qkv_w, qkv_b, proj_w, proj_b,
         ln2_g, ln2_b, fc1_w, fc1_b, fc2_w, fc2_b) in blocks:
        # --- multi-head self-attention ---
        y = _layernorm(h, ln1_g[...], ln1_b[...])
        qkv = jnp.dot(y, qkv_w[...],
                      preferred_element_type=jnp.float32) + qkv_b[...]  # [SEQ,3E]
        pw = proj_w[...]                                                # [E, E]
        a = jnp.zeros((SEQ, EMBED), jnp.float32)
        for hd in range(HEADS):
            lo, hi = hd * HEAD_DIM, (hd + 1) * HEAD_DIM
            q = qkv[:, lo:hi]                                  # [SEQ, Dh]
            k = qkv[:, EMBED + lo:EMBED + hi]
            v = qkv[:, 2 * EMBED + lo:2 * EMBED + hi]
            s = lax.dot_general(q, k, (((1,), (1,)), ((), ())),
                                preferred_element_type=jnp.float32) * ATTN_SCALE
            m = jnp.max(s, axis=-1, keepdims=True)
            e = jnp.exp(s - m)
            p = e / jnp.sum(e, axis=-1, keepdims=True)
            o = jnp.dot(p, v, preferred_element_type=jnp.float32)        # [SEQ,Dh]
            # head-concat + output projection fused: sum_h o_h @ proj_w[rows_h]
            a = a + jnp.dot(o, pw[lo:hi, :],
                            preferred_element_type=jnp.float32)          # [SEQ,E]
        h = h + a + proj_b[...]                      # residual fused in-kernel

        # --- MLP ---
        y = _layernorm(h, ln2_g[...], ln2_b[...])
        y = _gelu(jnp.dot(y, fc1_w[...],
                          preferred_element_type=jnp.float32) + fc1_b[...])
        y = jnp.dot(y, fc2_w[...],
                    preferred_element_type=jnp.float32) + fc2_b[...]
        h = h + y                                    # residual fused in-kernel

    # ---- final norm + fused lane-dense (style|genre|emotion|pad) heads ----
    h = _layernorm(h, norm_g_ref[...], norm_b_ref[...])
    out = jnp.dot(h, heads_w_ref[...],
                  preferred_element_type=jnp.float32) + heads_b_ref[...]
    out_ref[0] = out.astype(out_ref.dtype)           # [SEQ, HEADS_PAD]


# ------------------------------ parameter init -------------------------------
def init_params(key):
    ks = iter(jax.random.split(key, 64))

    def w(shape, scale=0.02):
        return (scale * jax.random.normal(next(ks), shape)).astype(jnp.float32)

    def zeros(shape):
        return jnp.zeros(shape, jnp.float32)

    def ones(shape):
        return jnp.ones(shape, jnp.float32)

    params = {
        # patch-embed conv (16x16, stride 16) expressed as a matmul:
        # weight flattened in PyTorch conv order (c, ph, pw) -> EMBED
        "patch_w": w((PATCH_DIM, EMBED)),
        "patch_b": zeros((EMBED,)),
        "cls": w((1, 1, EMBED)),
        "pos": w((1, SEQ, EMBED)),
        "norm_g": ones((EMBED,)),
        "norm_b": zeros((EMBED,)),
        "blocks": [],
        "style_w": w((EMBED, STYLE_OUT)), "style_b": zeros((STYLE_OUT,)),
        "genre_w": w((EMBED, GENRE_OUT)), "genre_b": zeros((GENRE_OUT,)),
        "emotion_w": w((EMBED, EMOTION_OUT)), "emotion_b": zeros((EMOTION_OUT,)),
    }
    for _ in range(DEPTH):
        params["blocks"].append({
            "ln1_g": ones((EMBED,)), "ln1_b": zeros((EMBED,)),
            "qkv_w": w((EMBED, 3 * EMBED)), "qkv_b": zeros((3 * EMBED,)),
            "proj_w": w((EMBED, EMBED)), "proj_b": zeros((EMBED,)),
            "ln2_g": ones((EMBED,)), "ln2_b": zeros((EMBED,)),
            "fc1_w": w((EMBED, MLP_HIDDEN)), "fc1_b": zeros((MLP_HIDDEN,)),
            "fc2_w": w((MLP_HIDDEN, EMBED)), "fc2_b": zeros((EMBED,)),
        })
    return params


# --------------------------------- forward -----------------------------------
def patchify(x):
    """NCHW image -> [B, N_PATCH, C*P*P], flattened in conv-weight order (c,ph,pw)."""
    B, C, H, W = x.shape
    hp, wp = H // PATCH, W // PATCH
    x = x.reshape(B, C, hp, PATCH, wp, PATCH)
    x = x.transpose(0, 2, 4, 1, 3, 5)                  # B, hp, wp, C, ph, pw
    return x.reshape(B, hp * wp, C * PATCH * PATCH)


def vit_forward(params, x):
    """Equivalent of ViT.forward: returns (token_style, token_genre, token_emotion)."""
    B = x.shape[0]

    # --- JAX-glue: patchify and prepend a zero row for the cls slot ---
    patches = patchify(x)                                           # [B, N, PDIM]
    patches = jnp.concatenate(
        [jnp.zeros((B, 1, PATCH_DIM), patches.dtype), patches], axis=1)  # [B,SEQ,PDIM]

    # --- JAX-glue: fuse the three heads into one lane-dense weight/bias ---
    heads_w = jnp.concatenate(
        [params["style_w"], params["genre_w"], params["emotion_w"]], axis=1)
    heads_w = jnp.pad(heads_w, ((0, 0), (0, HEADS_PAD - HEADS_OUT)))     # [E,128]
    heads_b = jnp.concatenate(
        [params["style_b"], params["genre_b"], params["emotion_b"]])
    heads_b = jnp.pad(heads_b, (0, HEADS_PAD - HEADS_OUT)).reshape(1, HEADS_PAD)

    def b2(v):  # 1-D params as [1, N] 2-D rows (TPU-friendly layout)
        return v.reshape(1, -1)

    inputs = [
        patches,
        params["cls"].reshape(1, EMBED),
        params["pos"].reshape(SEQ, EMBED),
        params["patch_w"], b2(params["patch_b"]),
    ]
    for blk in params["blocks"]:
        inputs += [
            b2(blk["ln1_g"]), b2(blk["ln1_b"]),
            blk["qkv_w"], b2(blk["qkv_b"]),
            blk["proj_w"], b2(blk["proj_b"]),
            b2(blk["ln2_g"]), b2(blk["ln2_b"]),
            blk["fc1_w"], b2(blk["fc1_b"]),
            blk["fc2_w"], b2(blk["fc2_b"]),
        ]
    inputs += [b2(params["norm_g"]), b2(params["norm_b"]), heads_w, heads_b]

    def _const_spec(shape):
        nd = len(shape)
        return pl.BlockSpec(shape, lambda b, _nd=nd: (0,) * _nd)

    in_specs = [pl.BlockSpec((1, SEQ, PATCH_DIM), lambda b: (b, 0, 0))]
    in_specs += [_const_spec(a.shape) for a in inputs[1:]]

    out = pl.pallas_call(
        functools.partial(_vit_fused_kernel, depth=DEPTH),
        out_shape=jax.ShapeDtypeStruct((B, SEQ, HEADS_PAD), jnp.float32),
        grid=(B,),
        in_specs=in_specs,
        out_specs=pl.BlockSpec((1, SEQ, HEADS_PAD), lambda b: (b, 0, 0)),
        compiler_params=pltpu.CompilerParams(dimension_semantics=("parallel",)),
    )(*inputs)

    # --- JAX-glue: 'token' pooling (cls row) + split the fused head output ---
    cls_out = out[:, 0, :]                                          # [B, 128]
    token_style = cls_out[:, :STYLE_OUT]
    token_genre = cls_out[:, STYLE_OUT:STYLE_OUT + GENRE_OUT]
    token_emotion = cls_out[:, STYLE_OUT + GENRE_OUT:HEADS_OUT]
    return token_style, token_genre, token_emotion


# ----------------------------------- main -------------------------------------
if __name__ == "__main__":
    key = jax.random.PRNGKey(0)
    pkey, xkey = jax.random.split(key)
    params = init_params(pkey)
    x = jax.random.normal(xkey, (2, IN_CH, IMG, IMG), jnp.float32)  # NCHW like PyTorch

    fwd = jax.jit(vit_forward)
    ts, tg, te = fwd(params, x)
    jax.block_until_ready((ts, tg, te))

    assert ts.shape == (2, STYLE_OUT)
    assert tg.shape == (2, GENRE_OUT)
    assert te.shape == (2, EMOTION_OUT)
    print("KERNEL_OK")
</pallas_src>

<mosaic_0001>
module attributes {stable_mosaic.version = 11 : i64} {
  func.func @_vit_fused_kernel(%arg0: i32, %arg1: memref<1x5x768xf32, #tpu.memory_space<vmem>>, %arg2: memref<1x64xf32, #tpu.memory_space<vmem>>, %arg3: memref<5x64xf32, #tpu.memory_space<vmem>>, %arg4: memref<768x64xf32, #tpu.memory_space<vmem>>, %arg5: memref<1x64xf32, #tpu.memory_space<vmem>>, %arg6: memref<1x64xf32, #tpu.memory_space<vmem>>, %arg7: memref<1x64xf32, #tpu.memory_space<vmem>>, %arg8: memref<64x192xf32, #tpu.memory_space<vmem>>, %arg9: memref<1x192xf32, #tpu.memory_space<vmem>>, %arg10: memref<64x64xf32, #tpu.memory_space<vmem>>, %arg11: memref<1x64xf32, #tpu.memory_space<vmem>>, %arg12: memref<1x64xf32, #tpu.memory_space<vmem>>, %arg13: memref<1x64xf32, #tpu.memory_space<vmem>>, %arg14: memref<64x256xf32, #tpu.memory_space<vmem>>, %arg15: memref<1x256xf32, #tpu.memory_space<vmem>>, %arg16: memref<256x64xf32, #tpu.memory_space<vmem>>, %arg17: memref<1x64xf32, #tpu.memory_space<vmem>>, %arg18: memref<1x64xf32, #tpu.memory_space<vmem>>, %arg19: memref<1x64xf32, #tpu.memory_space<vmem>>, %arg20: memref<64x192xf32, #tpu.memory_space<vmem>>, %arg21: memref<1x192xf32, #tpu.memory_space<vmem>>, %arg22: memref<64x64xf32, #tpu.memory_space<vmem>>, %arg23: memref<1x64xf32, #tpu.memory_space<vmem>>, %arg24: memref<1x64xf32, #tpu.memory_space<vmem>>, %arg25: memref<1x64xf32, #tpu.memory_space<vmem>>, %arg26: memref<64x256xf32, #tpu.memory_space<vmem>>, %arg27: memref<1x256xf32, #tpu.memory_space<vmem>>, %arg28: memref<256x64xf32, #tpu.memory_space<vmem>>, %arg29: memref<1x64xf32, #tpu.memory_space<vmem>>, %arg30: memref<1x64xf32, #tpu.memory_space<vmem>>, %arg31: memref<1x64xf32, #tpu.memory_space<vmem>>, %arg32: memref<64x128xf32, #tpu.memory_space<vmem>>, %arg33: memref<1x128xf32, #tpu.memory_space<vmem>>, %arg34: memref<1x5x128xf32, #tpu.memory_space<vmem>>) attributes {dimension_semantics = [#tpu.dimension_semantics<parallel>], iteration_bounds = array<i64: 2>, scalar_prefetch = 0 : i64, scratch_operands = 0 : i64, tpu.core_type = #tpu.core_type<tc>, window_params = [{transform_indices = @transform_0, window_bounds = array<i64: 1, 5, 768>}, {pipeline_mode = #tpu.pipeline_mode<synchronous>, transform_indices = @transform_1, window_bounds = array<i64: 1, 64>}, {pipeline_mode = #tpu.pipeline_mode<synchronous>, transform_indices = @transform_2, window_bounds = array<i64: 5, 64>}, {pipeline_mode = #tpu.pipeline_mode<synchronous>, transform_indices = @transform_3, window_bounds = array<i64: 768, 64>}, {pipeline_mode = #tpu.pipeline_mode<synchronous>, transform_indices = @transform_4, window_bounds = array<i64: 1, 64>}, {pipeline_mode = #tpu.pipeline_mode<synchronous>, transform_indices = @transform_5, window_bounds = array<i64: 1, 64>}, {pipeline_mode = #tpu.pipeline_mode<synchronous>, transform_indices = @transform_6, window_bounds = array<i64: 1, 64>}, {pipeline_mode = #tpu.pipeline_mode<synchronous>, transform_indices = @transform_7, window_bounds = array<i64: 64, 192>}, {pipeline_mode = #tpu.pipeline_mode<synchronous>, transform_indices = @transform_8, window_bounds = array<i64: 1, 192>}, {pipeline_mode = #tpu.pipeline_mode<synchronous>, transform_indices = @transform_9, window_bounds = array<i64: 64, 64>}, {pipeline_mode = #tpu.pipeline_mode<synchronous>, transform_indices = @transform_10, window_bounds = array<i64: 1, 64>}, {pipeline_mode = #tpu.pipeline_mode<synchronous>, transform_indices = @transform_11, window_bounds = array<i64: 1, 64>}, {pipeline_mode = #tpu.pipeline_mode<synchronous>, transform_indices = @transform_12, window_bounds = array<i64: 1, 64>}, {pipeline_mode = #tpu.pipeline_mode<synchronous>, transform_indices = @transform_13, window_bounds = array<i64: 64, 256>}, {pipeline_mode = #tpu.pipeline_mode<synchronous>, transform_indices = @transform_14, window_bounds = array<i64: 1, 256>}, {pipeline_mode = #tpu.pipeline_mode<synchronous>, transform_indices = @transform_15, window_bounds = array<i64: 256, 64>}, {pipeline_mode = #tpu.pipeline_mode<synchronous>, transform_indices = @transform_16, window_bounds = array<i64: 1, 64>}, {pipeline_mode = #tpu.pipeline_mode<synchronous>, transform_indices = @transform_17, window_bounds = array<i64: 1, 64>}, {pipeline_mode = #tpu.pipeline_mode<synchronous>, transform_indices = @transform_18, window_bounds = array<i64: 1, 64>}, {pipeline_mode = #tpu.pipeline_mode<synchronous>, transform_indices = @transform_19, window_bounds = array<i64: 64, 192>}, {pipeline_mode = #tpu.pipeline_mode<synchronous>, transform_indices = @transform_20, window_bounds = array<i64: 1, 192>}, {pipeline_mode = #tpu.pipeline_mode<synchronous>, transform_indices = @transform_21, window_bounds = array<i64: 64, 64>}, {pipeline_mode = #tpu.pipeline_mode<synchronous>, transform_indices = @transform_22, window_bounds = array<i64: 1, 64>}, {pipeline_mode = #tpu.pipeline_mode<synchronous>, transform_indices = @transform_23, window_bounds = array<i64: 1, 64>}, {pipeline_mode = #tpu.pipeline_mode<synchronous>, transform_indices = @transform_24, window_bounds = array<i64: 1, 64>}, {pipeline_mode = #tpu.pipeline_mode<synchronous>, transform_indices = @transform_25, window_bounds = array<i64: 64, 256>}, {pipeline_mode = #tpu.pipeline_mode<synchronous>, transform_indices = @transform_26, window_bounds = array<i64: 1, 256>}, {pipeline_mode = #tpu.pipeline_mode<synchronous>, transform_indices = @transform_27, window_bounds = array<i64: 256, 64>}, {pipeline_mode = #tpu.pipeline_mode<synchronous>, transform_indices = @transform_28, window_bounds = array<i64: 1, 64>}, {pipeline_mode = #tpu.pipeline_mode<synchronous>, transform_indices = @transform_29, window_bounds = array<i64: 1, 64>}, {pipeline_mode = #tpu.pipeline_mode<synchronous>, transform_indices = @transform_30, window_bounds = array<i64: 1, 64>}, {pipeline_mode = #tpu.pipeline_mode<synchronous>, transform_indices = @transform_31, window_bounds = array<i64: 64, 128>}, {pipeline_mode = #tpu.pipeline_mode<synchronous>, transform_indices = @transform_32, window_bounds = array<i64: 1, 128>}, {transform_indices = @transform_33, window_bounds = array<i64: 1, 5, 128>}]} {
    %c0 = arith.constant 0 : index
    %c0_0 = arith.constant 0 : index
    %c0_1 = arith.constant 0 : index
    %0 = vector.load %arg1[%c0, %c0_0, %c0_1] : memref<1x5x768xf32, #tpu.memory_space<vmem>>, vector<1x5x768xf32>
    %1 = vector.shape_cast %0 : vector<1x5x768xf32> to vector<5x768xf32>
    %c0_2 = arith.constant 0 : index
    %c0_3 = arith.constant 0 : index
    %2 = vector.load %arg4[%c0_2, %c0_3] : memref<768x64xf32, #tpu.memory_space<vmem>>, vector<768x64xf32>
    %cst = arith.constant dense<0.000000e+00> : vector<5x64xf32>
    %3 = tpu.matmul %1, %2, %cst {dimension_numbers = #tpu.dot_dimension_numbers<[1], [0], [0], [1], [0, 0, 1, 1], [], []>} : vector<5x768xf32>, vector<768x64xf32>, vector<5x64xf32> -> vector<5x64xf32>
    %c0_4 = arith.constant 0 : index
    %c0_5 = arith.constant 0 : index
    %4 = vector.load %arg5[%c0_4, %c0_5] : memref<1x64xf32, #tpu.memory_space<vmem>>, vector<1x64xf32>
    %5 = vector.broadcast %4 : vector<1x64xf32> to vector<5x64xf32>
    %6 = arith.addf %3, %5 : vector<5x64xf32>
    %7 = tpu.iota {dimensions = array<i32: 0>} : vector<5x64xi32>
    %c0_i32 = arith.constant 0 : i32
    %8 = vector.broadcast %c0_i32 : i32 to vector<5x64xi32>
    %9 = arith.cmpi eq, %7, %8 : vector<5x64xi32>
    %c0_6 = arith.constant 0 : index
    %c0_7 = arith.constant 0 : index
    %10 = vector.load %arg2[%c0_6, %c0_7] : memref<1x64xf32, #tpu.memory_space<vmem>>, vector<1x64xf32>
    %11 = vector.shape_cast %10 : vector<1x64xf32> to vector<1x64xf32>
    %12 = vector.broadcast %11 : vector<1x64xf32> to vector<5x64xf32>
    %13 = arith.select %9, %12, %6 : vector<5x64xi1>, vector<5x64xf32>
    %c0_8 = arith.constant 0 : index
    %c0_9 = arith.constant 0 : index
    %14 = vector.load %arg3[%c0_8, %c0_9] : memref<5x64xf32, #tpu.memory_space<vmem>>, vector<5x64xf32>
    %15 = arith.addf %13, %14 : vector<5x64xf32>
    %c0_10 = arith.constant 0 : index
    %c0_11 = arith.constant 0 : index
    %16 = vector.load %arg6[%c0_10, %c0_11] : memref<1x64xf32, #tpu.memory_space<vmem>>, vector<1x64xf32>
    %c0_12 = arith.constant 0 : index
    %c0_13 = arith.constant 0 : index
    %17 = vector.load %arg7[%c0_12, %c0_13] : memref<1x64xf32, #tpu.memory_space<vmem>>, vector<1x64xf32>
    %cst_14 = arith.constant dense<0.000000e+00> : vector<5xf32>
    %18 = vector.multi_reduction <add>, %15, %cst_14 [1] : vector<5x64xf32> to vector<5xf32>
    %19 = vector.shape_cast %18 : vector<5xf32> to vector<5x1xf32>
    %cst_15 = arith.constant 6.400000e+01 : f32
    %20 = vector.broadcast %cst_15 : f32 to vector<5x1xf32>
    %21 = arith.divf %19, %20 : vector<5x1xf32>
    %22 = vector.broadcast %21 : vector<5x1xf32> to vector<5x64xf32>
    %23 = arith.subf %15, %22 : vector<5x64xf32>
    %24 = arith.mulf %23, %23 : vector<5x64xf32>
    %cst_16 = arith.constant dense<0.000000e+00> : vector<5xf32>
    %25 = vector.multi_reduction <add>, %24, %cst_16 [1] : vector<5x64xf32> to vector<5xf32>
    %26 = vector.shape_cast %25 : vector<5xf32> to vector<5x1xf32>
    %cst_17 = arith.constant 6.400000e+01 : f32
    %27 = vector.broadcast %cst_17 : f32 to vector<5x1xf32>
    %28 = arith.divf %26, %27 : vector<5x1xf32>
    %29 = vector.broadcast %21 : vector<5x1xf32> to vector<5x64xf32>
    %30 = arith.subf %15, %29 : vector<5x64xf32>
    %cst_18 = arith.constant 9.99999997E-7 : f32
    %31 = vector.broadcast %cst_18 : f32 to vector<5x1xf32>
    %32 = arith.addf %28, %31 : vector<5x1xf32>
    %33 = math.rsqrt %32 : vector<5x1xf32>
    %34 = vector.broadcast %33 : vector<5x1xf32> to vector<5x64xf32>
    %35 = arith.mulf %30, %34 : vector<5x64xf32>
    %36 = vector.broadcast %16 : vector<1x64xf32> to vector<5x64xf32>
    %37 = arith.mulf %35, %36 : vector<5x64xf32>
    %38 = vector.broadcast %17 : vector<1x64xf32> to vector<5x64xf32>
    %39 = arith.addf %37, %38 : vector<5x64xf32>
    %c0_19 = arith.constant 0 : index
    %c0_20 = arith.constant 0 : index
    %40 = vector.load %arg8[%c0_19, %c0_20] : memref<64x192xf32, #tpu.memory_space<vmem>>, vector<64x192xf32>
    %cst_21 = arith.constant dense<0.000000e+00> : vector<5x192xf32>
    %41 = tpu.matmul %39, %40, %cst_21 {dimension_numbers = #tpu.dot_dimension_numbers<[1], [0], [0], [1], [0, 0, 1, 1], [], []>} : vector<5x64xf32>, vector<64x192xf32>, vector<5x192xf32> -> vector<5x192xf32>
    %c0_22 = arith.constant 0 : index
    %c0_23 = arith.constant 0 : index
    %42 = vector.load %arg9[%c0_22, %c0_23] : memref<1x192xf32, #tpu.memory_space<vmem>>, vector<1x192xf32>
    %43 = vector.broadcast %42 : vector<1x192xf32> to vector<5x192xf32>
    %44 = arith.addf %41, %43 : vector<5x192xf32>
    %c0_24 = arith.constant 0 : index
    %c0_25 = arith.constant 0 : index
    %45 = vector.load %arg10[%c0_24, %c0_25] : memref<64x64xf32, #tpu.memory_space<vmem>>, vector<64x64xf32>
    %cst_26 = arith.constant 0.000000e+00 : f32
    %46 = vector.broadcast %cst_26 : f32 to vector<5x64xf32>
    %47 = vector.extract_strided_slice %44 {offsets = [0, 0], sizes = [5, 16], strides = [1, 1]} : vector<5x192xf32> to vector<5x16xf32>
    %48 = vector.extract_strided_slice %44 {offsets = [0, 64], sizes = [5, 16], strides = [1, 1]} : vector<5x192xf32> to vector<5x16xf32>
    %49 = vector.extract_strided_slice %44 {offsets = [0, 128], sizes = [5, 16], strides = [1, 1]} : vector<5x192xf32> to vector<5x16xf32>
    %cst_27 = arith.constant dense<0.000000e+00> : vector<5x5xf32>
    %50 = tpu.matmul %47, %48, %cst_27 {dimension_numbers = #tpu.dot_dimension_numbers<[1], [1], [0], [0], [0, 0, 1, 0], [], []>} : vector<5x16xf32>, vector<5x16xf32>, vector<5x5xf32> -> vector<5x5xf32>
    %cst_28 = arith.constant 2.500000e-01 : f32
    %51 = vector.broadcast %cst_28 : f32 to vector<5x5xf32>
    %52 = arith.mulf %50, %51 : vector<5x5xf32>
    %cst_29 = arith.constant dense<0xFF800000> : vector<5xf32>
    %53 = vector.multi_reduction <maximumf>, %52, %cst_29 [1] : vector<5x5xf32> to vector<5xf32>
    %54 = vector.shape_cast %53 : vector<5xf32> to vector<5x1xf32>
    %55 = vector.broadcast %54 : vector<5x1xf32> to vector<5x5xf32>
    %56 = arith.subf %52, %55 : vector<5x5xf32>
    %57 = math.exp %56 : vector<5x5xf32>
    %cst_30 = arith.constant dense<0.000000e+00> : vector<5xf32>
    %58 = vector.multi_reduction <add>, %57, %cst_30 [1] : vector<5x5xf32> to vector<5xf32>
    %59 = vector.shape_cast %58 : vector<5xf32> to vector<5x1xf32>
    %60 = vector.broadcast %59 : vector<5x1xf32> to vector<5x5xf32>
    %61 = arith.divf %57, %60 : vector<5x5xf32>
    %cst_31 = arith.constant dense<0.000000e+00> : vector<5x16xf32>
    %62 = tpu.matmul %61, %49, %cst_31 {dimension_numbers = #tpu.dot_dimension_numbers<[1], [0], [0], [1], [0, 0, 1, 1], [], []>} : vector<5x5xf32>, vector<5x16xf32>, vector<5x16xf32> -> vector<5x16xf32>
    %63 = vector.extract_strided_slice %45 {offsets = [0, 0], sizes = [16, 64], strides = [1, 1]} : vector<64x64xf32> to vector<16x64xf32>
    %cst_32 = arith.constant dense<0.000000e+00> : vector<5x64xf32>
    %64 = tpu.matmul %62, %63, %cst_32 {dimension_numbers = #tpu.dot_dimension_numbers<[1], [0], [0], [1], [0, 0, 1, 1], [], []>} : vector<5x16xf32>, vector<16x64xf32>, vector<5x64xf32> -> vector<5x64xf32>
    %65 = arith.addf %46, %64 : vector<5x64xf32>
    %66 = vector.extract_strided_slice %44 {offsets = [0, 16], sizes = [5, 16], strides = [1, 1]} : vector<5x192xf32> to vector<5x16xf32>
    %67 = vector.extract_strided_slice %44 {offsets = [0, 80], sizes = [5, 16], strides = [1, 1]} : vector<5x192xf32> to vector<5x16xf32>
    %68 = vector.extract_strided_slice %44 {offsets = [0, 144], sizes = [5, 16], strides = [1, 1]} : vector<5x192xf32> to vector<5x16xf32>
    %cst_33 = arith.constant dense<0.000000e+00> : vector<5x5xf32>
    %69 = tpu.matmul %66, %67, %cst_33 {dimension_numbers = #tpu.dot_dimension_numbers<[1], [1], [0], [0], [0, 0, 1, 0], [], []>} : vector<5x16xf32>, vector<5x16xf32>, vector<5x5xf32> -> vector<5x5xf32>
    %cst_34 = arith.constant 2.500000e-01 : f32
    %70 = vector.broadcast %cst_34 : f32 to vector<5x5xf32>
    %71 = arith.mulf %69, %70 : vector<5x5xf32>
    %cst_35 = arith.constant dense<0xFF800000> : vector<5xf32>
    %72 = vector.multi_reduction <maximumf>, %71, %cst_35 [1] : vector<5x5xf32> to vector<5xf32>
    %73 = vector.shape_cast %72 : vector<5xf32> to vector<5x1xf32>
    %74 = vector.broadcast %73 : vector<5x1xf32> to vector<5x5xf32>
    %75 = arith.subf %71, %74 : vector<5x5xf32>
    %76 = math.exp %75 : vector<5x5xf32>
    %cst_36 = arith.constant dense<0.000000e+00> : vector<5xf32>
    %77 = vector.multi_reduction <add>, %76, %cst_36 [1] : vector<5x5xf32> to vector<5xf32>
    %78 = vector.shape_cast %77 : vector<5xf32> to vector<5x1xf32>
    %79 = vector.broadcast %78 : vector<5x1xf32> to vector<5x5xf32>
    %80 = arith.divf %76, %79 : vector<5x5xf32>
    %cst_37 = arith.constant dense<0.000000e+00> : vector<5x16xf32>
    %81 = tpu.matmul %80, %68, %cst_37 {dimension_numbers = #tpu.dot_dimension_numbers<[1], [0], [0], [1], [0, 0, 1, 1], [], []>} : vector<5x5xf32>, vector<5x16xf32>, vector<5x16xf32> -> vector<5x16xf32>
    %82 = vector.extract_strided_slice %45 {offsets = [16, 0], sizes = [16, 64], strides = [1, 1]} : vector<64x64xf32> to vector<16x64xf32>
    %cst_38 = arith.constant dense<0.000000e+00> : vector<5x64xf32>
    %83 = tpu.matmul %81, %82, %cst_38 {dimension_numbers = #tpu.dot_dimension_numbers<[1], [0], [0], [1], [0, 0, 1, 1], [], []>} : vector<5x16xf32>, vector<16x64xf32>, vector<5x64xf32> -> vector<5x64xf32>
    %84 = arith.addf %65, %83 : vector<5x64xf32>
    %85 = vector.extract_strided_slice %44 {offsets = [0, 32], sizes = [5, 16], strides = [1, 1]} : vector<5x192xf32> to vector<5x16xf32>
    %86 = vector.extract_strided_slice %44 {offsets = [0, 96], sizes = [5, 16], strides = [1, 1]} : vector<5x192xf32> to vector<5x16xf32>
    %87 = vector.extract_strided_slice %44 {offsets = [0, 160], sizes = [5, 16], strides = [1, 1]} : vector<5x192xf32> to vector<5x16xf32>
    %cst_39 = arith.constant dense<0.000000e+00> : vector<5x5xf32>
    %88 = tpu.matmul %85, %86, %cst_39 {dimension_numbers = #tpu.dot_dimension_numbers<[1], [1], [0], [0], [0, 0, 1, 0], [], []>} : vector<5x16xf32>, vector<5x16xf32>, vector<5x5xf32> -> vector<5x5xf32>
    %cst_40 = arith.constant 2.500000e-01 : f32
    %89 = vector.broadcast %cst_40 : f32 to vector<5x5xf32>
    %90 = arith.mulf %88, %89 : vector<5x5xf32>
    %cst_41 = arith.constant dense<0xFF800000> : vector<5xf32>
    %91 = vector.multi_reduction <maximumf>, %90, %cst_41 [1] : vector<5x5xf32> to vector<5xf32>
    %92 = vector.shape_cast %91 : vector<5xf32> to vector<5x1xf32>
    %93 = vector.broadcast %92 : vector<5x1xf32> to vector<5x5xf32>
    %94 = arith.subf %90, %93 : vector<5x5xf32>
    %95 = math.exp %94 : vector<5x5xf32>
    %cst_42 = arith.constant dense<0.000000e+00> : vector<5xf32>
    %96 = vector.multi_reduction <add>, %95, %cst_42 [1] : vector<5x5xf32> to vector<5xf32>
    %97 = vector.shape_cast %96 : vector<5xf32> to vector<5x1xf32>
    %98 = vector.broadcast %97 : vector<5x1xf32> to vector<5x5xf32>
    %99 = arith.divf %95, %98 : vector<5x5xf32>
    %cst_43 = arith.constant dense<0.000000e+00> : vector<5x16xf32>
    %100 = tpu.matmul %99, %87, %cst_43 {dimension_numbers = #tpu.dot_dimension_numbers<[1], [0], [0], [1], [0, 0, 1, 1], [], []>} : vector<5x5xf32>, vector<5x16xf32>, vector<5x16xf32> -> vector<5x16xf32>
    %101 = vector.extract_strided_slice %45 {offsets = [32, 0], sizes = [16, 64], strides = [1, 1]} : vector<64x64xf32> to vector<16x64xf32>
    %cst_44 = arith.constant dense<0.000000e+00> : vector<5x64xf32>
    %102 = tpu.matmul %100, %101, %cst_44 {dimension_numbers = #tpu.dot_dimension_numbers<[1], [0], [0], [1], [0, 0, 1, 1], [], []>} : vector<5x16xf32>, vector<16x64xf32>, vector<5x64xf32> -> vector<5x64xf32>
    %103 = arith.addf %84, %102 : vector<5x64xf32>
    %104 = vector.extract_strided_slice %44 {offsets = [0, 48], sizes = [5, 16], strides = [1, 1]} : vector<5x192xf32> to vector<5x16xf32>
    %105 = vector.extract_strided_slice %44 {offsets = [0, 112], sizes = [5, 16], strides = [1, 1]} : vector<5x192xf32> to vector<5x16xf32>
    %106 = vector.extract_strided_slice %44 {offsets = [0, 176], sizes = [5, 16], strides = [1, 1]} : vector<5x192xf32> to vector<5x16xf32>
    %cst_45 = arith.constant dense<0.000000e+00> : vector<5x5xf32>
    %107 = tpu.matmul %104, %105, %cst_45 {dimension_numbers = #tpu.dot_dimension_numbers<[1], [1], [0], [0], [0, 0, 1, 0], [], []>} : vector<5x16xf32>, vector<5x16xf32>, vector<5x5xf32> -> vector<5x5xf32>
    %cst_46 = arith.constant 2.500000e-01 : f32
    %108 = vector.broadcast %cst_46 : f32 to vector<5x5xf32>
    %109 = arith.mulf %107, %108 : vector<5x5xf32>
    %cst_47 = arith.constant dense<0xFF800000> : vector<5xf32>
    %110 = vector.multi_reduction <maximumf>, %109, %cst_47 [1] : vector<5x5xf32> to vector<5xf32>
    %111 = vector.shape_cast %110 : vector<5xf32> to vector<5x1xf32>
    %112 = vector.broadcast %111 : vector<5x1xf32> to vector<5x5xf32>
    %113 = arith.subf %109, %112 : vector<5x5xf32>
    %114 = math.exp %113 : vector<5x5xf32>
    %cst_48 = arith.constant dense<0.000000e+00> : vector<5xf32>
    %115 = vector.multi_reduction <add>, %114, %cst_48 [1] : vector<5x5xf32> to vector<5xf32>
    %116 = vector.shape_cast %115 : vector<5xf32> to vector<5x1xf32>
    %117 = vector.broadcast %116 : vector<5x1xf32> to vector<5x5xf32>
    %118 = arith.divf %114, %117 : vector<5x5xf32>
    %cst_49 = arith.constant dense<0.000000e+00> : vector<5x16xf32>
    %119 = tpu.matmul %118, %106, %cst_49 {dimension_numbers = #tpu.dot_dimension_numbers<[1], [0], [0], [1], [0, 0, 1, 1], [], []>} : vector<5x5xf32>, vector<5x16xf32>, vector<5x16xf32> -> vector<5x16xf32>
    %120 = vector.extract_strided_slice %45 {offsets = [48, 0], sizes = [16, 64], strides = [1, 1]} : vector<64x64xf32> to vector<16x64xf32>
    %cst_50 = arith.constant dense<0.000000e+00> : vector<5x64xf32>
    %121 = tpu.matmul %119, %120, %cst_50 {dimension_numbers = #tpu.dot_dimension_numbers<[1], [0], [0], [1], [0, 0, 1, 1], [], []>} : vector<5x16xf32>, vector<16x64xf32>, vector<5x64xf32> -> vector<5x64xf32>
    %122 = arith.addf %103, %121 : vector<5x64xf32>
    %123 = arith.addf %15, %122 : vector<5x64xf32>
    %c0_51 = arith.constant 0 : index
    %c0_52 = arith.constant 0 : index
    %124 = vector.load %arg11[%c0_51, %c0_52] : memref<1x64xf32, #tpu.memory_space<vmem>>, vector<1x64xf32>
    %125 = vector.broadcast %124 : vector<1x64xf32> to vector<5x64xf32>
    %126 = arith.addf %123, %125 : vector<5x64xf32>
    %c0_53 = arith.constant 0 : index
    %c0_54 = arith.constant 0 : index
    %127 = vector.load %arg12[%c0_53, %c0_54] : memref<1x64xf32, #tpu.memory_space<vmem>>, vector<1x64xf32>
    %c0_55 = arith.constant 0 : index
    %c0_56 = arith.constant 0 : index
    %128 = vector.load %arg13[%c0_55, %c0_56] : memref<1x64xf32, #tpu.memory_space<vmem>>, vector<1x64xf32>
    %cst_57 = arith.constant dense<0.000000e+00> : vector<5xf32>
    %129 = vector.multi_reduction <add>, %126, %cst_57 [1] : vector<5x64xf32> to vector<5xf32>
    %130 = vector.shape_cast %129 : vector<5xf32> to vector<5x1xf32>
    %cst_58 = arith.constant 6.400000e+01 : f32
    %131 = vector.broadcast %cst_58 : f32 to vector<5x1xf32>
    %132 = arith.divf %130, %131 : vector<5x1xf32>
    %133 = vector.broadcast %132 : vector<5x1xf32> to vector<5x64xf32>
    %134 = arith.subf %126, %133 : vector<5x64xf32>
    %135 = arith.mulf %134, %134 : vector<5x64xf32>
    %cst_59 = arith.constant dense<0.000000e+00> : vector<5xf32>
    %136 = vector.multi_reduction <add>, %135, %cst_59 [1] : vector<5x64xf32> to vector<5xf32>
    %137 = vector.shape_cast %136 : vector<5xf32> to vector<5x1xf32>
    %cst_60 = arith.constant 6.400000e+01 : f32
    %138 = vector.broadcast %cst_60 : f32 to vector<5x1xf32>
    %139 = arith.divf %137, %138 : vector<5x1xf32>
    %140 = vector.broadcast %132 : vector<5x1xf32> to vector<5x64xf32>
    %141 = arith.subf %126, %140 : vector<5x64xf32>
    %cst_61 = arith.constant 9.99999997E-7 : f32
    %142 = vector.broadcast %cst_61 : f32 to vector<5x1xf32>
    %143 = arith.addf %139, %142 : vector<5x1xf32>
    %144 = math.rsqrt %143 : vector<5x1xf32>
    %145 = vector.broadcast %144 : vector<5x1xf32> to vector<5x64xf32>
    %146 = arith.mulf %141, %145 : vector<5x64xf32>
    %147 = vector.broadcast %127 : vector<1x64xf32> to vector<5x64xf32>
    %148 = arith.mulf %146, %147 : vector<5x64xf32>
    %149 = vector.broadcast %128 : vector<1x64xf32> to vector<5x64xf32>
    %150 = arith.addf %148, %149 : vector<5x64xf32>
    %c0_62 = arith.constant 0 : index
    %c0_63 = arith.constant 0 : index
    %151 = vector.load %arg14[%c0_62, %c0_63] : memref<64x256xf32, #tpu.memory_space<vmem>>, vector<64x256xf32>
    %cst_64 = arith.constant dense<0.000000e+00> : vector<5x256xf32>
    %152 = tpu.matmul %150, %151, %cst_64 {dimension_numbers = #tpu.dot_dimension_numbers<[1], [0], [0], [1], [0, 0, 1, 1], [], []>} : vector<5x64xf32>, vector<64x256xf32>, vector<5x256xf32> -> vector<5x256xf32>
    %c0_65 = arith.constant 0 : index
    %c0_66 = arith.constant 0 : index
    %153 = vector.load %arg15[%c0_65, %c0_66] : memref<1x256xf32, #tpu.memory_space<vmem>>, vector<1x256xf32>
    %154 = vector.broadcast %153 : vector<1x256xf32> to vector<5x256xf32>
    %155 = arith.addf %152, %154 : vector<5x256xf32>
    %cst_67 = arith.constant 5.000000e-01 : f32
    %156 = vector.broadcast %cst_67 : f32 to vector<5x256xf32>
    %157 = arith.mulf %156, %155 : vector<5x256xf32>
    %cst_68 = arith.constant 0.707106769 : f32
    %158 = vector.broadcast %cst_68 : f32 to vector<5x256xf32>
    %159 = arith.mulf %155, %158 : vector<5x256xf32>
    %160 = math.erf %159 : vector<5x256xf32>
    %cst_69 = arith.constant 1.000000e+00 : f32
    %161 = vector.broadcast %cst_69 : f32 to vector<5x256xf32>
    %162 = arith.addf %161, %160 : vector<5x256xf32>
    %163 = arith.mulf %157, %162 : vector<5x256xf32>
    %c0_70 = arith.constant 0 : index
    %c0_71 = arith.constant 0 : index
    %164 = vector.load %arg16[%c0_70, %c0_71] : memref<256x64xf32, #tpu.memory_space<vmem>>, vector<256x64xf32>
    %cst_72 = arith.constant dense<0.000000e+00> : vector<5x64xf32>
    %165 = tpu.matmul %163, %164, %cst_72 {dimension_numbers = #tpu.dot_dimension_numbers<[1], [0], [0], [1], [0, 0, 1, 1], [], []>} : vector<5x256xf32>, vector<256x64xf32>, vector<5x64xf32> -> vector<5x64xf32>
    %c0_73 = arith.constant 0 : index
    %c0_74 = arith.constant 0 : index
    %166 = vector.load %arg17[%c0_73, %c0_74] : memref<1x64xf32, #tpu.memory_space<vmem>>, vector<1x64xf32>
    %167 = vector.broadcast %166 : vector<1x64xf32> to vector<5x64xf32>
    %168 = arith.addf %165, %167 : vector<5x64xf32>
    %169 = arith.addf %126, %168 : vector<5x64xf32>
    %c0_75 = arith.constant 0 : index
    %c0_76 = arith.constant 0 : index
    %170 = vector.load %arg18[%c0_75, %c0_76] : memref<1x64xf32, #tpu.memory_space<vmem>>, vector<1x64xf32>
    %c0_77 = arith.constant 0 : index
    %c0_78 = arith.constant 0 : index
    %171 = vector.load %arg19[%c0_77, %c0_78] : memref<1x64xf32, #tpu.memory_space<vmem>>, vector<1x64xf32>
    %cst_79 = arith.constant dense<0.000000e+00> : vector<5xf32>
    %172 = vector.multi_reduction <add>, %169, %cst_79 [1] : vector<5x64xf32> to vector<5xf32>
    %173 = vector.shape_cast %172 : vector<5xf32> to vector<5x1xf32>
    %cst_80 = arith.constant 6.400000e+01 : f32
    %174 = vector.broadcast %cst_80 : f32 to vector<5x1xf32>
    %175 = arith.divf %173, %174 : vector<5x1xf32>
    %176 = vector.broadcast %175 : vector<5x1xf32> to vector<5x64xf32>
    %177 = arith.subf %169, %176 : vector<5x64xf32>
    %178 = arith.mulf %177, %177 : vector<5x64xf32>
    %cst_81 = arith.constant dense<0.000000e+00> : vector<5xf32>
    %179 = vector.multi_reduction <add>, %178, %cst_81 [1] : vector<5x64xf32> to vector<5xf32>
    %180 = vector.shape_cast %179 : vector<5xf32> to vector<5x1xf32>
    %cst_82 = arith.constant 6.400000e+01 : f32
    %181 = vector.broadcast %cst_82 : f32 to vector<5x1xf32>
    %182 = arith.divf %180, %181 : vector<5x1xf32>
    %183 = vector.broadcast %175 : vector<5x1xf32> to vector<5x64xf32>
    %184 = arith.subf %169, %183 : vector<5x64xf32>
    %cst_83 = arith.constant 9.99999997E-7 : f32
    %185 = vector.broadcast %cst_83 : f32 to vector<5x1xf32>
    %186 = arith.addf %182, %185 : vector<5x1xf32>
    %187 = math.rsqrt %186 : vector<5x1xf32>
    %188 = vector.broadcast %187 : vector<5x1xf32> to vector<5x64xf32>
    %189 = arith.mulf %184, %188 : vector<5x64xf32>
    %190 = vector.broadcast %170 : vector<1x64xf32> to vector<5x64xf32>
    %191 = arith.mulf %189, %190 : vector<5x64xf32>
    %192 = vector.broadcast %171 : vector<1x64xf32> to vector<5x64xf32>
    %193 = arith.addf %191, %192 : vector<5x64xf32>
    %c0_84 = arith.constant 0 : index
    %c0_85 = arith.constant 0 : index
    %194 = vector.load %arg20[%c0_84, %c0_85] : memref<64x192xf32, #tpu.memory_space<vmem>>, vector<64x192xf32>
    %cst_86 = arith.constant dense<0.000000e+00> : vector<5x192xf32>
    %195 = tpu.matmul %193, %194, %cst_86 {dimension_numbers = #tpu.dot_dimension_numbers<[1], [0], [0], [1], [0, 0, 1, 1], [], []>} : vector<5x64xf32>, vector<64x192xf32>, vector<5x192xf32> -> vector<5x192xf32>
    %c0_87 = arith.constant 0 : index
    %c0_88 = arith.constant 0 : index
    %196 = vector.load %arg21[%c0_87, %c0_88] : memref<1x192xf32, #tpu.memory_space<vmem>>, vector<1x192xf32>
    %197 = vector.broadcast %196 : vector<1x192xf32> to vector<5x192xf32>
    %198 = arith.addf %195, %197 : vector<5x192xf32>
    %c0_89 = arith.constant 0 : index
    %c0_90 = arith.constant 0 : index
    %199 = vector.load %arg22[%c0_89, %c0_90] : memref<64x64xf32, #tpu.memory_space<vmem>>, vector<64x64xf32>
    %cst_91 = arith.constant 0.000000e+00 : f32
    %200 = vector.broadcast %cst_91 : f32 to vector<5x64xf32>
    %201 = vector.extract_strided_slice %198 {offsets = [0, 0], sizes = [5, 16], strides = [1, 1]} : vector<5x192xf32> to vector<5x16xf32>
    %202 = vector.extract_strided_slice %198 {offsets = [0, 64], sizes = [5, 16], strides = [1, 1]} : vector<5x192xf32> to vector<5x16xf32>
    %203 = vector.extract_strided_slice %198 {offsets = [0, 128], sizes = [5, 16], strides = [1, 1]} : vector<5x192xf32> to vector<5x16xf32>
    %cst_92 = arith.constant dense<0.000000e+00> : vector<5x5xf32>
    %204 = tpu.matmul %201, %202, %cst_92 {dimension_numbers = #tpu.dot_dimension_numbers<[1], [1], [0], [0], [0, 0, 1, 0], [], []>} : vector<5x16xf32>, vector<5x16xf32>, vector<5x5xf32> -> vector<5x5xf32>
    %cst_93 = arith.constant 2.500000e-01 : f32
    %205 = vector.broadcast %cst_93 : f32 to vector<5x5xf32>
    %206 = arith.mulf %204, %205 : vector<5x5xf32>
    %cst_94 = arith.constant dense<0xFF800000> : vector<5xf32>
    %207 = vector.multi_reduction <maximumf>, %206, %cst_94 [1] : vector<5x5xf32> to vector<5xf32>
    %208 = vector.shape_cast %207 : vector<5xf32> to vector<5x1xf32>
    %209 = vector.broadcast %208 : vector<5x1xf32> to vector<5x5xf32>
    %210 = arith.subf %206, %209 : vector<5x5xf32>
    %211 = math.exp %210 : vector<5x5xf32>
    %cst_95 = arith.constant dense<0.000000e+00> : vector<5xf32>
    %212 = vector.multi_reduction <add>, %211, %cst_95 [1] : vector<5x5xf32> to vector<5xf32>
    %213 = vector.shape_cast %212 : vector<5xf32> to vector<5x1xf32>
    %214 = vector.broadcast %213 : vector<5x1xf32> to vector<5x5xf32>
    %215 = arith.divf %211, %214 : vector<5x5xf32>
    %cst_96 = arith.constant dense<0.000000e+00> : vector<5x16xf32>
    %216 = tpu.matmul %215, %203, %cst_96 {dimension_numbers = #tpu.dot_dimension_numbers<[1], [0], [0], [1], [0, 0, 1, 1], [], []>} : vector<5x5xf32>, vector<5x16xf32>, vector<5x16xf32> -> vector<5x16xf32>
    %217 = vector.extract_strided_slice %199 {offsets = [0, 0], sizes = [16, 64], strides = [1, 1]} : vector<64x64xf32> to vector<16x64xf32>
    %cst_97 = arith.constant dense<0.000000e+00> : vector<5x64xf32>
    %218 = tpu.matmul %216, %217, %cst_97 {dimension_numbers = #tpu.dot_dimension_numbers<[1], [0], [0], [1], [0, 0, 1, 1], [], []>} : vector<5x16xf32>, vector<16x64xf32>, vector<5x64xf32> -> vector<5x64xf32>
    %219 = arith.addf %200, %218 : vector<5x64xf32>
    %220 = vector.extract_strided_slice %198 {offsets = [0, 16], sizes = [5, 16], strides = [1, 1]} : vector<5x192xf32> to vector<5x16xf32>
    %221 = vector.extract_strided_slice %198 {offsets = [0, 80], sizes = [5, 16], strides = [1, 1]} : vector<5x192xf32> to vector<5x16xf32>
    %222 = vector.extract_strided_slice %198 {offsets = [0, 144], sizes = [5, 16], strides = [1, 1]} : vector<5x192xf32> to vector<5x16xf32>
    %cst_98 = arith.constant dense<0.000000e+00> : vector<5x5xf32>
    %223 = tpu.matmul %220, %221, %cst_98 {dimension_numbers = #tpu.dot_dimension_numbers<[1], [1], [0], [0], [0, 0, 1, 0], [], []>} : vector<5x16xf32>, vector<5x16xf32>, vector<5x5xf32> -> vector<5x5xf32>
    %cst_99 = arith.constant 2.500000e-01 : f32
    %224 = vector.broadcast %cst_99 : f32 to vector<5x5xf32>
    %225 = arith.mulf %223, %224 : vector<5x5xf32>
    %cst_100 = arith.constant dense<0xFF800000> : vector<5xf32>
    %226 = vector.multi_reduction <maximumf>, %225, %cst_100 [1] : vector<5x5xf32> to vector<5xf32>
    %227 = vector.shape_cast %226 : vector<5xf32> to vector<5x1xf32>
    %228 = vector.broadcast %227 : vector<5x1xf32> to vector<5x5xf32>
    %229 = arith.subf %225, %228 : vector<5x5xf32>
    %230 = math.exp %229 : vector<5x5xf32>
    %cst_101 = arith.constant dense<0.000000e+00> : vector<5xf32>
    %231 = vector.multi_reduction <add>, %230, %cst_101 [1] : vector<5x5xf32> to vector<5xf32>
    %232 = vector.shape_cast %231 : vector<5xf32> to vector<5x1xf32>
    %233 = vector.broadcast %232 : vector<5x1xf32> to vector<5x5xf32>
    %234 = arith.divf %230, %233 : vector<5x5xf32>
    %cst_102 = arith.constant dense<0.000000e+00> : vector<5x16xf32>
    %235 = tpu.matmul %234, %222, %cst_102 {dimension_numbers = #tpu.dot_dimension_numbers<[1], [0], [0], [1], [0, 0, 1, 1], [], []>} : vector<5x5xf32>, vector<5x16xf32>, vector<5x16xf32> -> vector<5x16xf32>
    %236 = vector.extract_strided_slice %199 {offsets = [16, 0], sizes = [16, 64], strides = [1, 1]} : vector<64x64xf32> to vector<16x64xf32>
    %cst_103 = arith.constant dense<0.000000e+00> : vector<5x64xf32>
    %237 = tpu.matmul %235, %236, %cst_103 {dimension_numbers = #tpu.dot_dimension_numbers<[1], [0], [0], [1], [0, 0, 1, 1], [], []>} : vector<5x16xf32>, vector<16x64xf32>, vector<5x64xf32> -> vector<5x64xf32>
    %238 = arith.addf %219, %237 : vector<5x64xf32>
    %239 = vector.extract_strided_slice %198 {offsets = [0, 32], sizes = [5, 16], strides = [1, 1]} : vector<5x192xf32> to vector<5x16xf32>
    %240 = vector.extract_strided_slice %198 {offsets = [0, 96], sizes = [5, 16], strides = [1, 1]} : vector<5x192xf32> to vector<5x16xf32>
    %241 = vector.extract_strided_slice %198 {offsets = [0, 160], sizes = [5, 16], strides = [1, 1]} : vector<5x192xf32> to vector<5x16xf32>
    %cst_104 = arith.constant dense<0.000000e+00> : vector<5x5xf32>
    %242 = tpu.matmul %239, %240, %cst_104 {dimension_numbers = #tpu.dot_dimension_numbers<[1], [1], [0], [0], [0, 0, 1, 0], [], []>} : vector<5x16xf32>, vector<5x16xf32>, vector<5x5xf32> -> vector<5x5xf32>
    %cst_105 = arith.constant 2.500000e-01 : f32
    %243 = vector.broadcast %cst_105 : f32 to vector<5x5xf32>
    %244 = arith.mulf %242, %243 : vector<5x5xf32>
    %cst_106 = arith.constant dense<0xFF800000> : vector<5xf32>
    %245 = vector.multi_reduction <maximumf>, %244, %cst_106 [1] : vector<5x5xf32> to vector<5xf32>
    %246 = vector.shape_cast %245 : vector<5xf32> to vector<5x1xf32>
    %247 = vector.broadcast %246 : vector<5x1xf32> to vector<5x5xf32>
    %248 = arith.subf %244, %247 : vector<5x5xf32>
    %249 = math.exp %248 : vector<5x5xf32>
    %cst_107 = arith.constant dense<0.000000e+00> : vector<5xf32>
    %250 = vector.multi_reduction <add>, %249, %cst_107 [1] : vector<5x5xf32> to vector<5xf32>
    %251 = vector.shape_cast %250 : vector<5xf32> to vector<5x1xf32>
    %252 = vector.broadcast %251 : vector<5x1xf32> to vector<5x5xf32>
    %253 = arith.divf %249, %252 : vector<5x5xf32>
    %cst_108 = arith.constant dense<0.000000e+00> : vector<5x16xf32>
    %254 = tpu.matmul %253, %241, %cst_108 {dimension_numbers = #tpu.dot_dimension_numbers<[1], [0], [0], [1], [0, 0, 1, 1], [], []>} : vector<5x5xf32>, vector<5x16xf32>, vector<5x16xf32> -> vector<5x16xf32>
    %255 = vector.extract_strided_slice %199 {offsets = [32, 0], sizes = [16, 64], strides = [1, 1]} : vector<64x64xf32> to vector<16x64xf32>
    %cst_109 = arith.constant dense<0.000000e+00> : vector<5x64xf32>
    %256 = tpu.matmul %254, %255, %cst_109 {dimension_numbers = #tpu.dot_dimension_numbers<[1], [0], [0], [1], [0, 0, 1, 1], [], []>} : vector<5x16xf32>, vector<16x64xf32>, vector<5x64xf32> -> vector<5x64xf32>
    %257 = arith.addf %238, %256 : vector<5x64xf32>
    %258 = vector.extract_strided_slice %198 {offsets = [0, 48], sizes = [5, 16], strides = [1, 1]} : vector<5x192xf32> to vector<5x16xf32>
    %259 = vector.extract_strided_slice %198 {offsets = [0, 112], sizes = [5, 16], strides = [1, 1]} : vector<5x192xf32> to vector<5x16xf32>
    %260 = vector.extract_strided_slice %198 {offsets = [0, 176], sizes = [5, 16], strides = [1, 1]} : vector<5x192xf32> to vector<5x16xf32>
    %cst_110 = arith.constant dense<0.000000e+00> : vector<5x5xf32>
    %261 = tpu.matmul %258, %259, %cst_110 {dimension_numbers = #tpu.dot_dimension_numbers<[1], [1], [0], [0], [0, 0, 1, 0], [], []>} : vector<5x16xf32>, vector<5x16xf32>, vector<5x5xf32> -> vector<5x5xf32>
    %cst_111 = arith.constant 2.500000e-01 : f32
    %262 = vector.broadcast %cst_111 : f32 to vector<5x5xf32>
    %263 = arith.mulf %261, %262 : vector<5x5xf32>
    %cst_112 = arith.constant dense<0xFF800000> : vector<5xf32>
    %264 = vector.multi_reduction <maximumf>, %263, %cst_112 [1] : vector<5x5xf32> to vector<5xf32>
    %265 = vector.shape_cast %264 : vector<5xf32> to vector<5x1xf32>
    %266 = vector.broadcast %265 : vector<5x1xf32> to vector<5x5xf32>
    %267 = arith.subf %263, %266 : vector<5x5xf32>
    %268 = math.exp %267 : vector<5x5xf32>
    %cst_113 = arith.constant dense<0.000000e+00> : vector<5xf32>
    %269 = vector.multi_reduction <add>, %268, %cst_113 [1] : vector<5x5xf32> to vector<5xf32>
    %270 = vector.shape_cast %269 : vector<5xf32> to vector<5x1xf32>
    %271 = vector.broadcast %270 : vector<5x1xf32> to vector<5x5xf32>
    %272 = arith.divf %268, %271 : vector<5x5xf32>
    %cst_114 = arith.constant dense<0.000000e+00> : vector<5x16xf32>
    %273 = tpu.matmul %272, %260, %cst_114 {dimension_numbers = #tpu.dot_dimension_numbers<[1], [0], [0], [1], [0, 0, 1, 1], [], []>} : vector<5x5xf32>, vector<5x16xf32>, vector<5x16xf32> -> vector<5x16xf32>
    %274 = vector.extract_strided_slice %199 {offsets = [48, 0], sizes = [16, 64], strides = [1, 1]} : vector<64x64xf32> to vector<16x64xf32>
    %cst_115 = arith.constant dense<0.000000e+00> : vector<5x64xf32>
    %275 = tpu.matmul %273, %274, %cst_115 {dimension_numbers = #tpu.dot_dimension_numbers<[1], [0], [0], [1], [0, 0, 1, 1], [], []>} : vector<5x16xf32>, vector<16x64xf32>, vector<5x64xf32> -> vector<5x64xf32>
    %276 = arith.addf %257, %275 : vector<5x64xf32>
    %277 = arith.addf %169, %276 : vector<5x64xf32>
    %c0_116 = arith.constant 0 : index
    %c0_117 = arith.constant 0 : index
    %278 = vector.load %arg23[%c0_116, %c0_117] : memref<1x64xf32, #tpu.memory_space<vmem>>, vector<1x64xf32>
    %279 = vector.broadcast %278 : vector<1x64xf32> to vector<5x64xf32>
    %280 = arith.addf %277, %279 : vector<5x64xf32>
    %c0_118 = arith.constant 0 : index
    %c0_119 = arith.constant 0 : index
    %281 = vector.load %arg24[%c0_118, %c0_119] : memref<1x64xf32, #tpu.memory_space<vmem>>, vector<1x64xf32>
    %c0_120 = arith.constant 0 : index
    %c0_121 = arith.constant 0 : index
    %282 = vector.load %arg25[%c0_120, %c0_121] : memref<1x64xf32, #tpu.memory_space<vmem>>, vector<1x64xf32>
    %cst_122 = arith.constant dense<0.000000e+00> : vector<5xf32>
    %283 = vector.multi_reduction <add>, %280, %cst_122 [1] : vector<5x64xf32> to vector<5xf32>
    %284 = vector.shape_cast %283 : vector<5xf32> to vector<5x1xf32>
    %cst_123 = arith.constant 6.400000e+01 : f32
    %285 = vector.broadcast %cst_123 : f32 to vector<5x1xf32>
    %286 = arith.divf %284, %285 : vector<5x1xf32>
    %287 = vector.broadcast %286 : vector<5x1xf32> to vector<5x64xf32>
    %288 = arith.subf %280, %287 : vector<5x64xf32>
    %289 = arith.mulf %288, %288 : vector<5x64xf32>
    %cst_124 = arith.constant dense<0.000000e+00> : vector<5xf32>
    %290 = vector.multi_reduction <add>, %289, %cst_124 [1] : vector<5x64xf32> to vector<5xf32>
    %291 = vector.shape_cast %290 : vector<5xf32> to vector<5x1xf32>
    %cst_125 = arith.constant 6.400000e+01 : f32
    %292 = vector.broadcast %cst_125 : f32 to vector<5x1xf32>
    %293 = arith.divf %291, %292 : vector<5x1xf32>
    %294 = vector.broadcast %286 : vector<5x1xf32> to vector<5x64xf32>
    %295 = arith.subf %280, %294 : vector<5x64xf32>
    %cst_126 = arith.constant 9.99999997E-7 : f32
    %296 = vector.broadcast %cst_126 : f32 to vector<5x1xf32>
    %297 = arith.addf %293, %296 : vector<5x1xf32>
    %298 = math.rsqrt %297 : vector<5x1xf32>
    %299 = vector.broadcast %298 : vector<5x1xf32> to vector<5x64xf32>
    %300 = arith.mulf %295, %299 : vector<5x64xf32>
    %301 = vector.broadcast %281 : vector<1x64xf32> to vector<5x64xf32>
    %302 = arith.mulf %300, %301 : vector<5x64xf32>
    %303 = vector.broadcast %282 : vector<1x64xf32> to vector<5x64xf32>
    %304 = arith.addf %302, %303 : vector<5x64xf32>
    %c0_127 = arith.constant 0 : index
    %c0_128 = arith.constant 0 : index
    %305 = vector.load %arg26[%c0_127, %c0_128] : memref<64x256xf32, #tpu.memory_space<vmem>>, vector<64x256xf32>
    %cst_129 = arith.constant dense<0.000000e+00> : vector<5x256xf32>
    %306 = tpu.matmul %304, %305, %cst_129 {dimension_numbers = #tpu.dot_dimension_numbers<[1], [0], [0], [1], [0, 0, 1, 1], [], []>} : vector<5x64xf32>, vector<64x256xf32>, vector<5x256xf32> -> vector<5x256xf32>
    %c0_130 = arith.constant 0 : index
    %c0_131 = arith.constant 0 : index
    %307 = vector.load %arg27[%c0_130, %c0_131] : memref<1x256xf32, #tpu.memory_space<vmem>>, vector<1x256xf32>
    %308 = vector.broadcast %307 : vector<1x256xf32> to vector<5x256xf32>
    %309 = arith.addf %306, %308 : vector<5x256xf32>
    %cst_132 = arith.constant 5.000000e-01 : f32
    %310 = vector.broadcast %cst_132 : f32 to vector<5x256xf32>
    %311 = arith.mulf %310, %309 : vector<5x256xf32>
    %cst_133 = arith.constant 0.707106769 : f32
    %312 = vector.broadcast %cst_133 : f32 to vector<5x256xf32>
    %313 = arith.mulf %309, %312 : vector<5x256xf32>
    %314 = math.erf %313 : vector<5x256xf32>
    %cst_134 = arith.constant 1.000000e+00 : f32
    %315 = vector.broadcast %cst_134 : f32 to vector<5x256xf32>
    %316 = arith.addf %315, %314 : vector<5x256xf32>
    %317 = arith.mulf %311, %316 : vector<5x256xf32>
    %c0_135 = arith.constant 0 : index
    %c0_136 = arith.constant 0 : index
    %318 = vector.load %arg28[%c0_135, %c0_136] : memref<256x64xf32, #tpu.memory_space<vmem>>, vector<256x64xf32>
    %cst_137 = arith.constant dense<0.000000e+00> : vector<5x64xf32>
    %319 = tpu.matmul %317, %318, %cst_137 {dimension_numbers = #tpu.dot_dimension_numbers<[1], [0], [0], [1], [0, 0, 1, 1], [], []>} : vector<5x256xf32>, vector<256x64xf32>, vector<5x64xf32> -> vector<5x64xf32>
    %c0_138 = arith.constant 0 : index
    %c0_139 = arith.constant 0 : index
    %320 = vector.load %arg29[%c0_138, %c0_139] : memref<1x64xf32, #tpu.memory_space<vmem>>, vector<1x64xf32>
    %321 = vector.broadcast %320 : vector<1x64xf32> to vector<5x64xf32>
    %322 = arith.addf %319, %321 : vector<5x64xf32>
    %323 = arith.addf %280, %322 : vector<5x64xf32>
    %c0_140 = arith.constant 0 : index
    %c0_141 = arith.constant 0 : index
    %324 = vector.load %arg30[%c0_140, %c0_141] : memref<1x64xf32, #tpu.memory_space<vmem>>, vector<1x64xf32>
    %c0_142 = arith.constant 0 : index
    %c0_143 = arith.constant 0 : index
    %325 = vector.load %arg31[%c0_142, %c0_143] : memref<1x64xf32, #tpu.memory_space<vmem>>, vector<1x64xf32>
    %cst_144 = arith.constant dense<0.000000e+00> : vector<5xf32>
    %326 = vector.multi_reduction <add>, %323, %cst_144 [1] : vector<5x64xf32> to vector<5xf32>
    %327 = vector.shape_cast %326 : vector<5xf32> to vector<5x1xf32>
    %cst_145 = arith.constant 6.400000e+01 : f32
    %328 = vector.broadcast %cst_145 : f32 to vector<5x1xf32>
    %329 = arith.divf %327, %328 : vector<5x1xf32>
    %330 = vector.broadcast %329 : vector<5x1xf32> to vector<5x64xf32>
    %331 = arith.subf %323, %330 : vector<5x64xf32>
    %332 = arith.mulf %331, %331 : vector<5x64xf32>
    %cst_146 = arith.constant dense<0.000000e+00> : vector<5xf32>
    %333 = vector.multi_reduction <add>, %332, %cst_146 [1] : vector<5x64xf32> to vector<5xf32>
    %334 = vector.shape_cast %333 : vector<5xf32> to vector<5x1xf32>
    %cst_147 = arith.constant 6.400000e+01 : f32
    %335 = vector.broadcast %cst_147 : f32 to vector<5x1xf32>
    %336 = arith.divf %334, %335 : vector<5x1xf32>
    %337 = vector.broadcast %329 : vector<5x1xf32> to vector<5x64xf32>
    %338 = arith.subf %323, %337 : vector<5x64xf32>
    %cst_148 = arith.constant 9.99999997E-7 : f32
    %339 = vector.broadcast %cst_148 : f32 to vector<5x1xf32>
    %340 = arith.addf %336, %339 : vector<5x1xf32>
    %341 = math.rsqrt %340 : vector<5x1xf32>
    %342 = vector.broadcast %341 : vector<5x1xf32> to vector<5x64xf32>
    %343 = arith.mulf %338, %342 : vector<5x64xf32>
    %344 = vector.broadcast %324 : vector<1x64xf32> to vector<5x64xf32>
    %345 = arith.mulf %343, %344 : vector<5x64xf32>
    %346 = vector.broadcast %325 : vector<1x64xf32> to vector<5x64xf32>
    %347 = arith.addf %345, %346 : vector<5x64xf32>
    %c0_149 = arith.constant 0 : index
    %c0_150 = arith.constant 0 : index
    %348 = vector.load %arg32[%c0_149, %c0_150] : memref<64x128xf32, #tpu.memory_space<vmem>>, vector<64x128xf32>
    %cst_151 = arith.constant dense<0.000000e+00> : vector<5x128xf32>
    %349 = tpu.matmul %347, %348, %cst_151 {dimension_numbers = #tpu.dot_dimension_numbers<[1], [0], [0], [1], [0, 0, 1, 1], [], []>} : vector<5x64xf32>, vector<64x128xf32>, vector<5x128xf32> -> vector<5x128xf32>
    %c0_152 = arith.constant 0 : index
    %c0_153 = arith.constant 0 : index
    %350 = vector.load %arg33[%c0_152, %c0_153] : memref<1x128xf32, #tpu.memory_space<vmem>>, vector<1x128xf32>
    %351 = vector.broadcast %350 : vector<1x128xf32> to vector<5x128xf32>
    %352 = arith.addf %349, %351 : vector<5x128xf32>
    %c0_154 = arith.constant 0 : index
    %c0_155 = arith.constant 0 : index
    %c0_156 = arith.constant 0 : index
    %353 = vector.load %arg34[%c0_154, %c0_155, %c0_156] : memref<1x5x128xf32, #tpu.memory_space<vmem>>, vector<1x5x128xf32>
    %354 = vector.shape_cast %353 : vector<1x5x128xf32> to vector<5x128xf32>
    %355 = vector.shape_cast %352 : vector<5x128xf32> to vector<1x5x128xf32>
    tpu.vector_store %arg34[%c0_154, %c0_155, %c0_156], %355 {strides = array<i32>} : memref<1x5x128xf32, #tpu.memory_space<vmem>>, vector<1x5x128xf32>,
    return
  }
  func.func @transform_0(%arg0: i32) -> (i32, i32, i32) {
    %c0_i32 = arith.constant 0 : i32
    %c0_i32_0 = arith.constant 0 : i32
    %c0_i32_1 = arith.constant 0 : i32
    return %arg0, %c0_i32, %c0_i32_0 : i32, i32, i32
  }
  func.func @transform_1(%arg0: i32) -> (i32, i32) {
    %c0_i32 = arith.constant 0 : i32
    %c0_i32_0 = arith.constant 0 : i32
    %c0_i32_1 = arith.constant 0 : i32
    return %c0_i32, %c0_i32_0 : i32, i32
  }
  func.func @transform_2(%arg0: i32) -> (i32, i32) {
    %c0_i32 = arith.constant 0 : i32
    %c0_i32_0 = arith.constant 0 : i32
    %c0_i32_1 = arith.constant 0 : i32
    return %c0_i32, %c0_i32_0 : i32, i32
  }
  func.func @transform_3(%arg0: i32) -> (i32, i32) {
    %c0_i32 = arith.constant 0 : i32
    %c0_i32_0 = arith.constant 0 : i32
    %c0_i32_1 = arith.constant 0 : i32
    return %c0_i32, %c0_i32_0 : i32, i32
  }
  func.func @transform_4(%arg0: i32) -> (i32, i32) {
    %c0_i32 = arith.constant 0 : i32
    %c0_i32_0 = arith.constant 0 : i32
    %c0_i32_1 = arith.constant 0 : i32
    return %c0_i32, %c0_i32_0 : i32, i32
  }
  func.func @transform_5(%arg0: i32) -> (i32, i32) {
    %c0_i32 = arith.constant 0 : i32
    %c0_i32_0 = arith.constant 0 : i32
    %c0_i32_1 = arith.constant 0 : i32
    return %c0_i32, %c0_i32_0 : i32, i32
  }
  func.func @transform_6(%arg0: i32) -> (i32, i32) {
    %c0_i32 = arith.constant 0 : i32
    %c0_i32_0 = arith.constant 0 : i32
    %c0_i32_1 = arith.constant 0 : i32
    return %c0_i32, %c0_i32_0 : i32, i32
  }
  func.func @transform_7(%arg0: i32) -> (i32, i32) {
    %c0_i32 = arith.constant 0 : i32
    %c0_i32_0 = arith.constant 0 : i32
    %c0_i32_1 = arith.constant 0 : i32
    return %c0_i32, %c0_i32_0 : i32, i32
  }
  func.func @transform_8(%arg0: i32) -> (i32, i32) {
    %c0_i32 = arith.constant 0 : i32
    %c0_i32_0 = arith.constant 0 : i32
    %c0_i32_1 = arith.constant 0 : i32
    return %c0_i32, %c0_i32_0 : i32, i32
  }
  func.func @transform_9(%arg0: i32) -> (i32, i32) {
    %c0_i32 = arith.constant 0 : i32
    %c0_i32_0 = arith.constant 0 : i32
    %c0_i32_1 = arith.constant 0 : i32
    return %c0_i32, %c0_i32_0 : i32, i32
  }
  func.func @transform_10(%arg0: i32) -> (i32, i32) {
    %c0_i32 = arith.constant 0 : i32
    %c0_i32_0 = arith.constant 0 : i32
    %c0_i32_1 = arith.constant 0 : i32
    return %c0_i32, %c0_i32_0 : i32, i32
  }
  func.func @transform_11(%arg0: i32) -> (i32, i32) {
    %c0_i32 = arith.constant 0 : i32
    %c0_i32_0 = arith.constant 0 : i32
    %c0_i32_1 = arith.constant 0 : i32
    return %c0_i32, %c0_i32_0 : i32, i32
  }
  func.func @transform_12(%arg0: i32) -> (i32, i32) {
    %c0_i32 = arith.constant 0 : i32
    %c0_i32_0 = arith.constant 0 : i32
    %c0_i32_1 = arith.constant 0 : i32
    return %c0_i32, %c0_i32_0 : i32, i32
  }
  func.func @transform_13(%arg0: i32) -> (i32, i32) {
    %c0_i32 = arith.constant 0 : i32
    %c0_i32_0 = arith.constant 0 : i32
    %c0_i32_1 = arith.constant 0 : i32
    return %c0_i32, %c0_i32_0 : i32, i32
  }
  func.func @transform_14(%arg0: i32) -> (i32, i32) {
    %c0_i32 = arith.constant 0 : i32
    %c0_i32_0 = arith.constant 0 : i32
    %c0_i32_1 = arith.constant 0 : i32
    return %c0_i32, %c0_i32_0 : i32, i32
  }
  func.func @transform_15(%arg0: i32) -> (i32, i32) {
    %c0_i32 = arith.constant 0 : i32
    %c0_i32_0 = arith.constant 0 : i32
    %c0_i32_1 = arith.constant 0 : i32
    return %c0_i32, %c0_i32_0 : i32, i32
  }
  func.func @transform_16(%arg0: i32) -> (i32, i32) {
    %c0_i32 = arith.constant 0 : i32
    %c0_i32_0 = arith.constant 0 : i32
    %c0_i32_1 = arith.constant 0 : i32
    return %c0_i32, %c0_i32_0 : i32, i32
  }
  func.func @transform_17(%arg0: i32) -> (i32, i32) {
    %c0_i32 = arith.constant 0 : i32
    %c0_i32_0 = arith.constant 0 : i32
    %c0_i32_1 = arith.constant 0 : i32
    return %c0_i32, %c0_i32_0 : i32, i32
  }
  func.func @transform_18(%arg0: i32) -> (i32, i32) {
    %c0_i32 = arith.constant 0 : i32
    %c0_i32_0 = arith.constant 0 : i32
    %c0_i32_1 = arith.constant 0 : i32
    return %c0_i32, %c0_i32_0 : i32, i32
  }
  func.func @transform_19(%arg0: i32) -> (i32, i32) {
    %c0_i32 = arith.constant 0 : i32
    %c0_i32_0 = arith.constant 0 : i32
    %c0_i32_1 = arith.constant 0 : i32
    return %c0_i32, %c0_i32_0 : i32, i32
  }
  func.func @transform_20(%arg0: i32) -> (i32, i32) {
    %c0_i32 = arith.constant 0 : i32
    %c0_i32_0 = arith.constant 0 : i32
    %c0_i32_1 = arith.constant 0 : i32
    return %c0_i32, %c0_i32_0 : i32, i32
  }
  func.func @transform_21(%arg0: i32) -> (i32, i32) {
    %c0_i32 = arith.constant 0 : i32
    %c0_i32_0 = arith.constant 0 : i32
    %c0_i32_1 = arith.constant 0 : i32
    return %c0_i32, %c0_i32_0 : i32, i32
  }
  func.func @transform_22(%arg0: i32) -> (i32, i32) {
    %c0_i32 = arith.constant 0 : i32
    %c0_i32_0 = arith.constant 0 : i32
    %c0_i32_1 = arith.constant 0 : i32
    return %c0_i32, %c0_i32_0 : i32, i32
  }
  func.func @transform_23(%arg0: i32) -> (i32, i32) {
    %c0_i32 = arith.constant 0 : i32
    %c0_i32_0 = arith.constant 0 : i32
    %c0_i32_1 = arith.constant 0 : i32
    return %c0_i32, %c0_i32_0 : i32, i32
  }
  func.func @transform_24(%arg0: i32) -> (i32, i32) {
    %c0_i32 = arith.constant 0 : i32
    %c0_i32_0 = arith.constant 0 : i32
    %c0_i32_1 = arith.constant 0 : i32
    return %c0_i32, %c0_i32_0 : i32, i32
  }
  func.func @transform_25(%arg0: i32) -> (i32, i32) {
    %c0_i32 = arith.constant 0 : i32
    %c0_i32_0 = arith.constant 0 : i32
    %c0_i32_1 = arith.constant 0 : i32
    return %c0_i32, %c0_i32_0 : i32, i32
  }
  func.func @transform_26(%arg0: i32) -> (i32, i32) {
    %c0_i32 = arith.constant 0 : i32
    %c0_i32_0 = arith.constant 0 : i32
    %c0_i32_1 = arith.constant 0 : i32
    return %c0_i32, %c0_i32_0 : i32, i32
  }
  func.func @transform_27(%arg0: i32) -> (i32, i32) {
    %c0_i32 = arith.constant 0 : i32
    %c0_i32_0 = arith.constant 0 : i32
    %c0_i32_1 = arith.constant 0 : i32
    return %c0_i32, %c0_i32_0 : i32, i32
  }
  func.func @transform_28(%arg0: i32) -> (i32, i32) {
    %c0_i32 = arith.constant 0 : i32
    %c0_i32_0 = arith.constant 0 : i32
    %c0_i32_1 = arith.constant 0 : i32
    return %c0_i32, %c0_i32_0 : i32, i32
  }
  func.func @transform_29(%arg0: i32) -> (i32, i32) {
    %c0_i32 = arith.constant 0 : i32
    %c0_i32_0 = arith.constant 0 : i32
    %c0_i32_1 = arith.constant 0 : i32
    return %c0_i32, %c0_i32_0 : i32, i32
  }
  func.func @transform_30(%arg0: i32) -> (i32, i32) {
    %c0_i32 = arith.constant 0 : i32
    %c0_i32_0 = arith.constant 0 : i32
    %c0_i32_1 = arith.constant 0 : i32
    return %c0_i32, %c0_i32_0 : i32, i32
  }
  func.func @transform_31(%arg0: i32) -> (i32, i32) {
    %c0_i32 = arith.constant 0 : i32
    %c0_i32_0 = arith.constant 0 : i32
    %c0_i32_1 = arith.constant 0 : i32
    return %c0_i32, %c0_i32_0 : i32, i32
  }
  func.func @transform_32(%arg0: i32) -> (i32, i32) {
    %c0_i32 = arith.constant 0 : i32
    %c0_i32_0 = arith.constant 0 : i32
    %c0_i32_1 = arith.constant 0 : i32
    return %c0_i32, %c0_i32_0 : i32, i32
  }
  func.func @transform_33(%arg0: i32) -> (i32, i32, i32) {
    %c0_i32 = arith.constant 0 : i32
    %c0_i32_0 = arith.constant 0 : i32
    %c0_i32_1 = arith.constant 0 : i32
    return %arg0, %c0_i32, %c0_i32_0 : i32, i32, i32
  }
}

</mosaic_0001>

<llo_original>
// kernel: vit_forward.1
$region0: #{vit_forward.1}
  #allocation0 [shape = 'u32[]', space=smem, size = 0x4, offset = 0x4, fixed_abs, tag = 'smem constant byte address 0x4 - core index']
  #allocation1 [shape = 'u32[144,128]{1,0:T(1,128)}', space=vmem, size = 0x12000, scoped, tag = 'internal scratch']
  %s0 = inlined_call_operand.smem [shape: u32[34], index: -1, kind: input, shape index: {}]
  %s1 = sld [smem:[%s0]]
  %s2 = scalar_lea.smem %s0, 1
  %s3 = sld [smem:[%s2]]
  %s4 = scalar_lea.smem %s0, 2
  %s5 = sld [smem:[%s4]]
  %s6 = scalar_lea.smem %s0, 3
  %s7 = sld [smem:[%s6]]
  %s8 = scalar_lea.smem %s0, 4
  %s9 = sld [smem:[%s8]]
  %s10 = scalar_lea.smem %s0, 5
  %s11 = sld [smem:[%s10]]
  %s12 = scalar_lea.smem %s0, 6
  %s13 = sld [smem:[%s12]]
  %s14 = scalar_lea.smem %s0, 7
  %s15 = sld [smem:[%s14]]
  %s16 = scalar_lea.smem %s0, 8
  %s17 = sld [smem:[%s16]]
  %s18 = scalar_lea.smem %s0, 9
  %s19 = sld [smem:[%s18]]
  %s20 = scalar_lea.smem %s0, 10
  %s21 = sld [smem:[%s20]]
  %s22 = scalar_lea.smem %s0, 11
  %s23 = sld [smem:[%s22]]
  %s24 = scalar_lea.smem %s0, 12
  %s25 = sld [smem:[%s24]]
  %s26 = scalar_lea.smem %s0, 13
  %s27 = sld [smem:[%s26]]
  %s28 = scalar_lea.smem %s0, 14
  %s29 = sld [smem:[%s28]]
  %s30 = scalar_lea.smem %s0, 15
  %s31 = sld [smem:[%s30]]
  %s32 = scalar_lea.smem %s0, 16
  %s33 = sld [smem:[%s32]]
  %s34 = scalar_lea.smem %s0, 17
  %s35 = sld [smem:[%s34]]
  %s36 = scalar_lea.smem %s0, 18
  %s37 = sld [smem:[%s36]]
  %s38 = scalar_lea.smem %s0, 19
  %s39 = sld [smem:[%s38]]
  %s40 = scalar_lea.smem %s0, 20
  %s41 = sld [smem:[%s40]]
  %s42 = scalar_lea.smem %s0, 21
  %s43 = sld [smem:[%s42]]
  %s44 = scalar_lea.smem %s0, 22
  %s45 = sld [smem:[%s44]]
  %s46 = scalar_lea.smem %s0, 23
  %s47 = sld [smem:[%s46]]
  %s48 = scalar_lea.smem %s0, 24
  %s49 = sld [smem:[%s48]]
  %s50 = scalar_lea.smem %s0, 25
  %s51 = sld [smem:[%s50]]
  %s52 = scalar_lea.smem %s0, 26
  %s53 = sld [smem:[%s52]]
  %s54 = scalar_lea.smem %s0, 27
  %s55 = sld [smem:[%s54]]
  %s56 = scalar_lea.smem %s0, 28
  %s57 = sld [smem:[%s56]]
  %s58 = scalar_lea.smem %s0, 29
  %s59 = sld [smem:[%s58]]
  %s60 = scalar_lea.smem %s0, 30
  %s61 = sld [smem:[%s60]]
  %s62 = scalar_lea.smem %s0, 31
  %s63 = sld [smem:[%s62]]
  %s64 = scalar_lea.smem %s0, 32
  %s65 = sld [smem:[%s64]]
  %s66 = scalar_lea.smem %s0, 33
  %s67 = sld [smem:[%s66]]
  %s68 = sld [smem:[#allocation0]]
  $region165: #{vit_forward.1} parent=0
    _
  %s70 = ssub.s32 1, %s68
  %s71 = scalar_select 0, %s70, %s68
  loop: start=0, step=1, limit=4
  $region2: #{vit_forward.1} parent=0 // loop_pre_header
    _
  $region3: #{vit_forward.1} parent=0 // loop_header
    %s73 = sphi 0, %s77
    %p74 = scmp.ge.s32.totalorder %s73, 4
    %s83 = sphi 0, %s85
    %s86 = sphi 0, %s83
    %s87 = sphi 0, %s86
    %s103 = sphi 0, %s87
    %s107 = sphi 0, %s107
    %s109 = sphi 0, %s107
    %s110 = sphi 0, %s109
    %s124 = sphi 0, %s110
    %s128 = sphi 0, %s128
    %s130 = sphi 0, %s128
    %s131 = sphi 0, %s130
    %s145 = sphi 0, %s131
    %s149 = sphi 0, %s149
    %s151 = sphi 0, %s149
    %s152 = sphi 0, %s151
    %s166 = sphi 0, %s152
    %s170 = sphi 0, %s170
    %s172 = sphi 0, %s170
    %s173 = sphi 0, %s172
    %s187 = sphi 0, %s173
    %s191 = sphi 0, %s191
    %s193 = sphi 0, %s191
    %s194 = sphi 0, %s193
    %s208 = sphi 0, %s194
    %s212 = sphi 0, %s212
    %s214 = sphi 0, %s212
    %s215 = sphi 0, %s214
    %s229 = sphi 0, %s215
    %s233 = sphi 0, %s233
    %s235 = sphi 0, %s233
    %s236 = sphi 0, %s235
    %s250 = sphi 0, %s236
    %s254 = sphi 0, %s254
    %s256 = sphi 0, %s254
    %s257 = sphi 0, %s256
    %s271 = sphi 0, %s257
    %s275 = sphi 0, %s275
    %s277 = sphi 0, %s275
    %s278 = sphi 0, %s277
    %s292 = sphi 0, %s278
    %s296 = sphi 0, %s296
    %s298 = sphi 0, %s296
    %s299 = sphi 0, %s298
    %s313 = sphi 0, %s299
    %s317 = sphi 0, %s317
    %s319 = sphi 0, %s317
    %s320 = sphi 0, %s319
    %s334 = sphi 0, %s320
    %s338 = sphi 0, %s338
    %s340 = sphi 0, %s338
    %s341 = sphi 0, %s340
    %s355 = sphi 0, %s341
    %s359 = sphi 0, %s359
    %s361 = sphi 0, %s359
    %s362 = sphi 0, %s361
    %s376 = sphi 0, %s362
    %s380 = sphi 0, %s380
    %s382 = sphi 0, %s380
    %s383 = sphi 0, %s382
    %s397 = sphi 0, %s383
    %s401 = sphi 0, %s401
    %s403 = sphi 0, %s401
    %s404 = sphi 0, %s403
    %s418 = sphi 0, %s404
    %s422 = sphi 0, %s422
    %s424 = sphi 0, %s422
    %s425 = sphi 0, %s424
    %s439 = sphi 0, %s425
    %s443 = sphi 0, %s443
    %s445 = sphi 0, %s443
    %s446 = sphi 0, %s445
    %s460 = sphi 0, %s446
    %s464 = sphi 0, %s464
    %s466 = sphi 0, %s464
    %s467 = sphi 0, %s466
    %s481 = sphi 0, %s467
    %s485 = sphi 0, %s485
    %s487 = sphi 0, %s485
    %s488 = sphi 0, %s487
    %s502 = sphi 0, %s488
    %s506 = sphi 0, %s506
    %s508 = sphi 0, %s506
    %s509 = sphi 0, %s508
    %s523 = sphi 0, %s509
    %s527 = sphi 0, %s527
    %s529 = sphi 0, %s527
    %s530 = sphi 0, %s529
    %s544 = sphi 0, %s530
    %s548 = sphi 0, %s548
    %s550 = sphi 0, %s548
    %s551 = sphi 0, %s550
    %s565 = sphi 0, %s551
    %s569 = sphi 0, %s569
    %s571 = sphi 0, %s569
    %s572 = sphi 0, %s571
    %s586 = sphi 0, %s572
    %s590 = sphi 0, %s590
    %s592 = sphi 0, %s590
    %s593 = sphi 0, %s592
    %s607 = sphi 0, %s593
    %s611 = sphi 0, %s611
    %s613 = sphi 0, %s611
    %s614 = sphi 0, %s613
    %s628 = sphi 0, %s614
    %s632 = sphi 0, %s632
    %s634 = sphi 0, %s632
    %s635 = sphi 0, %s634
    %s649 = sphi 0, %s635
    %s653 = sphi 0, %s653
    %s655 = sphi 0, %s653
    %s656 = sphi 0, %s655
    %s670 = sphi 0, %s656
    %s674 = sphi 0, %s674
    %s676 = sphi 0, %s674
    %s677 = sphi 0, %s676
    %s691 = sphi 0, %s677
    %s695 = sphi 0, %s695
    %s697 = sphi 0, %s695
    %s698 = sphi 0, %s697
    %s712 = sphi 0, %s698
    %s716 = sphi 0, %s716
    %s718 = sphi 0, %s716
    %s719 = sphi 0, %s718
    %s733 = sphi 0, %s719
    %s737 = sphi 0, %s737
    %s739 = sphi 0, %s737
    %s740 = sphi 0, %s739
    %s754 = sphi 0, %s740
    %s758 = sphi 0, %s758
    %s760 = sphi 0, %s758
    %s761 = sphi 0, %s760
    %s775 = sphi 0, %s761
    %s781 = sphi 0, %s783
    %s784 = sphi 0, %s781
    %s785 = sphi 0, %s784
    %s801 = sphi 0, %s785
  $region4: #{vit_forward.1} parent=0 // loop_header_branch
    %76 = sbr.rel (%p74) target = $region8
  $region5: #{vit_forward.1} parent=0 // loop_body
    %s78 = ssub.s32 %s73, 1
    %s79 = ssub.s32 %s73, 2
    %s80 = sadd.s32 %s73, 1
    %s81 = ssub.s32 %s73, %s80
    %p82 = scmp.eq.s32.totalorder %s81, 0
    %s84 = sadd.s32 %s83, 1
    %s85 = scalar_select %p82, %s83, %s84
    %p88 = pneg %p82
    %p89 = scmp.eq.s32.totalorder %s73, 1
    %p90 = por %p88, %p89
    %p91 = scmp.ne.s32.totalorder %s83, %s86
    %p92 = scmp.eq.s32.totalorder %s73, 0
    %p93 = por %p91, %p92
    %p94 = scmp.ne.s32.totalorder %s83, %s86
    %p95 = scmp.eq.s32.totalorder %s78, 1
    %p96 = por %p94, %p95
    %p97 = scmp.ne.s32.totalorder %s86, %s87
    %p98 = scmp.eq.s32.totalorder %s78, 0
    %p99 = por %p97, %p98
    %p100 = scmp.ne.s32.totalorder %s86, %s87
    %p101 = scmp.eq.s32.totalorder %s79, 1
    %p102 = por %p100, %p101
    %p104 = scmp.ne.s32.totalorder %s87, %s103
    %p105 = scmp.eq.s32.totalorder %s79, 0
    %p106 = por %p104, %p105
    %s108 = sadd.s32 %s107, 1
    %p111 = scmp.eq.s32.totalorder %s73, 1
    %p112 = scmp.ne.s32.totalorder %s107, %s109
    %p113 = scmp.eq.s32.totalorder %s73, 0
    %p114 = por %p112, %p113
    %p115 = scmp.ne.s32.totalorder %s107, %s109
    %p116 = scmp.eq.s32.totalorder %s78, 1
    %p117 = por %p115, %p116
    %p118 = scmp.ne.s32.totalorder %s109, %s110
    %p119 = scmp.eq.s32.totalorder %s78, 0
    %p120 = por %p118, %p119
    %p121 = scmp.ne.s32.totalorder %s109, %s110
    %p122 = scmp.eq.s32.totalorder %s79, 1
    %p123 = por %p121, %p122
    %p125 = scmp.ne.s32.totalorder %s110, %s124
    %p126 = scmp.eq.s32.totalorder %s79, 0
    %p127 = por %p125, %p126
    %s129 = sadd.s32 %s128, 1
    %p132 = scmp.eq.s32.totalorder %s73, 1
    %p133 = scmp.ne.s32.totalorder %s128, %s130
    %p134 = scmp.eq.s32.totalorder %s73, 0
    %p135 = por %p133, %p134
    %p136 = scmp.ne.s32.totalorder %s128, %s130
    %p137 = scmp.eq.s32.totalorder %s78, 1
    %p138 = por %p136, %p137
    %p139 = scmp.ne.s32.totalorder %s130, %s131
    %p140 = scmp.eq.s32.totalorder %s78, 0
    %p141 = por %p139, %p140
    %p142 = scmp.ne.s32.totalorder %s130, %s131
    %p143 = scmp.eq.s32.totalorder %s79, 1
    %p144 = por %p142, %p143
    %p146 = scmp.ne.s32.totalorder %s131, %s145
    %p147 = scmp.eq.s32.totalorder %s79, 0
    %p148 = por %p146, %p147
    %s150 = sadd.s32 %s149, 1
    %p153 = scmp.eq.s32.totalorder %s73, 1
    %p154 = scmp.ne.s32.totalorder %s149, %s151
    %p155 = scmp.eq.s32.totalorder %s73, 0
    %p156 = por %p154, %p155
    %p157 = scmp.ne.s32.totalorder %s149, %s151
    %p158 = scmp.eq.s32.totalorder %s78, 1
    %p159 = por %p157, %p158
    %p160 = scmp.ne.s32.totalorder %s151, %s152
    %p161 = scmp.eq.s32.totalorder %s78, 0
    %p162 = por %p160, %p161
    %p163 = scmp.ne.s32.totalorder %s151, %s152
    %p164 = scmp.eq.s32.totalorder %s79, 1
    %p165 = por %p163, %p164
    %p167 = scmp.ne.s32.totalorder %s152, %s166
    %p168 = scmp.eq.s32.totalorder %s79, 0
    %p169 = por %p167, %p168
    %s171 = sadd.s32 %s170, 1
    %p174 = scmp.eq.s32.totalorder %s73, 1
    %p175 = scmp.ne.s32.totalorder %s170, %s172
    %p176 = scmp.eq.s32.totalorder %s73, 0
    %p177 = por %p175, %p176
    %p178 = scmp.ne.s32.totalorder %s170, %s172
    %p179 = scmp.eq.s32.totalorder %s78, 1
    %p180 = por %p178, %p179
    %p181 = scmp.ne.s32.totalorder %s172, %s173
    %p182 = scmp.eq.s32.totalorder %s78, 0
    %p183 = por %p181, %p182
    %p184 = scmp.ne.s32.totalorder %s172, %s173
    %p185 = scmp.eq.s32.totalorder %s79, 1
    %p186 = por %p184, %p185
    %p188 = scmp.ne.s32.totalorder %s173, %s187
    %p189 = scmp.eq.s32.totalorder %s79, 0
    %p190 = por %p188, %p189
    %s192 = sadd.s32 %s191, 1
    %p195 = scmp.eq.s32.totalorder %s73, 1
    %p196 = scmp.ne.s32.totalorder %s191, %s193
    %p197 = scmp.eq.s32.totalorder %s73, 0
    %p198 = por %p196, %p197
    %p199 = scmp.ne.s32.totalorder %s191, %s193
    %p200 = scmp.eq.s32.totalorder %s78, 1
    %p201 = por %p199, %p200
    %p202 = scmp.ne.s32.totalorder %s193, %s194
    %p203 = scmp.eq.s32.totalorder %s78, 0
    %p204 = por %p202, %p203
    %p205 = scmp.ne.s32.totalorder %s193, %s194
    %p206 = scmp.eq.s32.totalorder %s79, 1
    %p207 = por %p205, %p206
    %p209 = scmp.ne.s32.totalorder %s194, %s208
    %p210 = scmp.eq.s32.totalorder %s79, 0
    %p211 = por %p209, %p210
    %s213 = sadd.s32 %s212, 1
    %p216 = scmp.eq.s32.totalorder %s73, 1
    %p217 = scmp.ne.s32.totalorder %s212, %s214
    %p218 = scmp.eq.s32.totalorder %s73, 0
    %p219 = por %p217, %p218
    %p220 = scmp.ne.s32.totalorder %s212, %s214
    %p221 = scmp.eq.s32.totalorder %s78, 1
    %p222 = por %p220, %p221
    %p223 = scmp.ne.s32.totalorder %s214, %s215
    %p224 = scmp.eq.s32.totalorder %s78, 0
    %p225 = por %p223, %p224
    %p226 = scmp.ne.s32.totalorder %s214, %s215
    %p227 = scmp.eq.s32.totalorder %s79, 1
    %p228 = por %p226, %p227
    %p230 = scmp.ne.s32.totalorder %s215, %s229
    %p231 = scmp.eq.s32.totalorder %s79, 0
    %p232 = por %p230, %p231
    %s234 = sadd.s32 %s233, 1
    %p237 = scmp.eq.s32.totalorder %s73, 1
    %p238 = scmp.ne.s32.totalorder %s233, %s235
    %p239 = scmp.eq.s32.totalorder %s73, 0
    %p240 = por %p238, %p239
    %p241 = scmp.ne.s32.totalorder %s233, %s235
    %p242 = scmp.eq.s32.totalorder %s78, 1
    %p243 = por %p241, %p242
    %p244 = scmp.ne.s32.totalorder %s235, %s236
    %p245 = scmp.eq.s32.totalorder %s78, 0
    %p246 = por %p244, %p245
    %p247 = scmp.ne.s32.totalorder %s235, %s236
    %p248 = scmp.eq.s32.totalorder %s79, 1
    %p249 = por %p247, %p248
    %p251 = scmp.ne.s32.totalorder %s236, %s250
    %p252 = scmp.eq.s32.totalorder %s79, 0
    %p253 = por %p251, %p252
    %s255 = sadd.s32 %s254, 1
    %p258 = scmp.eq.s32.totalorder %s73, 1
    %p259 = scmp.ne.s32.totalorder %s254, %s256
    %p260 = scmp.eq.s32.totalorder %s73, 0
    %p261 = por %p259, %p260
    %p262 = scmp.ne.s32.totalorder %s254, %s256
    %p263 = scmp.eq.s32.totalorder %s78, 1
    %p264 = por %p262, %p263
    %p265 = scmp.ne.s32.totalorder %s256, %s257
    %p266 = scmp.eq.s32.totalorder %s78, 0
    %p267 = por %p265, %p266
    %p268 = scmp.ne.s32.totalorder %s256, %s257
    %p269 = scmp.eq.s32.totalorder %s79, 1
    %p270 = por %p268, %p269
    %p272 = scmp.ne.s32.totalorder %s257, %s271
    %p273 = scmp.eq.s32.totalorder %s79, 0
    %p274 = por %p272, %p273
    %s276 = sadd.s32 %s275, 1
    %p279 = scmp.eq.s32.totalorder %s73, 1
    %p280 = scmp.ne.s32.totalorder %s275, %s277
    %p281 = scmp.eq.s32.totalorder %s73, 0
    %p282 = por %p280, %p281
    %p283 = scmp.ne.s32.totalorder %s275, %s277
    %p284 = scmp.eq.s32.totalorder %s78, 1
    %p285 = por %p283, %p284
    %p286 = scmp.ne.s32.totalorder %s277, %s278
    %p287 = scmp.eq.s32.totalorder %s78, 0
    %p288 = por %p286, %p287
    %p289 = scmp.ne.s32.totalorder %s277, %s278
    %p290 = scmp.eq.s32.totalorder %s79, 1
    %p291 = por %p289, %p290
    %p293 = scmp.ne.s32.totalorder %s278, %s292
    %p294 = scmp.eq.s32.totalorder %s79, 0
    %p295 = por %p293, %p294
    %s297 = sadd.s32 %s296, 1
    %p300 = scmp.eq.s32.totalorder %s73, 1
    %p301 = scmp.ne.s32.totalorder %s296, %s298
    %p302 = scmp.eq.s32.totalorder %s73, 0
    %p303 = por %p301, %p302
    %p304 = scmp.ne.s32.totalorder %s296, %s298
    %p305 = scmp.eq.s32.totalorder %s78, 1
    %p306 = por %p304, %p305
    %p307 = scmp.ne.s32.totalorder %s298, %s299
    %p308 = scmp.eq.s32.totalorder %s78, 0
    %p309 = por %p307, %p308
    %p310 = scmp.ne.s32.totalorder %s298, %s299
    %p311 = scmp.eq.s32.totalorder %s79, 1
    %p312 = por %p310, %p311
    %p314 = scmp.ne.s32.totalorder %s299, %s313
    %p315 = scmp.eq.s32.totalorder %s79, 0
    %p316 = por %p314, %p315
    %s318 = sadd.s32 %s317, 1
    %p321 = scmp.eq.s32.totalorder %s73, 1
    %p322 = scmp.ne.s32.totalorder %s317, %s319
    %p323 = scmp.eq.s32.totalorder %s73, 0
    %p324 = por %p322, %p323
    %p325 = scmp.ne.s32.totalorder %s317, %s319
    %p326 = scmp.eq.s32.totalorder %s78, 1
    %p327 = por %p325, %p326
    %p328 = scmp.ne.s32.totalorder %s319, %s320
    %p329 = scmp.eq.s32.totalorder %s78, 0
    %p330 = por %p328, %p329
    %p331 = scmp.ne.s32.totalorder %s319, %s320
    %p332 = scmp.eq.s32.totalorder %s79, 1
    %p333 = por %p331, %p332
    %p335 = scmp.ne.s32.totalorder %s320, %s334
    %p336 = scmp.eq.s32.totalorder %s79, 0
    %p337 = por %p335, %p336
    %s339 = sadd.s32 %s338, 1
    %p342 = scmp.eq.s32.totalorder %s73, 1
    %p343 = scmp.ne.s32.totalorder %s338, %s340
    %p344 = scmp.eq.s32.totalorder %s73, 0
    %p345 = por %p343, %p344
    %p346 = scmp.ne.s32.totalorder %s338, %s340
    %p347 = scmp.eq.s32.totalorder %s78, 1
    %p348 = por %p346, %p347
    %p349 = scmp.ne.s32.totalorder %s340, %s341
    %p350 = scmp.eq.s32.totalorder %s78, 0
    %p351 = por %p349, %p350
    %p352 = scmp.ne.s32.totalorder %s340, %s341
    %p353 = scmp.eq.s32.totalorder %s79, 1
    %p354 = por %p352, %p353
    %p356 = scmp.ne.s32.totalorder %s341, %s355
    %p357 = scmp.eq.s32.totalorder %s79, 0
    %p358 = por %p356, %p357
    %s360 = sadd.s32 %s359, 1
    %p363 = scmp.eq.s32.totalorder %s73, 1
    %p364 = scmp.ne.s32.totalorder %s359, %s361
    %p365 = scmp.eq.s32.totalorder %s73, 0
    %p366 = por %p364, %p365
    %p367 = scmp.ne.s32.totalorder %s359, %s361
    %p368 = scmp.eq.s32.totalorder %s78, 1
    %p369 = por %p367, %p368
    %p370 = scmp.ne.s32.totalorder %s361, %s362
    %p371 = scmp.eq.s32.totalorder %s78, 0
    %p372 = por %p370, %p371
    %p373 = scmp.ne.s32.totalorder %s361, %s362
    %p374 = scmp.eq.s32.totalorder %s79, 1
    %p375 = por %p373, %p374
    %p377 = scmp.ne.s32.totalorder %s362, %s376
    %p378 = scmp.eq.s32.totalorder %s79, 0
    %p379 = por %p377, %p378
    %s381 = sadd.s32 %s380, 1
    %p384 = scmp.eq.s32.totalorder %s73, 1
    %p385 = scmp.ne.s32.totalorder %s380, %s382
    %p386 = scmp.eq.s32.totalorder %s73, 0
    %p387 = por %p385, %p386
    %p388 = scmp.ne.s32.totalorder %s380, %s382
    %p389 = scmp.eq.s32.totalorder %s78, 1
    %p390 = por %p388, %p389
    %p391 = scmp.ne.s32.totalorder %s382, %s383
    %p392 = scmp.eq.s32.totalorder %s78, 0
    %p393 = por %p391, %p392
    %p394 = scmp.ne.s32.totalorder %s382, %s383
    %p395 = scmp.eq.s32.totalorder %s79, 1
    %p396 = por %p394, %p395
    %p398 = scmp.ne.s32.totalorder %s383, %s397
    %p399 = scmp.eq.s32.totalorder %s79, 0
    %p400 = por %p398, %p399
    %s402 = sadd.s32 %s401, 1
    %p405 = scmp.eq.s32.totalorder %s73, 1
    %p406 = scmp.ne.s32.totalorder %s401, %s403
    %p407 = scmp.eq.s32.totalorder %s73, 0
    %p408 = por %p406, %p407
    %p409 = scmp.ne.s32.totalorder %s401, %s403
    %p410 = scmp.eq.s32.totalorder %s78, 1
    %p411 = por %p409, %p410
    %p412 = scmp.ne.s32.totalorder %s403, %s404
    %p413 = scmp.eq.s32.totalorder %s78, 0
    %p414 = por %p412, %p413
    %p415 = scmp.ne.s32.totalorder %s403, %s404
    %p416 = scmp.eq.s32.totalorder %s79, 1
    %p417 = por %p415, %p416
    %p419 = scmp.ne.s32.totalorder %s404, %s418
    %p420 = scmp.eq.s32.totalorder %s79, 0
    %p421 = por %p419, %p420
    %s423 = sadd.s32 %s422, 1
    %p426 = scmp.eq.s32.totalorder %s73, 1
    %p427 = scmp.ne.s32.totalorder %s422, %s424
    %p428 = scmp.eq.s32.totalorder %s73, 0
    %p429 = por %p427, %p428
    %p430 = scmp.ne.s32.totalorder %s422, %s424
    %p431 = scmp.eq.s32.totalorder %s78, 1
    %p432 = por %p430, %p431
    %p433 = scmp.ne.s32.totalorder %s424, %s425
    %p434 = scmp.eq.s32.totalorder %s78, 0
    %p435 = por %p433, %p434
    %p436 = scmp.ne.s32.totalorder %s424, %s425
    %p437 = scmp.eq.s32.totalorder %s79, 1
    %p438 = por %p436, %p437
    %p440 = scmp.ne.s32.totalorder %s425, %s439
    %p441 = scmp.eq.s32.totalorder %s79, 0
    %p442 = por %p440, %p441
    %s444 = sadd.s32 %s443, 1
    %p447 = scmp.eq.s32.totalorder %s73, 1
    %p448 = scmp.ne.s32.totalorder %s443, %s445
    %p449 = scmp.eq.s32.totalorder %s73, 0
    %p450 = por %p448, %p449
    %p451 = scmp.ne.s32.totalorder %s443, %s445
    %p452 = scmp.eq.s32.totalorder %s78, 1
    %p453 = por %p451, %p452
    %p454 = scmp.ne.s32.totalorder %s445, %s446
    %p455 = scmp.eq.s32.totalorder %s78, 0
    %p456 = por %p454, %p455
    %p457 = scmp.ne.s32.totalorder %s445, %s446
    %p458 = scmp.eq.s32.totalorder %s79, 1
    %p459 = por %p457, %p458
    %p461 = scmp.ne.s32.totalorder %s446, %s460
    %p462 = scmp.eq.s32.totalorder %s79, 0
    %p463 = por %p461, %p462
    %s465 = sadd.s32 %s464, 1
    %p468 = scmp.eq.s32.totalorder %s73, 1
    %p469 = scmp.ne.s32.totalorder %s464, %s466
    %p470 = scmp.eq.s32.totalorder %s73, 0
    %p471 = por %p469, %p470
    %p472 = scmp.ne.s32.totalorder %s464, %s466
    %p473 = scmp.eq.s32.totalorder %s78, 1
    %p474 = por %p472, %p473
    %p475 = scmp.ne.s32.totalorder %s466, %s467
    %p476 = scmp.eq.s32.totalorder %s78, 0
    %p477 = por %p475, %p476
    %p478 = scmp.ne.s32.totalorder %s466, %s467
    %p479 = scmp.eq.s32.totalorder %s79, 1
    %p480 = por %p478, %p479
    %p482 = scmp.ne.s32.totalorder %s467, %s481
    %p483 = scmp.eq.s32.totalorder %s79, 0
    %p484 = por %p482, %p483
    %s486 = sadd.s32 %s485, 1
    %p489 = scmp.eq.s32.totalorder %s73, 1
    %p490 = scmp.ne.s32.totalorder %s485, %s487
    %p491 = scmp.eq.s32.totalorder %s73, 0
    %p492 = por %p490, %p491
    %p493 = scmp.ne.s32.totalorder %s485, %s487
    %p494 = scmp.eq.s32.totalorder %s78, 1
    %p495 = por %p493, %p494
    %p496 = scmp.ne.s32.totalorder %s487, %s488
    %p497 = scmp.eq.s32.totalorder %s78, 0
    %p498 = por %p496, %p497
    %p499 = scmp.ne.s32.totalorder %s487, %s488
    %p500 = scmp.eq.s32.totalorder %s79, 1
    %p501 = por %p499, %p500
    %p503 = scmp.ne.s32.totalorder %s488, %s502
    %p504 = scmp.eq.s32.totalorder %s79, 0
    %p505 = por %p503, %p504
    %s507 = sadd.s32 %s506, 1
    %p510 = scmp.eq.s32.totalorder %s73, 1
    %p511 = scmp.ne.s32.totalorder %s506, %s508
    %p512 = scmp.eq.s32.totalorder %s73, 0
    %p513 = por %p511, %p512
    %p514 = scmp.ne.s32.totalorder %s506, %s508
    %p515 = scmp.eq.s32.totalorder %s78, 1
    %p516 = por %p514, %p515
    %p517 = scmp.ne.s32.totalorder %s508, %s509
    %p518 = scmp.eq.s32.totalorder %s78, 0
    %p519 = por %p517, %p518
    %p520 = scmp.ne.s32.totalorder %s508, %s509
    %p521 = scmp.eq.s32.totalorder %s79, 1
    %p522 = por %p520, %p521
    %p524 = scmp.ne.s32.totalorder %s509, %s523
    %p525 = scmp.eq.s32.totalorder %s79, 0
    %p526 = por %p524, %p525
    %s528 = sadd.s32 %s527, 1
    %p531 = scmp.eq.s32.totalorder %s73, 1
    %p532 = scmp.ne.s32.totalorder %s527, %s529
    %p533 = scmp.eq.s32.totalorder %s73, 0
    %p534 = por %p532, %p533
    %p535 = scmp.ne.s32.totalorder %s527, %s529
    %p536 = scmp.eq.s32.totalorder %s78, 1
    %p537 = por %p535, %p536
    %p538 = scmp.ne.s32.totalorder %s529, %s530
    %p539 = scmp.eq.s32.totalorder %s78, 0
    %p540 = por %p538, %p539
    %p541 = scmp.ne.s32.totalorder %s529, %s530
    %p542 = scmp.eq.s32.totalorder %s79, 1
    %p543 = por %p541, %p542
    %p545 = scmp.ne.s32.totalorder %s530, %s544
    %p546 = scmp.eq.s32.totalorder %s79, 0
    %p547 = por %p545, %p546
    %s549 = sadd.s32 %s548, 1
    %p552 = scmp.eq.s32.totalorder %s73, 1
    %p553 = scmp.ne.s32.totalorder %s548, %s550
    %p554 = scmp.eq.s32.totalorder %s73, 0
    %p555 = por %p553, %p554
    %p556 = scmp.ne.s32.totalorder %s548, %s550
    %p557 = scmp.eq.s32.totalorder %s78, 1
    %p558 = por %p556, %p557
    %p559 = scmp.ne.s32.totalorder %s550, %s551
    %p560 = scmp.eq.s32.totalorder %s78, 0
    %p561 = por %p559, %p560
    %p562 = scmp.ne.s32.totalorder %s550, %s551
    %p563 = scmp.eq.s32.totalorder %s79, 1
    %p564 = por %p562, %p563
    %p566 = scmp.ne.s32.totalorder %s551, %s565
    %p567 = scmp.eq.s32.totalorder %s79, 0
    %p568 = por %p566, %p567
    %s570 = sadd.s32 %s569, 1
    %p573 = scmp.eq.s32.totalorder %s73, 1
    %p574 = scmp.ne.s32.totalorder %s569, %s571
    %p575 = scmp.eq.s32.totalorder %s73, 0
    %p576 = por %p574, %p575
    %p577 = scmp.ne.s32.totalorder %s569, %s571
    %p578 = scmp.eq.s32.totalorder %s78, 1
    %p579 = por %p577, %p578
    %p580 = scmp.ne.s32.totalorder %s571, %s572
    %p581 = scmp.eq.s32.totalorder %s78, 0
    %p582 = por %p580, %p581
    %p583 = scmp.ne.s32.totalorder %s571, %s572
    %p584 = scmp.eq.s32.totalorder %s79, 1
    %p585 = por %p583, %p584
    %p587 = scmp.ne.s32.totalorder %s572, %s586
    %p588 = scmp.eq.s32.totalorder %s79, 0
    %p589 = por %p587, %p588
    %s591 = sadd.s32 %s590, 1
    %p594 = scmp.eq.s32.totalorder %s73, 1
    %p595 = scmp.ne.s32.totalorder %s590, %s592
    %p596 = scmp.eq.s32.totalorder %s73, 0
    %p597 = por %p595, %p596
    %p598 = scmp.ne.s32.totalorder %s590, %s592
    %p599 = scmp.eq.s32.totalorder %s78, 1
    %p600 = por %p598, %p599
    %p601 = scmp.ne.s32.totalorder %s592, %s593
    %p602 = scmp.eq.s32.totalorder %s78, 0
    %p603 = por %p601, %p602
    %p604 = scmp.ne.s32.totalorder %s592, %s593
    %p605 = scmp.eq.s32.totalorder %s79, 1
    %p606 = por %p604, %p605
    %p608 = scmp.ne.s32.totalorder %s593, %s607
    %p609 = scmp.eq.s32.totalorder %s79, 0
    %p610 = por %p608, %p609
    %s612 = sadd.s32 %s611, 1
    %p615 = scmp.eq.s32.totalorder %s73, 1
    %p616 = scmp.ne.s32.totalorder %s611, %s613
    %p617 = scmp.eq.s32.totalorder %s73, 0
    %p618 = por %p616, %p617
    %p619 = scmp.ne.s32.totalorder %s611, %s613
    %p620 = scmp.eq.s32.totalorder %s78, 1
    %p621 = por %p619, %p620
    %p622 = scmp.ne.s32.totalorder %s613, %s614
    %p623 = scmp.eq.s32.totalorder %s78, 0
    %p624 = por %p622, %p623
    %p625 = scmp.ne.s32.totalorder %s613, %s614
    %p626 = scmp.eq.s32.totalorder %s79, 1
    %p627 = por %p625, %p626
    %p629 = scmp.ne.s32.totalorder %s614, %s628
    %p630 = scmp.eq.s32.totalorder %s79, 0
    %p631 = por %p629, %p630
    %s633 = sadd.s32 %s632, 1
    %p636 = scmp.eq.s32.totalorder %s73, 1
    %p637 = scmp.ne.s32.totalorder %s632, %s634
    %p638 = scmp.eq.s32.totalorder %s73, 0
    %p639 = por %p637, %p638
    %p640 = scmp.ne.s32.totalorder %s632, %s634
    %p641 = scmp.eq.s32.totalorder %s78, 1
    %p642 = por %p640, %p641
    %p643 = scmp.ne.s32.totalorder %s634, %s635
    %p644 = scmp.eq.s32.totalorder %s78, 0
    %p645 = por %p643, %p644
    %p646 = scmp.ne.s32.totalorder %s634, %s635
    %p647 = scmp.eq.s32.totalorder %s79, 1
    %p648 = por %p646, %p647
    %p650 = scmp.ne.s32.totalorder %s635, %s649
    %p651 = scmp.eq.s32.totalorder %s79, 0
    %p652 = por %p650, %p651
    %s654 = sadd.s32 %s653, 1
    %p657 = scmp.eq.s32.totalorder %s73, 1
    %p658 = scmp.ne.s32.totalorder %s653, %s655
    %p659 = scmp.eq.s32.totalorder %s73, 0
    %p660 = por %p658, %p659
    %p661 = scmp.ne.s32.totalorder %s653, %s655
    %p662 = scmp.eq.s32.totalorder %s78, 1
    %p663 = por %p661, %p662
    %p664 = scmp.ne.s32.totalorder %s655, %s656
    %p665 = scmp.eq.s32.totalorder %s78, 0
    %p666 = por %p664, %p665
    %p667 = scmp.ne.s32.totalorder %s655, %s656
    %p668 = scmp.eq.s32.totalorder %s79, 1
    %p669 = por %p667, %p668
    %p671 = scmp.ne.s32.totalorder %s656, %s670
    %p672 = scmp.eq.s32.totalorder %s79, 0
    %p673 = por %p671, %p672
    %s675 = sadd.s32 %s674, 1
    %p678 = scmp.eq.s32.totalorder %s73, 1
    %p679 = scmp.ne.s32.totalorder %s674, %s676
    %p680 = scmp.eq.s32.totalorder %s73, 0
    %p681 = por %p679, %p680
    %p682 = scmp.ne.s32.totalorder %s674, %s676
    %p683 = scmp.eq.s32.totalorder %s78, 1
    %p684 = por %p682, %p683
    %p685 = scmp.ne.s32.totalorder %s676, %s677
    %p686 = scmp.eq.s32.totalorder %s78, 0
    %p687 = por %p685, %p686
    %p688 = scmp.ne.s32.totalorder %s676, %s677
    %p689 = scmp.eq.s32.totalorder %s79, 1
    %p690 = por %p688, %p689
    %p692 = scmp.ne.s32.totalorder %s677, %s691
    %p693 = scmp.eq.s32.totalorder %s79, 0
    %p694 = por %p692, %p693
    %s696 = sadd.s32 %s695, 1
    %p699 = scmp.eq.s32.totalorder %s73, 1
    %p700 = scmp.ne.s32.totalorder %s695, %s697
    %p701 = scmp.eq.s32.totalorder %s73, 0
    %p702 = por %p700, %p701
    %p703 = scmp.ne.s32.totalorder %s695, %s697
    %p704 = scmp.eq.s32.totalorder %s78, 1
    %p705 = por %p703, %p704
    %p706 = scmp.ne.s32.totalorder %s697, %s698
    %p707 = scmp.eq.s32.totalorder %s78, 0
    %p708 = por %p706, %p707
    %p709 = scmp.ne.s32.totalorder %s697, %s698
    %p710 = scmp.eq.s32.totalorder %s79, 1
    %p711 = por %p709, %p710
    %p713 = scmp.ne.s32.totalorder %s698, %s712
    %p714 = scmp.eq.s32.totalorder %s79, 0
    %p715 = por %p713, %p714
    %s717 = sadd.s32 %s716, 1
    %p720 = scmp.eq.s32.totalorder %s73, 1
    %p721 = scmp.ne.s32.totalorder %s716, %s718
    %p722 = scmp.eq.s32.totalorder %s73, 0
    %p723 = por %p721, %p722
    %p724 = scmp.ne.s32.totalorder %s716, %s718
    %p725 = scmp.eq.s32.totalorder %s78, 1
    %p726 = por %p724, %p725
    %p727 = scmp.ne.s32.totalorder %s718, %s719
    %p728 = scmp.eq.s32.totalorder %s78, 0
    %p729 = por %p727, %p728
    %p730 = scmp.ne.s32.totalorder %s718, %s719
    %p731 = scmp.eq.s32.totalorder %s79, 1
    %p732 = por %p730, %p731
    %p734 = scmp.ne.s32.totalorder %s719, %s733
    %p735 = scmp.eq.s32.totalorder %s79, 0
    %p736 = por %p734, %p735
    %s738 = sadd.s32 %s737, 1
    %p741 = scmp.eq.s32.totalorder %s73, 1
    %p742 = scmp.ne.s32.totalorder %s737, %s739
    %p743 = scmp.eq.s32.totalorder %s73, 0
    %p744 = por %p742, %p743
    %p745 = scmp.ne.s32.totalorder %s737, %s739
    %p746 = scmp.eq.s32.totalorder %s78, 1
    %p747 = por %p745, %p746
    %p748 = scmp.ne.s32.totalorder %s739, %s740
    %p749 = scmp.eq.s32.totalorder %s78, 0
    %p750 = por %p748, %p749
    %p751 = scmp.ne.s32.totalorder %s739, %s740
    %p752 = scmp.eq.s32.totalorder %s79, 1
    %p753 = por %p751, %p752
    %p755 = scmp.ne.s32.totalorder %s740, %s754
    %p756 = scmp.eq.s32.totalorder %s79, 0
    %p757 = por %p755, %p756
    %s759 = sadd.s32 %s758, 1
    %p762 = scmp.eq.s32.totalorder %s73, 1
    %p763 = scmp.ne.s32.totalorder %s758, %s760
    %p764 = scmp.eq.s32.totalorder %s73, 0
    %p765 = por %p763, %p764
    %p766 = scmp.ne.s32.totalorder %s758, %s760
    %p767 = scmp.eq.s32.totalorder %s78, 1
    %p768 = por %p766, %p767
    %p769 = scmp.ne.s32.totalorder %s760, %s761
    %p770 = scmp.eq.s32.totalorder %s78, 0
    %p771 = por %p769, %p770
    %p772 = scmp.ne.s32.totalorder %s760, %s761
    %p773 = scmp.eq.s32.totalorder %s79, 1
    %p774 = por %p772, %p773
    %p776 = scmp.ne.s32.totalorder %s761, %s775
    %p777 = scmp.eq.s32.totalorder %s79, 0
    %p778 = por %p776, %p777
    %s779 = ssub.s32 %s73, %s80
    %p780 = scmp.eq.s32.totalorder %s779, 0
    %s782 = sadd.s32 %s781, 1
    %s783 = scalar_select %p780, %s781, %s782
    %p786 = pneg %p780
    %p787 = scmp.eq.s32.totalorder %s73, 1
    %p788 = por %p786, %p787
    %p789 = scmp.ne.s32.totalorder %s781, %s784
    %p790 = scmp.eq.s32.totalorder %s73, 0
    %p791 = por %p789, %p790
    %p792 = scmp.ne.s32.totalorder %s781, %s784
    %p793 = scmp.eq.s32.totalorder %s78, 1
    %p794 = por %p792, %p793
    %p795 = scmp.ne.s32.totalorder %s784, %s785
    %p796 = scmp.eq.s32.totalorder %s78, 0
    %p797 = por %p795, %p796
    %p798 = scmp.ne.s32.totalorder %s784, %s785
    %p799 = scmp.eq.s32.totalorder %s79, 1
    %p800 = por %p798, %p799
    %p802 = scmp.ne.s32.totalorder %s785, %s801
    %p803 = scmp.eq.s32.totalorder %s79, 0
    %p804 = por %p802, %p803
    %p805 = scmp.le.s32.totalorder 1, %s73
    %p806 = scmp.lt.s32.totalorder %s73, 3
    %p807 = pnand %p805, %p806
    %p808 = pneg %p807
    // Predicated region
    $region9: #{vit_forward.1} parent=5 // pred_check
      _
    $region10: #{vit_forward.1} parent=5 // pred_check_branch
      %810 = sbr.rel (%p807) target = $region12
    $region11: #{vit_forward.1} parent=5 // pred_region
      %s811 = ssub.s32 %s73, 1
      // Predicated region
      $region13: #{vit_forward.1} parent=11 // pred_check
        %p812 = pneg %p120
      $region14: #{vit_forward.1} parent=11 // pred_check_branch
        %814 = sbr.rel (%p812) target = $region16
      $region15: #{vit_forward.1} parent=11 // pred_region
        _
      $region16: #{vit_forward.1} parent=11 // pred_fallthru
        _
      // Predicated region
      $region17: #{vit_forward.1} parent=11 // pred_check
        %p815 = pneg %p141
      $region18: #{vit_forward.1} parent=11 // pred_check_branch
        %817 = sbr.rel (%p815) target = $region20
      $region19: #{vit_forward.1} parent=11 // pred_region
        _
      $region20: #{vit_forward.1} parent=11 // pred_fallthru
        _
      // Predicated region
      $region21: #{vit_forward.1} parent=11 // pred_check
        %p818 = pneg %p162
      $region22: #{vit_forward.1} parent=11 // pred_check_branch
        %820 = sbr.rel (%p818) target = $region24
      $region23: #{vit_forward.1} parent=11 // pred_region
        _
      $region24: #{vit_forward.1} parent=11 // pred_fallthru
        _
      // Predicated region
      $region25: #{vit_forward.1} parent=11 // pred_check
        %p821 = pneg %p183
      $region26: #{vit_forward.1} parent=11 // pred_check_branch
        %823 = sbr.rel (%p821) target = $region28
      $region27: #{vit_forward.1} parent=11 // pred_region
        _
      $region28: #{vit_forward.1} parent=11 // pred_fallthru
        _
      // Predicated region
      $region29: #{vit_forward.1} parent=11 // pred_check
        %p824 = pneg %p204
      $region30: #{vit_forward.1} parent=11 // pred_check_branch
        %826 = sbr.rel (%p824) target = $region32
      $region31: #{vit_forward.1} parent=11 // pred_region
        _
      $region32: #{vit_forward.1} parent=11 // pred_fallthru
        _
      // Predicated region
      $region33: #{vit_forward.1} parent=11 // pred_check
        %p827 = pneg %p225
      $region34: #{vit_forward.1} parent=11 // pred_check_branch
        %829 = sbr.rel (%p827) target = $region36
      $region35: #{vit_forward.1} parent=11 // pred_region
        _
      $region36: #{vit_forward.1} parent=11 // pred_fallthru
        _
      // Predicated region
      $region37: #{vit_forward.1} parent=11 // pred_check
        %p830 = pneg %p246
      $region38: #{vit_forward.1} parent=11 // pred_check_branch
        %832 = sbr.rel (%p830) target = $region40
      $region39: #{vit_forward.1} parent=11 // pred_region
        _
      $region40: #{vit_forward.1} parent=11 // pred_fallthru
        _
      // Predicated region
      $region41: #{vit_forward.1} parent=11 // pred_check
        %p833 = pneg %p267
      $region42: #{vit_forward.1} parent=11 // pred_check_branch
        %835 = sbr.rel (%p833) target = $region44
      $region43: #{vit_forward.1} parent=11 // pred_region
        _
      $region44: #{vit_forward.1} parent=11 // pred_fallthru
        _
      // Predicated region
      $region45: #{vit_forward.1} parent=11 // pred_check
        %p836 = pneg %p288
      $region46: #{vit_forward.1} parent=11 // pred_check_branch
        %838 = sbr.rel (%p836) target = $region48
      $region47: #{vit_forward.1} parent=11 // pred_region
        _
      $region48: #{vit_forward.1} parent=11 // pred_fallthru
        _
      // Predicated region
      $region49: #{vit_forward.1} parent=11 // pred_check
        %p839 = pneg %p309
      $region50: #{vit_forward.1} parent=11 // pred_check_branch
        %841 = sbr.rel (%p839) target = $region52
      $region51: #{vit_forward.1} parent=11 // pred_region
        _
      $region52: #{vit_forward.1} parent=11 // pred_fallthru
        _
      // Predicated region
      $region53: #{vit_forward.1} parent=11 // pred_check
        %p842 = pneg %p330
      $region54: #{vit_forward.1} parent=11 // pred_check_branch
        %844 = sbr.rel (%p842) target = $region56
      $region55: #{vit_forward.1} parent=11 // pred_region
        _
      $region56: #{vit_forward.1} parent=11 // pred_fallthru
        _
      // Predicated region
      $region57: #{vit_forward.1} parent=11 // pred_check
        %p845 = pneg %p351
      $region58: #{vit_forward.1} parent=11 // pred_check_branch
        %847 = sbr.rel (%p845) target = $region60
      $region59: #{vit_forward.1} parent=11 // pred_region
        _
      $region60: #{vit_forward.1} parent=11 // pred_fallthru
        _
      // Predicated region
      $region61: #{vit_forward.1} parent=11 // pred_check
        %p848 = pneg %p372
      $region62: #{vit_forward.1} parent=11 // pred_check_branch
        %850 = sbr.rel (%p848) target = $region64
      $region63: #{vit_forward.1} parent=11 // pred_region
        _
      $region64: #{vit_forward.1} parent=11 // pred_fallthru
        _
      // Predicated region
      $region65: #{vit_forward.1} parent=11 // pred_check
        %p851 = pneg %p393
      $region66: #{vit_forward.1} parent=11 // pred_check_branch
        %853 = sbr.rel (%p851) target = $region68
      $region67: #{vit_forward.1} parent=11 // pred_region
        _
      $region68: #{vit_forward.1} parent=11 // pred_fallthru
        _
      // Predicated region
      $region69: #{vit_forward.1} parent=11 // pred_check
        %p854 = pneg %p414
      $region70: #{vit_forward.1} parent=11 // pred_check_branch
        %856 = sbr.rel (%p854) target = $region72
      $region71: #{vit_forward.1} parent=11 // pred_region
        _
      $region72: #{vit_forward.1} parent=11 // pred_fallthru
        _
      // Predicated region
      $region73: #{vit_forward.1} parent=11 // pred_check
        %p857 = pneg %p435
      $region74: #{vit_forward.1} parent=11 // pred_check_branch
        %859 = sbr.rel (%p857) target = $region76
      $region75: #{vit_forward.1} parent=11 // pred_region
        _
      $region76: #{vit_forward.1} parent=11 // pred_fallthru
        _
      // Predicated region
      $region77: #{vit_forward.1} parent=11 // pred_check
        %p860 = pneg %p456
      $region78: #{vit_forward.1} parent=11 // pred_check_branch
        %862 = sbr.rel (%p860) target = $region80
      $region79: #{vit_forward.1} parent=11 // pred_region
        _
      $region80: #{vit_forward.1} parent=11 // pred_fallthru
        _
      // Predicated region
      $region81: #{vit_forward.1} parent=11 // pred_check
        %p863 = pneg %p477
      $region82: #{vit_forward.1} parent=11 // pred_check_branch
        %865 = sbr.rel (%p863) target = $region84
      $region83: #{vit_forward.1} parent=11 // pred_region
        _
      $region84: #{vit_forward.1} parent=11 // pred_fallthru
        _
      // Predicated region
      $region85: #{vit_forward.1} parent=11 // pred_check
        %p866 = pneg %p498
      $region86: #{vit_forward.1} parent=11 // pred_check_branch
        %868 = sbr.rel (%p866) target = $region88
      $region87: #{vit_forward.1} parent=11 // pred_region
        _
      $region88: #{vit_forward.1} parent=11 // pred_fallthru
        _
      // Predicated region
      $region89: #{vit_forward.1} parent=11 // pred_check
        %p869 = pneg %p519
      $region90: #{vit_forward.1} parent=11 // pred_check_branch
        %871 = sbr.rel (%p869) target = $region92
      $region91: #{vit_forward.1} parent=11 // pred_region
        _
      $region92: #{vit_forward.1} parent=11 // pred_fallthru
        _
      // Predicated region
      $region93: #{vit_forward.1} parent=11 // pred_check
        %p872 = pneg %p540
      $region94: #{vit_forward.1} parent=11 // pred_check_branch
        %874 = sbr.rel (%p872) target = $region96
      $region95: #{vit_forward.1} parent=11 // pred_region
        _
      $region96: #{vit_forward.1} parent=11 // pred_fallthru
        _
      // Predicated region
      $region97: #{vit_forward.1} parent=11 // pred_check
        %p875 = pneg %p561
      $region98: #{vit_forward.1} parent=11 // pred_check_branch
        %877 = sbr.rel (%p875) target = $region100
      $region99: #{vit_forward.1} parent=11 // pred_region
        _
      $region100: #{vit_forward.1} parent=11 // pred_fallthru
        _
      // Predicated region
      $region101: #{vit_forward.1} parent=11 // pred_check
        %p878 = pneg %p582
      $region102: #{vit_forward.1} parent=11 // pred_check_branch
        %880 = sbr.rel (%p878) target = $region104
      $region103: #{vit_forward.1} parent=11 // pred_region
        _
      $region104: #{vit_forward.1} parent=11 // pred_fallthru
        _
      // Predicated region
      $region105: #{vit_forward.1} parent=11 // pred_check
        %p881 = pneg %p603
      $region106: #{vit_forward.1} parent=11 // pred_check_branch
        %883 = sbr.rel (%p881) target = $region108
      $region107: #{vit_forward.1} parent=11 // pred_region
        _
      $region108: #{vit_forward.1} parent=11 // pred_fallthru
        _
      // Predicated region
      $region109: #{vit_forward.1} parent=11 // pred_check
        %p884 = pneg %p624
      $region110: #{vit_forward.1} parent=11 // pred_check_branch
        %886 = sbr.rel (%p884) target = $region112
      $region111: #{vit_forward.1} parent=11 // pred_region
        _
      $region112: #{vit_forward.1} parent=11 // pred_fallthru
        _
      // Predicated region
      $region113: #{vit_forward.1} parent=11 // pred_check
        %p887 = pneg %p645
      $region114: #{vit_forward.1} parent=11 // pred_check_branch
        %889 = sbr.rel (%p887) target = $region116
      $region115: #{vit_forward.1} parent=11 // pred_region
        _
      $region116: #{vit_forward.1} parent=11 // pred_fallthru
        _
      // Predicated region
      $region117: #{vit_forward.1} parent=11 // pred_check
        %p890 = pneg %p666
      $region118: #{vit_forward.1} parent=11 // pred_check_branch
        %892 = sbr.rel (%p890) target = $region120
      $region119: #{vit_forward.1} parent=11 // pred_region
        _
      $region120: #{vit_forward.1} parent=11 // pred_fallthru
        _
      // Predicated region
      $region121: #{vit_forward.1} parent=11 // pred_check
        %p893 = pneg %p687
      $region122: #{vit_forward.1} parent=11 // pred_check_branch
        %895 = sbr.rel (%p893) target = $region124
      $region123: #{vit_forward.1} parent=11 // pred_region
        _
      $region124: #{vit_forward.1} parent=11 // pred_fallthru
        _
      // Predicated region
      $region125: #{vit_forward.1} parent=11 // pred_check
        %p896 = pneg %p708
      $region126: #{vit_forward.1} parent=11 // pred_check_branch
        %898 = sbr.rel (%p896) target = $region128
      $region127: #{vit_forward.1} parent=11 // pred_region
        _
      $region128: #{vit_forward.1} parent=11 // pred_fallthru
        _
      // Predicated region
      $region129: #{vit_forward.1} parent=11 // pred_check
        %p899 = pneg %p729
      $region130: #{vit_forward.1} parent=11 // pred_check_branch
        %901 = sbr.rel (%p899) target = $region132
      $region131: #{vit_forward.1} parent=11 // pred_region
        _
      $region132: #{vit_forward.1} parent=11 // pred_fallthru
        _
      // Predicated region
      $region133: #{vit_forward.1} parent=11 // pred_check
        %p902 = pneg %p750
      $region134: #{vit_forward.1} parent=11 // pred_check_branch
        %904 = sbr.rel (%p902) target = $region136
      $region135: #{vit_forward.1} parent=11 // pred_region
        _
      $region136: #{vit_forward.1} parent=11 // pred_fallthru
        _
      // Predicated region
      $region137: #{vit_forward.1} parent=11 // pred_check
        %p905 = pneg %p771
      $region138: #{vit_forward.1} parent=11 // pred_check_branch
        %907 = sbr.rel (%p905) target = $region140
      $region139: #{vit_forward.1} parent=11 // pred_region
        _
      $region140: #{vit_forward.1} parent=11 // pred_fallthru
        _
    $region12: #{vit_forward.1} parent=5 // pred_fallthru
      _
    %p908 = scmp.lt.s32.totalorder %s73, 2
    // Predicated region
    $region141: #{vit_forward.1} parent=5 // pred_check
      %p909 = pneg %p908
    $region142: #{vit_forward.1} parent=5 // pred_check_branch
      %911 = sbr.rel (%p909) target = $region144
    $region143: #{vit_forward.1} parent=5 // pred_region
      // Predicated region
      $region145: #{vit_forward.1} parent=143 // pred_check
        %p912 = pneg %p93
      $region146: #{vit_forward.1} parent=143 // pred_check_branch
        %914 = sbr.rel (%p912) target = $region148
      $region147: #{vit_forward.1} parent=143 // pred_region
        %p915 = scmp.lt.s32.totalorder %s73, 1
        %s916 = scalar_select %p915, %s73, 1
        %s917 = smul.addr %s916, 6
        %s918 = smul.addr %s917, 8
        %s919 = scalar_lea.vmem %s1, %s918
      $region148: #{vit_forward.1} parent=143 // pred_fallthru
        _
    $region144: #{vit_forward.1} parent=5 // pred_fallthru
      _
    %p920 = scmp.le.s32.totalorder 1, %s73
    %p921 = scmp.lt.s32.totalorder %s73, 3
    %p922 = pnand %p920, %p921
    %p923 = pneg %p922
    // Predicated region
    $region149: #{vit_forward.1} parent=5 // pred_check
      _
    $region150: #{vit_forward.1} parent=5 // pred_check_branch
      %925 = sbr.rel (%p922) target = $region152
    $region151: #{vit_forward.1} parent=5 // pred_region
      %s926 = ssub.s32 %s73, 1
      %p927 = scmp.lt.s32.totalorder %s78, 1
      %s928 = scalar_select %p927, %s78, 1
      %s929 = smul.addr %s928, 6
      %s930 = smul.addr %s929, 8
      %s931 = scalar_lea.vmem %s1, %s930
      %p932 = pneg %p99
      %p933 = pneg %p96
      %p934 = pneg %p120
      %p935 = pneg %p117
      %p936 = pneg %p141
      %p937 = pneg %p138
      %p938 = pneg %p162
      %p939 = pneg %p159
      %p940 = pneg %p183
      %p941 = pneg %p180
      %p942 = pneg %p204
      %p943 = pneg %p201
      %p944 = pneg %p225
      %p945 = pneg %p222
      %p946 = pneg %p246
      %p947 = pneg %p243
      %p948 = pneg %p267
      %p949 = pneg %p264
      %p950 = pneg %p288
      %p951 = pneg %p285
      %p952 = pneg %p309
      %p953 = pneg %p306
      %p954 = pneg %p330
      %p955 = pneg %p327
      %p956 = pneg %p351
      %p957 = pneg %p348
      %p958 = pneg %p372
      %p959 = pneg %p369
      %p960 = pneg %p393
      %p961 = pneg %p390
      %p962 = pneg %p414
      %p963 = pneg %p411
      %p964 = pneg %p435
      %p965 = pneg %p432
      %p966 = pneg %p456
      %p967 = pneg %p453
      %p968 = pneg %p477
      %p969 = pneg %p474
      %p970 = pneg %p498
      %p971 = pneg %p495
      %p972 = pneg %p519
      %p973 = pneg %p516
      %p974 = pneg %p540
      %p975 = pneg %p537
      %p976 = pneg %p561
      %p977 = pneg %p558
      %p978 = pneg %p582
      %p979 = pneg %p579
      %p980 = pneg %p603
      %p981 = pneg %p600
      %p982 = pneg %p624
      %p983 = pneg %p621
      %p984 = pneg %p645
      %p985 = pneg %p642
      %p986 = pneg %p666
      %p987 = pneg %p663
      %p988 = pneg %p687
      %p989 = pneg %p684
      %p990 = pneg %p708
      %p991 = pneg %p705
      %p992 = pneg %p729
      %p993 = pneg %p726
      %p994 = pneg %p750
      %p995 = pneg %p747
      %p996 = pneg %p771
      %p997 = pneg %p768
      %p998 = pneg %p797
      %p999 = pneg %p794
      %p1000 = scmp.lt.s32.totalorder %s78, 1
      %s1001 = scalar_select %p1000, %s78, 1
      %s1002 = smul.addr %s1001, 8
      %s1003 = scalar_lea.vmem %s67, %s1002
      %p1004 = scmp.lt.s32.totalorder %s78, 1
      %s1005 = scalar_select %p1004, %s78, 1
      %s1006 = smul.addr %s1005, 6
      %s1007 = smul.addr %s1006, 8
      %s1008 = scalar_lea.vmem %s1, %s1007
      %p1009 = scmp.lt.s32.totalorder %s78, 1
      %s1010 = scalar_select %p1009, %s78, 1
      %s1011 = smul.addr %s1010, 8
      %s1012 = scalar_lea.vmem %s67, %s1011
      %v1013 = vld [vmem:[%s1008] sm:$0x1f]
      %v1014 = vld [vmem:[%s1008 + $0x8] sm:$0x1f]
      %v1015 = vld [vmem:[%s1008 + $0x10] sm:$0x1f]
      %v1016 = vld [vmem:[%s1008 + $0x18] sm:$0x1f]
      %v1017 = vld [vmem:[%s1008 + $0x20] sm:$0x1f]
      %v1018 = vld [vmem:[%s1008 + $0x28] sm:$0x1f]
      %v1019 = vld [vmem:[%s7] sm:$0xff]
      %v1020 = vld [vmem:[%s7 + $0x8] sm:$0xff]
      %v1021 = vld [vmem:[%s7 + $0x10] sm:$0xff]
      %v1022 = vld [vmem:[%s7 + $0x18] sm:$0xff]
      %v1023 = vld [vmem:[%s7 + $0x20] sm:$0xff]
      %v1024 = vld [vmem:[%s7 + $0x28] sm:$0xff]
      %v1025 = vld [vmem:[%s7 + $0x30] sm:$0xff]
      %v1026 = vld [vmem:[%s7 + $0x38] sm:$0xff]
      %v1027 = vld [vmem:[%s7 + $0x40] sm:$0xff]
      %v1028 = vld [vmem:[%s7 + $0x48] sm:$0xff]
      %v1029 = vld [vmem:[%s7 + $0x50] sm:$0xff]
      %v1030 = vld [vmem:[%s7 + $0x58] sm:$0xff]
      %v1031 = vld [vmem:[%s7 + $0x60] sm:$0xff]
      %v1032 = vld [vmem:[%s7 + $0x68] sm:$0xff]
      %v1033 = vld [vmem:[%s7 + $0x70] sm:$0xff]
      %v1034 = vld [vmem:[%s7 + $0x78] sm:$0xff]
      %v1035 = vld [vmem:[%s7 + $0x80] sm:$0xff]
      %v1036 = vld [vmem:[%s7 + $0x88] sm:$0xff]
      %v1037 = vld [vmem:[%s7 + $0x90] sm:$0xff]
      %v1038 = vld [vmem:[%s7 + $0x98] sm:$0xff]
      %v1039 = vld [vmem:[%s7 + $0xa0] sm:$0xff]
      %v1040 = vld [vmem:[%s7 + $0xa8] sm:$0xff]
      %v1041 = vld [vmem:[%s7 + $0xb0] sm:$0xff]
      %v1042 = vld [vmem:[%s7 + $0xb8] sm:$0xff]
      %v1043 = vld [vmem:[%s7 + $0xc0] sm:$0xff]
      %v1044 = vld [vmem:[%s7 + $0xc8] sm:$0xff]
      %v1045 = vld [vmem:[%s7 + $0xd0] sm:$0xff]
      %v1046 = vld [vmem:[%s7 + $0xd8] sm:$0xff]
      %v1047 = vld [vmem:[%s7 + $0xe0] sm:$0xff]
      %v1048 = vld [vmem:[%s7 + $0xe8] sm:$0xff]
      %v1049 = vld [vmem:[%s7 + $0xf0] sm:$0xff]
      %v1050 = vld [vmem:[%s7 + $0xf8] sm:$0xff]
      %v1051 = vld [vmem:[%s7 + $0x100] sm:$0xff]
      %v1052 = vld [vmem:[%s7 + $0x108] sm:$0xff]
      %v1053 = vld [vmem:[%s7 + $0x110] sm:$0xff]
      %v1054 = vld [vmem:[%s7 + $0x118] sm:$0xff]
      %v1055 = vld [vmem:[%s7 + $0x120] sm:$0xff]
      %v1056 = vld [vmem:[%s7 + $0x128] sm:$0xff]
      %v1057 = vld [vmem:[%s7 + $0x130] sm:$0xff]
      %v1058 = vld [vmem:[%s7 + $0x138] sm:$0xff]
      %v1059 = vld [vmem:[%s7 + $0x140] sm:$0xff]
      %v1060 = vld [vmem:[%s7 + $0x148] sm:$0xff]
      %v1061 = vld [vmem:[%s7 + $0x150] sm:$0xff]
      %v1062 = vld [vmem:[%s7 + $0x158] sm:$0xff]
      %v1063 = vld [vmem:[%s7 + $0x160] sm:$0xff]
      %v1064 = vld [vmem:[%s7 + $0x168] sm:$0xff]
      %v1065 = vld [vmem:[%s7 + $0x170] sm:$0xff]
      %v1066 = vld [vmem:[%s7 + $0x178] sm:$0xff]
      %v1067 = vld [vmem:[%s7 + $0x180] sm:$0xff]
      %v1068 = vld [vmem:[%s7 + $0x188] sm:$0xff]
      %v1069 = vld [vmem:[%s7 + $0x190] sm:$0xff]
      %v1070 = vld [vmem:[%s7 + $0x198] sm:$0xff]
      %v1071 = vld [vmem:[%s7 + $0x1a0] sm:$0xff]
      %v1072 = vld [vmem:[%s7 + $0x1a8] sm:$0xff]
      %v1073 = vld [vmem:[%s7 + $0x1b0] sm:$0xff]
      %v1074 = vld [vmem:[%s7 + $0x1b8] sm:$0xff]
      %v1075 = vld [vmem:[%s7 + $0x1c0] sm:$0xff]
      %v1076 = vld [vmem:[%s7 + $0x1c8] sm:$0xff]
      %v1077 = vld [vmem:[%s7 + $0x1d0] sm:$0xff]
      %v1078 = vld [vmem:[%s7 + $0x1d8] sm:$0xff]
      %v1079 = vld [vmem:[%s7 + $0x1e0] sm:$0xff]
      %v1080 = vld [vmem:[%s7 + $0x1e8] sm:$0xff]
      %v1081 = vld [vmem:[%s7 + $0x1f0] sm:$0xff]
      %v1082 = vld [vmem:[%s7 + $0x1f8] sm:$0xff]
      %v1083 = vld [vmem:[%s7 + $0x200] sm:$0xff]
      %v1084 = vld [vmem:[%s7 + $0x208] sm:$0xff]
      %v1085 = vld [vmem:[%s7 + $0x210] sm:$0xff]
      %v1086 = vld [vmem:[%s7 + $0x218] sm:$0xff]
      %v1087 = vld [vmem:[%s7 + $0x220] sm:$0xff]
      %v1088 = vld [vmem:[%s7 + $0x228] sm:$0xff]
      %v1089 = vld [vmem:[%s7 + $0x230] sm:$0xff]
      %v1090 = vld [vmem:[%s7 + $0x238] sm:$0xff]
      %v1091 = vld [vmem:[%s7 + $0x240] sm:$0xff]
      %v1092 = vld [vmem:[%s7 + $0x248] sm:$0xff]
      %v1093 = vld [vmem:[%s7 + $0x250] sm:$0xff]
      %v1094 = vld [vmem:[%s7 + $0x258] sm:$0xff]
      %v1095 = vld [vmem:[%s7 + $0x260] sm:$0xff]
      %v1096 = vld [vmem:[%s7 + $0x268] sm:$0xff]
      %v1097 = vld [vmem:[%s7 + $0x270] sm:$0xff]
      %v1098 = vld [vmem:[%s7 + $0x278] sm:$0xff]
      %v1099 = vld [vmem:[%s7 + $0x280] sm:$0xff]
      %v1100 = vld [vmem:[%s7 + $0x288] sm:$0xff]
      %v1101 = vld [vmem:[%s7 + $0x290] sm:$0xff]
      %v1102 = vld [vmem:[%s7 + $0x298] sm:$0xff]
      %v1103 = vld [vmem:[%s7 + $0x2a0] sm:$0xff]
      %v1104 = vld [vmem:[%s7 + $0x2a8] sm:$0xff]
      %v1105 = vld [vmem:[%s7 + $0x2b0] sm:$0xff]
      %v1106 = vld [vmem:[%s7 + $0x2b8] sm:$0xff]
      %v1107 = vld [vmem:[%s7 + $0x2c0] sm:$0xff]
      %v1108 = vld [vmem:[%s7 + $0x2c8] sm:$0xff]
      %v1109 = vld [vmem:[%s7 + $0x2d0] sm:$0xff]
      %v1110 = vld [vmem:[%s7 + $0x2d8] sm:$0xff]
      %v1111 = vld [vmem:[%s7 + $0x2e0] sm:$0xff]
      %v1112 = vld [vmem:[%s7 + $0x2e8] sm:$0xff]
      %v1113 = vld [vmem:[%s7 + $0x2f0] sm:$0xff]
      %v1114 = vld [vmem:[%s7 + $0x2f8] sm:$0xff]
      %v1115 = vld [vmem:[%s9] sm:$0x1]
      %v1117 = vlaneseq
      %v1118 = vshrl.u32 %v1117, 7
      %v1119 = vsub.s32 0, %v1118
      %v1120 = vrot.slane %v1115, %v1119
      %1122 = vmatprep.subr.mxu0 0.0
      %1123 = vmatpush1.msra.mxu0 %v1019
      %1124 = vmatprep.subr.mxu0 0.0
      %1125 = vmatpush1.msra.mxu0 %v1020
      %1126 = vmatprep.subr.mxu0 0.0
      %1127 = vmatpush1.msra.mxu0 %v1021
      %1128 = vmatprep.subr.mxu0 0.0
      %1129 = vmatpush1.msra.mxu0 %v1022
      %1130 = vmatprep.subr.mxu0 0.0
      %1131 = vmatpush1.msra.mxu0 %v1023
      %1132 = vmatprep.subr.mxu0 0.0
      %1133 = vmatpush1.msra.mxu0 %v1024
      %1134 = vmatprep.subr.mxu0 0.0
      %1135 = vmatpush1.msra.mxu0 %v1025
      %1136 = vmatprep.subr.mxu0 0.0
      %1137 = vmatpush1.msra.mxu0 %v1026
      %1138 = vmatprep.subr.mxu0 0.0
      %1139 = vmatpush1.msra.mxu0 %v1027
      %1140 = vmatprep.subr.mxu0 0.0
      %1141 = vmatpush1.msra.mxu0 %v1028
      %1142 = vmatprep.subr.mxu0 0.0
      %1143 = vmatpush1.msra.mxu0 %v1029
      %1144 = vmatprep.subr.mxu0 0.0
      %1145 = vmatpush1.msra.mxu0 %v1030
      %1146 = vmatprep.subr.mxu0 0.0
      %1147 = vmatpush1.msra.mxu0 %v1031
      %1148 = vmatprep.subr.mxu0 0.0
      %1149 = vmatpush1.msra.mxu0 %v1032
      %1150 = vmatprep.subr.mxu0 0.0
      %1151 = vmatpush1.msra.mxu0 %v1033
      %1152 = vmatprep.subr.mxu0 0.0
      %1153 = vmatpush1.msra.mxu0 %v1034
      %1154 = vmatprep.subr.mxu0 0.0
      %1155 = vmatpush1.msra.mxu0 %v1035
      %1156 = vmatprep.subr.mxu0 0.0
      %1157 = vmatpush1.msra.mxu0 %v1036
      %1158 = vmatprep.subr.mxu0 0.0
      %1159 = vmatpush1.msra.mxu0 %v1037
      %1160 = vmatprep.subr.mxu0 0.0
      %1161 = vmatpush1.msra.mxu0 %v1038
      %1162 = vmatprep.subr.mxu0 0.0
      %1163 = vmatpush1.msra.mxu0 %v1039
      %1164 = vmatprep.subr.mxu0 0.0
      %1165 = vmatpush1.msra.mxu0 %v1040
      %1166 = vmatprep.subr.mxu0 0.0
      %1167 = vmatpush1.msra.mxu0 %v1041
      %1168 = vmatprep.subr.mxu0 0.0
      %1169 = vmatpush1.msra.mxu0 %v1042
      %1170 = vmatprep.subr.mxu0 0.0
      %1171 = vmatpush1.msra.mxu0 %v1043
      %1172 = vmatprep.subr.mxu0 0.0
      %1173 = vmatpush1.msra.mxu0 %v1044
      %1174 = vmatprep.subr.mxu0 0.0
      %1175 = vmatpush1.msra.mxu0 %v1045
      %1176 = vmatprep.subr.mxu0 0.0
      %1177 = vmatpush1.msra.mxu0 %v1046
      %1178 = vmatprep.subr.mxu0 0.0
      %1179 = vmatpush1.msra.mxu0 %v1047
      %1180 = vmatprep.subr.mxu0 0.0
      %1181 = vmatpush1.msra.mxu0 %v1048
      %1182 = vmatprep.subr.mxu0 0.0
      %1183 = vmatpush1.msra.mxu0 %v1049
      %1184 = vmatprep.subr.mxu0 0.0
      %1185 = vmatpush1.msra.mxu0 %v1050
      %1186 = vmatprep.mubr.f32.mxu0 %v1014
      %1187 = vmatmul.mubr.f32.gmra.mrb[0].mxu0 %v1013
      %v1188 = vpop.f32.mrb[0].mxu0
      %v1189 = vadd.f32 %v1120, %v1188
      %v1190 = vpop.f32.mrb[0].mxu0
      %1191 = vdwg.mxu0
      %1192 = vmatprep.subr.mxu0 0.0
      %1193 = vmatpush1.msra.mxu0 %v1051
      %1194 = vmatprep.subr.mxu0 0.0
      %1195 = vmatpush1.msra.mxu0 %v1052
      %1196 = vmatprep.subr.mxu0 0.0
      %1197 = vmatpush1.msra.mxu0 %v1053
      %1198 = vmatprep.subr.mxu0 0.0
      %1199 = vmatpush1.msra.mxu0 %v1054
      %1200 = vmatprep.subr.mxu0 0.0
      %1201 = vmatpush1.msra.mxu0 %v1055
      %1202 = vmatprep.subr.mxu0 0.0
      %1203 = vmatpush1.msra.mxu0 %v1056
      %1204 = vmatprep.subr.mxu0 0.0
      %1205 = vmatpush1.msra.mxu0 %v1057
      %1206 = vmatprep.subr.mxu0 0.0
      %1207 = vmatpush1.msra.mxu0 %v1058
      %1208 = vmatprep.subr.mxu0 0.0
      %1209 = vmatpush1.msra.mxu0 %v1059
      %1210 = vmatprep.subr.mxu0 0.0
      %1211 = vmatpush1.msra.mxu0 %v1060
      %1212 = vmatprep.subr.mxu0 0.0
      %1213 = vmatpush1.msra.mxu0 %v1061
      %1214 = vmatprep.subr.mxu0 0.0
      %1215 = vmatpush1.msra.mxu0 %v1062
      %1216 = vmatprep.subr.mxu0 0.0
      %1217 = vmatpush1.msra.mxu0 %v1063
      %1218 = vmatprep.subr.mxu0 0.0
      %1219 = vmatpush1.msra.mxu0 %v1064
      %1220 = vmatprep.subr.mxu0 0.0
      %1221 = vmatpush1.msra.mxu0 %v1065
      %1222 = vmatprep.subr.mxu0 0.0
      %1223 = vmatpush1.msra.mxu0 %v1066
      %1224 = vmatprep.subr.mxu0 0.0
      %1225 = vmatpush1.msra.mxu0 %v1067
      %1226 = vmatprep.subr.mxu0 0.0
      %1227 = vmatpush1.msra.mxu0 %v1068
      %1228 = vmatprep.subr.mxu0 0.0
      %1229 = vmatpush1.msra.mxu0 %v1069
      %1230 = vmatprep.subr.mxu0 0.0
      %1231 = vmatpush1.msra.mxu0 %v1070
      %1232 = vmatprep.subr.mxu0 0.0
      %1233 = vmatpush1.msra.mxu0 %v1071
      %1234 = vmatprep.subr.mxu0 0.0
      %1235 = vmatpush1.msra.mxu0 %v1072
      %1236 = vmatprep.subr.mxu0 0.0
      %1237 = vmatpush1.msra.mxu0 %v1073
      %1238 = vmatprep.subr.mxu0 0.0
      %1239 = vmatpush1.msra.mxu0 %v1074
      %1240 = vmatprep.subr.mxu0 0.0
      %1241 = vmatpush1.msra.mxu0 %v1075
      %1242 = vmatprep.subr.mxu0 0.0
      %1243 = vmatpush1.msra.mxu0 %v1076
      %1244 = vmatprep.subr.mxu0 0.0
      %1245 = vmatpush1.msra.mxu0 %v1077
      %1246 = vmatprep.subr.mxu0 0.0
      %1247 = vmatpush1.msra.mxu0 %v1078
      %1248 = vmatprep.subr.mxu0 0.0
      %1249 = vmatpush1.msra.mxu0 %v1079
      %1250 = vmatprep.subr.mxu0 0.0
      %1251 = vmatpush1.msra.mxu0 %v1080
      %1252 = vmatprep.subr.mxu0 0.0
      %1253 = vmatpush1.msra.mxu0 %v1081
      %1254 = vmatprep.subr.mxu0 0.0
      %1255 = vmatpush1.msra.mxu0 %v1082
      %1256 = vmatprep.mubr.f32.mxu0 %v1016
      %1257 = vmatmul.mubr.f32.gmra.mrb[0].mxu0 %v1015
      %v1258 = vpop.f32.mrb[0].mxu0
      %v1259 = vadd.f32 %v1189, %v1258
      %v1260 = vpop.f32.mrb[0].mxu0
      %1261 = vdwg.mxu0
      %1262 = vmatprep.subr.mxu0 0.0
      %1263 = vmatpush1.msra.mxu0 %v1083
      %1264 = vmatprep.subr.mxu0 0.0
      %1265 = vmatpush1.msra.mxu0 %v1084
      %1266 = vmatprep.subr.mxu0 0.0
      %1267 = vmatpush1.msra.mxu0 %v1085
      %1268 = vmatprep.subr.mxu0 0.0
      %1269 = vmatpush1.msra.mxu0 %v1086
      %1270 = vmatprep.subr.mxu0 0.0
      %1271 = vmatpush1.msra.mxu0 %v1087
      %1272 = vmatprep.subr.mxu0 0.0
      %1273 = vmatpush1.msra.mxu0 %v1088
      %1274 = vmatprep.subr.mxu0 0.0
      %1275 = vmatpush1.msra.mxu0 %v1089
      %1276 = vmatprep.subr.mxu0 0.0
      %1277 = vmatpush1.msra.mxu0 %v1090
      %1278 = vmatprep.subr.mxu0 0.0
      %1279 = vmatpush1.msra.mxu0 %v1091
      %1280 = vmatprep.subr.mxu0 0.0
      %1281 = vmatpush1.msra.mxu0 %v1092
      %1282 = vmatprep.subr.mxu0 0.0
      %1283 = vmatpush1.msra.mxu0 %v1093
      %1284 = vmatprep.subr.mxu0 0.0
      %1285 = vmatpush1.msra.mxu0 %v1094
      %1286 = vmatprep.subr.mxu0 0.0
      %1287 = vmatpush1.msra.mxu0 %v1095
      %1288 = vmatprep.subr.mxu0 0.0
      %1289 = vmatpush1.msra.mxu0 %v1096
      %1290 = vmatprep.subr.mxu0 0.0
      %1291 = vmatpush1.msra.mxu0 %v1097
      %1292 = vmatprep.subr.mxu0 0.0
      %1293 = vmatpush1.msra.mxu0 %v1098
      %1294 = vmatprep.subr.mxu0 0.0
      %1295 = vmatpush1.msra.mxu0 %v1099
      %1296 = vmatprep.subr.mxu0 0.0
      %1297 = vmatpush1.msra.mxu0 %v1100
      %1298 = vmatprep.subr.mxu0 0.0
      %1299 = vmatpush1.msra.mxu0 %v1101
      %1300 = vmatprep.subr.mxu0 0.0
      %1301 = vmatpush1.msra.mxu0 %v1102
      %1302 = vmatprep.subr.mxu0 0.0
      %1303 = vmatpush1.msra.mxu0 %v1103
      %1304 = vmatprep.subr.mxu0 0.0
      %1305 = vmatpush1.msra.mxu0 %v1104
      %1306 = vmatprep.subr.mxu0 0.0
      %1307 = vmatpush1.msra.mxu0 %v1105
      %1308 = vmatprep.subr.mxu0 0.0
      %1309 = vmatpush1.msra.mxu0 %v1106
      %1310 = vmatprep.subr.mxu0 0.0
      %1311 = vmatpush1.msra.mxu0 %v1107
      %1312 = vmatprep.subr.mxu0 0.0
      %1313 = vmatpush1.msra.mxu0 %v1108
      %1314 = vmatprep.subr.mxu0 0.0
      %1315 = vmatpush1.msra.mxu0 %v1109
      %1316 = vmatprep.subr.mxu0 0.0
      %1317 = vmatpush1.msra.mxu0 %v1110
      %1318 = vmatprep.subr.mxu0 0.0
      %1319 = vmatpush1.msra.mxu0 %v1111
      %1320 = vmatprep.subr.mxu0 0.0
      %1321 = vmatpush1.msra.mxu0 %v1112
      %1322 = vmatprep.subr.mxu0 0.0
      %1323 = vmatpush1.msra.mxu0 %v1113
      %1324 = vmatprep.subr.mxu0 0.0
      %1325 = vmatpush1.msra.mxu0 %v1114
      %1326 = vmatprep.mubr.f32.mxu0 %v1018
      %1327 = vmatmul.mubr.f32.gmra.mrb[0].mxu0 %v1017
      %v1328 = vpop.f32.mrb[0].mxu0
      %v1329 = vadd.f32 %v1259, %v1328
      %v1330 = vpop.f32.mrb[0].mxu0
      %1331 = vdwg.mxu0
      %v1332 = vlaneseq
      %v1333 = vshrl.u32 %v1332, 7
      %vm1334 = vcmp.eq.s32.totalorder %v1333, 0
      %v1335 = vld [vmem:[%s3] sm:$0x1]
      %v1337 = vlaneseq
      %v1338 = vshrl.u32 %v1337, 7
      %v1339 = vsub.s32 0, %v1338
      %v1340 = vrot.slane %v1335, %v1339
      %v1342 = vsel %vm1334, %v1340, %v1329
      %v1343 = vld [vmem:[%s5] sm:$0x1f]
      %v1344 = vadd.f32 %v1342, %v1343
      %v1345 = vld [vmem:[%s11] sm:$0x1]
      %v1346 = vld [vmem:[%s13] sm:$0x1]
      %vm1347 = vcmask 520192
      %v1348 = vsel %vm1347, %v1344, 0.0
      %1349 = vadd.xlane.f32.xlu0 %v1348
      %v1350 = vpop.xlane.xlu0 %1349
      %v1351 = vrcp.pop 64.0
      %v1352 = vmul.f32 %v1350, %v1351
      %v1353 = vsub.f32 %v1344, %v1352
      %v1354 = vmul.f32 %v1353, %v1353
      %v1355 = vsel %vm1347, %v1354, 0.0
      %1356 = vadd.xlane.f32.xlu0 %v1355
      %v1357 = vpop.xlane.xlu0 %1356
      %v1358 = vmul.f32 %v1357, %v1351
      %v1359 = vadd.f32 %v1358, 1e-06
      %v1360 = vrsqrt.pop %v1359
      %v1361 = vmul.f32 %v1353, %v1360
      %v1363 = vlaneseq
      %v1364 = vshrl.u32 %v1363, 7
      %v1365 = vsub.s32 0, %v1364
      %v1366 = vrot.slane %v1345, %v1365
      %v1368 = vmul.f32 %v1361, %v1366
      %v1370 = vlaneseq
      %v1371 = vshrl.u32 %v1370, 7
      %v1372 = vsub.s32 0, %v1371
      %v1373 = vrot.slane %v1346, %v1372
      %v1375 = vadd.f32 %v1368, %v1373
      %v1376 = vld [vmem:[%s15] sm:$0xff]
      %v1377 = vld [vmem:[%s15 + $0x8] sm:$0xff]
      %v1378 = vld [vmem:[%s15 + $0x10] sm:$0xff]
      %v1379 = vld [vmem:[%s15 + $0x18] sm:$0xff]
      %v1380 = vld [vmem:[%s15 + $0x20] sm:$0xff]
      %v1381 = vld [vmem:[%s15 + $0x28] sm:$0xff]
      %v1382 = vld [vmem:[%s15 + $0x30] sm:$0xff]
      %v1383 = vld [vmem:[%s15 + $0x38] sm:$0xff]
      %v1384 = vld [vmem:[%s15 + $0x40] sm:$0xff]
      %v1385 = vld [vmem:[%s15 + $0x48] sm:$0xff]
      %v1386 = vld [vmem:[%s15 + $0x50] sm:$0xff]
      %v1387 = vld [vmem:[%s15 + $0x58] sm:$0xff]
      %v1388 = vld [vmem:[%s15 + $0x60] sm:$0xff]
      %v1389 = vld [vmem:[%s15 + $0x68] sm:$0xff]
      %v1390 = vld [vmem:[%s15 + $0x70] sm:$0xff]
      %v1391 = vld [vmem:[%s15 + $0x78] sm:$0xff]
      %v1392 = vld [vmem:[%s17] sm:$0x3]
      %v1394 = vlaneseq
      %v1395 = vshrl.u32 %v1394, 7
      %v1396 = vsub.s32 0, %v1395
      %v1397 = vrot.slane %v1392, %v1396
      %v1398 = vlaneseq
      %v1399 = vshrl.u32 %v1398, 7
      %v1400 = vsub.s32 1, %v1399
      %v1401 = vrot.slane %v1392, %v1400
      %vm1404 = vcmask 523264
      %v1406 = vsel %vm1404, %v1375, 0
      %1408 = vmatprep.subr.mxu0 %v1377
      %1409 = vmatpush1.msra.mxu0 %v1376
      %1410 = vmatprep.subr.mxu0 %v1379
      %1411 = vmatpush1.msra.mxu0 %v1378
      %1412 = vmatprep.subr.mxu0 %v1381
      %1413 = vmatpush1.msra.mxu0 %v1380
      %1414 = vmatprep.subr.mxu0 %v1383
      %1415 = vmatpush1.msra.mxu0 %v1382
      %1416 = vmatprep.subr.mxu0 %v1385
      %1417 = vmatpush1.msra.mxu0 %v1384
      %1418 = vmatprep.subr.mxu0 %v1387
      %1419 = vmatpush1.msra.mxu0 %v1386
      %1420 = vmatprep.subr.mxu0 %v1389
      %1421 = vmatpush1.msra.mxu0 %v1388
      %1422 = vmatprep.subr.mxu0 %v1391
      %1423 = vmatpush1.msra.mxu0 %v1390
      %1424 = vmatprep.subr.mxu0 0.0
      %1425 = vmatpush1.msra.mxu0 0.0
      %1426 = vmatprep.subr.mxu0 0.0
      %1427 = vmatpush1.msra.mxu0 0.0
      %1428 = vmatprep.subr.mxu0 0.0
      %1429 = vmatpush1.msra.mxu0 0.0
      %1430 = vmatprep.subr.mxu0 0.0
      %1431 = vmatpush1.msra.mxu0 0.0
      %1432 = vmatprep.subr.mxu0 0.0
      %1433 = vmatpush1.msra.mxu0 0.0
      %1434 = vmatprep.subr.mxu0 0.0
      %1435 = vmatpush1.msra.mxu0 0.0
      %1436 = vmatprep.subr.mxu0 0.0
      %1437 = vmatpush1.msra.mxu0 0.0
      %1438 = vmatprep.subr.mxu0 0.0
      %1439 = vmatpush1.msra.mxu0 0.0
      %1440 = vmatprep.subr.mxu0 0.0
      %1441 = vmatpush1.msra.mxu0 0.0
      %1442 = vmatprep.subr.mxu0 0.0
      %1443 = vmatpush1.msra.mxu0 0.0
      %1444 = vmatprep.subr.mxu0 0.0
      %1445 = vmatpush1.msra.mxu0 0.0
      %1446 = vmatprep.subr.mxu0 0.0
      %1447 = vmatpush1.msra.mxu0 0.0
      %1448 = vmatprep.subr.mxu0 0.0
      %1449 = vmatpush1.msra.mxu0 0.0
      %1450 = vmatprep.subr.mxu0 0.0
      %1451 = vmatpush1.msra.mxu0 0.0
      %1452 = vmatprep.subr.mxu0 0.0
      %1453 = vmatpush1.msra.mxu0 0.0
      %1454 = vmatprep.subr.mxu0 0.0
      %1455 = vmatpush1.msra.mxu0 0.0
      %1456 = vmatprep.subr.mxu0 0.0
      %1457 = vmatpush1.msra.mxu0 0.0
      %1458 = vmatprep.subr.mxu0 0.0
      %1459 = vmatpush1.msra.mxu0 0.0
      %1460 = vmatprep.subr.mxu0 0.0
      %1461 = vmatpush1.msra.mxu0 0.0
      %1462 = vmatprep.subr.mxu0 0.0
      %1463 = vmatpush1.msra.mxu0 0.0
      %1464 = vmatprep.subr.mxu0 0.0
      %1465 = vmatpush1.msra.mxu0 0.0
      %1466 = vmatprep.subr.mxu0 0.0
      %1467 = vmatpush1.msra.mxu0 0.0
      %1468 = vmatprep.subr.mxu0 0.0
      %1469 = vmatpush1.msra.mxu0 0.0
      %1470 = vmatprep.subr.mxu0 0.0
      %1471 = vmatpush1.msra.mxu0 0.0
      %1472 = vmatprep.mubr.f32.mxu0 0.0
      %1473 = vmatmul.mubr.f32.gmra.mrb[0].mxu0 %v1406
      %v1474 = vpop.f32.mrb[0].mxu0
      %v1475 = vadd.f32 %v1397, %v1474
      %v1476 = vpop.f32.mrb[0].mxu0
      %v1477 = vadd.f32 %v1401, %v1476
      %1478 = vdwg.mxu0
      %v1479 = vld [vmem:[%s19] sm:$0xff]
      %v1480 = vld [vmem:[%s19 + $0x8] sm:$0xff]
      %v1481 = vld [vmem:[%s19 + $0x10] sm:$0xff]
      %v1482 = vld [vmem:[%s19 + $0x18] sm:$0xff]
      %v1483 = vld [vmem:[%s19 + $0x20] sm:$0xff]
      %v1484 = vld [vmem:[%s19 + $0x28] sm:$0xff]
      %v1485 = vld [vmem:[%s19 + $0x30] sm:$0xff]
      %v1486 = vld [vmem:[%s19 + $0x38] sm:$0xff]
      %1488 = vrot.lane.b32.xlu0 %v1475, 64
      %v1489 = vpop.permute.xlu0 %1488
      %vm1490 = vcmask 130048
      %v1491 = vsel %vm1490, %v1475, 0
      %v1493 = vsel %vm1490, %v1489, 0
      %1495 = vmatprep.subr.mxu0 0.0
      %1496 = vmatpush1.xpose.msra.mxu0 %v1493
      %1497 = vmatprep.subr.mxu0 0.0
      %1498 = vmatpush1.xpose.msra.mxu0 0.0
      %1499 = vmatprep.subr.mxu0 0.0
      %1500 = vmatpush1.xpose.msra.mxu0 0.0
      %1501 = vmatprep.subr.mxu0 0.0
      %1502 = vmatpush1.xpose.msra.mxu0 0.0
      %1503 = vmatprep.subr.mxu0 0.0
      %1504 = vmatpush1.xpose.msra.mxu0 0.0
      %1505 = vmatprep.subr.mxu0 0.0
      %1506 = vmatpush1.xpose.msra.mxu0 0.0
      %1507 = vmatprep.subr.mxu0 0.0
      %1508 = vmatpush1.xpose.msra.mxu0 0.0
      %1509 = vmatprep.subr.mxu0 0.0
      %1510 = vmatpush1.xpose.msra.mxu0 0.0
      %1511 = vmatprep.subr.mxu0 0.0
      %1512 = vmatpush1.xpose.msra.mxu0 0.0
      %1513 = vmatprep.subr.mxu0 0.0
      %1514 = vmatpush1.xpose.msra.mxu0 0.0
      %1515 = vmatprep.subr.mxu0 0.0
      %1516 = vmatpush1.xpose.msra.mxu0 0.0
      %1517 = vmatprep.subr.mxu0 0.0
      %1518 = vmatpush1.xpose.msra.mxu0 0.0
      %1519 = vmatprep.subr.mxu0 0.0
      %1520 = vmatpush1.xpose.msra.mxu0 0.0
      %1521 = vmatprep.subr.mxu0 0.0
      %1522 = vmatpush1.xpose.msra.mxu0 0.0
      %1523 = vmatprep.subr.mxu0 0.0
      %1524 = vmatpush1.xpose.msra.mxu0 0.0
      %1525 = vmatprep.subr.mxu0 0.0
      %1526 = vmatpush1.xpose.msra.mxu0 0.0
      %1527 = vmatprep.subr.mxu0 0.0
      %1528 = vmatpush1.xpose.msra.mxu0 0.0
      %1529 = vmatprep.subr.mxu0 0.0
      %1530 = vmatpush1.xpose.msra.mxu0 0.0
      %1531 = vmatprep.subr.mxu0 0.0
      %1532 = vmatpush1.xpose.msra.mxu0 0.0
      %1533 = vmatprep.subr.mxu0 0.0
      %1534 = vmatpush1.xpose.msra.mxu0 0.0
      %1535 = vmatprep.subr.mxu0 0.0
      %1536 = vmatpush1.xpose.msra.mxu0 0.0
      %1537 = vmatprep.subr.mxu0 0.0
      %1538 = vmatpush1.xpose.msra.mxu0 0.0
      %1539 = vmatprep.subr.mxu0 0.0
      %1540 = vmatpush1.xpose.msra.mxu0 0.0
      %1541 = vmatprep.subr.mxu0 0.0
      %1542 = vmatpush1.xpose.msra.mxu0 0.0
      %1543 = vmatprep.subr.mxu0 0.0
      %1544 = vmatpush1.xpose.msra.mxu0 0.0
      %1545 = vmatprep.subr.mxu0 0.0
      %1546 = vmatpush1.xpose.msra.mxu0 0.0
      %1547 = vmatprep.subr.mxu0 0.0
      %1548 = vmatpush1.xpose.msra.mxu0 0.0
      %1549 = vmatprep.subr.mxu0 0.0
      %1550 = vmatpush1.xpose.msra.mxu0 0.0
      %1551 = vmatprep.subr.mxu0 0.0
      %1552 = vmatpush1.xpose.msra.mxu0 0.0
      %1553 = vmatprep.subr.mxu0 0.0
      %1554 = vmatpush1.xpose.msra.mxu0 0.0
      %1555 = vmatprep.subr.mxu0 0.0
      %1556 = vmatpush1.xpose.msra.mxu0 0.0
      %1557 = vmatprep.subr.mxu0 0.0
      %1558 = vmatpush1.xpose.msra.mxu0 0.0
      %1559 = vmatprep.mubr.f32.mxu0 0.0
      %1560 = vmatmul.mubr.f32.gmra.mrb[0].mxu0 %v1491
      %v1561 = vpop.f32.mrb[0].mxu0
      %v1562 = vadd.f32 0.0, %v1561
      %v1563 = vpop.f32.mrb[0].mxu0
      %1564 = vdwg.mxu0
      %v1565 = vmul.f32 %v1562, 0.25
      %vm1566 = vcmask 36864
      %v1567 = vsel %vm1566, %v1565, -inf
      %1568 = vmax.xlane.f32.xlu0 %v1567
      %v1569 = vpop.xlane.xlu0 %1568
      %v1570 = vsub.f32 %v1565, %v1569
      %v1571 = vmul.f32 %v1570, 1.442695
      %v1572 = vpow.pop %v1571
      %v1573 = vsel %vm1566, %v1572, 0.0
      %1574 = vadd.xlane.f32.xlu0 %v1573
      %v1575 = vpop.xlane.xlu0 %1574
      %v1576 = vrcp.pop %v1575
      %v1577 = vmul.f32 %v1572, %v1576
      %vm1578 = vcmask 39936
      %v1580 = vsel %vm1578, %v1577, 0
      %vm1582 = vcmask 1044480
      %v1584 = vsel %vm1582, %v1477, 0
      %1586 = vmatprep.subr.mxu0 0.0
      %1587 = vmatpush1.msra.mxu0 %v1584
      %1588 = vmatprep.subr.mxu0 0.0
      %1589 = vmatpush1.msra.mxu0 0.0
      %1590 = vmatprep.subr.mxu0 0.0
      %1591 = vmatpush1.msra.mxu0 0.0
      %1592 = vmatprep.subr.mxu0 0.0
      %1593 = vmatpush1.msra.mxu0 0.0
      %1594 = vmatprep.subr.mxu0 0.0
      %1595 = vmatpush1.msra.mxu0 0.0
      %1596 = vmatprep.subr.mxu0 0.0
      %1597 = vmatpush1.msra.mxu0 0.0
      %1598 = vmatprep.subr.mxu0 0.0
      %1599 = vmatpush1.msra.mxu0 0.0
      %1600 = vmatprep.subr.mxu0 0.0
      %1601 = vmatpush1.msra.mxu0 0.0
      %1602 = vmatprep.subr.mxu0 0.0
      %1603 = vmatpush1.msra.mxu0 0.0
      %1604 = vmatprep.subr.mxu0 0.0
      %1605 = vmatpush1.msra.mxu0 0.0
      %1606 = vmatprep.subr.mxu0 0.0
      %1607 = vmatpush1.msra.mxu0 0.0
      %1608 = vmatprep.subr.mxu0 0.0
      %1609 = vmatpush1.msra.mxu0 0.0
      %1610 = vmatprep.subr.mxu0 0.0
      %1611 = vmatpush1.msra.mxu0 0.0
      %1612 = vmatprep.subr.mxu0 0.0
      %1613 = vmatpush1.msra.mxu0 0.0
      %1614 = vmatprep.subr.mxu0 0.0
      %1615 = vmatpush1.msra.mxu0 0.0
      %1616 = vmatprep.subr.mxu0 0.0
      %1617 = vmatpush1.msra.mxu0 0.0
      %1618 = vmatprep.subr.mxu0 0.0
      %1619 = vmatpush1.msra.mxu0 0.0
      %1620 = vmatprep.subr.mxu0 0.0
      %1621 = vmatpush1.msra.mxu0 0.0
      %1622 = vmatprep.subr.mxu0 0.0
      %1623 = vmatpush1.msra.mxu0 0.0
      %1624 = vmatprep.subr.mxu0 0.0
      %1625 = vmatpush1.msra.mxu0 0.0
      %1626 = vmatprep.subr.mxu0 0.0
      %1627 = vmatpush1.msra.mxu0 0.0
      %1628 = vmatprep.subr.mxu0 0.0
      %1629 = vmatpush1.msra.mxu0 0.0
      %1630 = vmatprep.subr.mxu0 0.0
      %1631 = vmatpush1.msra.mxu0 0.0
      %1632 = vmatprep.subr.mxu0 0.0
      %1633 = vmatpush1.msra.mxu0 0.0
      %1634 = vmatprep.subr.mxu0 0.0
      %1635 = vmatpush1.msra.mxu0 0.0
      %1636 = vmatprep.subr.mxu0 0.0
      %1637 = vmatpush1.msra.mxu0 0.0
      %1638 = vmatprep.subr.mxu0 0.0
      %1639 = vmatpush1.msra.mxu0 0.0
      %1640 = vmatprep.subr.mxu0 0.0
      %1641 = vmatpush1.msra.mxu0 0.0
      %1642 = vmatprep.subr.mxu0 0.0
      %1643 = vmatpush1.msra.mxu0 0.0
      %1644 = vmatprep.subr.mxu0 0.0
      %1645 = vmatpush1.msra.mxu0 0.0
      %1646 = vmatprep.subr.mxu0 0.0
      %1647 = vmatpush1.msra.mxu0 0.0
      %1648 = vmatprep.subr.mxu0 0.0
      %1649 = vmatpush1.msra.mxu0 0.0
      %1650 = vmatprep.mubr.f32.mxu0 0.0
      %1651 = vmatmul.mubr.f32.gmra.mrb[0].mxu0 %v1580
      %v1652 = vpop.f32.mrb[0].mxu0
      %v1653 = vadd.f32 0.0, %v1652
      %v1654 = vpop.f32.mrb[0].mxu0
      %1655 = vdwg.mxu0
      %1656 = vrot.lane.b32.xlu0 %v1475, 112
      %v1657 = vpop.permute.xlu0 %1656
      %1658 = vrot.lane.b32.xlu0 %v1475, 48
      %v1659 = vpop.permute.xlu0 %1658
      %v1660 = vsel %vm1490, %v1657, 0
      %v1662 = vsel %vm1490, %v1659, 0
      %1664 = vmatprep.subr.mxu0 0.0
      %1665 = vmatpush1.xpose.msra.mxu0 %v1662
      %1666 = vmatprep.subr.mxu0 0.0
      %1667 = vmatpush1.xpose.msra.mxu0 0.0
      %1668 = vmatprep.subr.mxu0 0.0
      %1669 = vmatpush1.xpose.msra.mxu0 0.0
      %1670 = vmatprep.subr.mxu0 0.0
      %1671 = vmatpush1.xpose.msra.mxu0 0.0
      %1672 = vmatprep.subr.mxu0 0.0
      %1673 = vmatpush1.xpose.msra.mxu0 0.0
      %1674 = vmatprep.subr.mxu0 0.0
      %1675 = vmatpush1.xpose.msra.mxu0 0.0
      %1676 = vmatprep.subr.mxu0 0.0
      %1677 = vmatpush1.xpose.msra.mxu0 0.0
      %1678 = vmatprep.subr.mxu0 0.0
      %1679 = vmatpush1.xpose.msra.mxu0 0.0
      %1680 = vmatprep.subr.mxu0 0.0
      %1681 = vmatpush1.xpose.msra.mxu0 0.0
      %1682 = vmatprep.subr.mxu0 0.0
      %1683 = vmatpush1.xpose.msra.mxu0 0.0
      %1684 = vmatprep.subr.mxu0 0.0
      %1685 = vmatpush1.xpose.msra.mxu0 0.0
      %1686 = vmatprep.subr.mxu0 0.0
      %1687 = vmatpush1.xpose.msra.mxu0 0.0
      %1688 = vmatprep.subr.mxu0 0.0
      %1689 = vmatpush1.xpose.msra.mxu0 0.0
      %1690 = vmatprep.subr.mxu0 0.0
      %1691 = vmatpush1.xpose.msra.mxu0 0.0
      %1692 = vmatprep.subr.mxu0 0.0
      %1693 = vmatpush1.xpose.msra.mxu0 0.0
      %1694 = vmatprep.subr.mxu0 0.0
      %1695 = vmatpush1.xpose.msra.mxu0 0.0
      %1696 = vmatprep.subr.mxu0 0.0
      %1697 = vmatpush1.xpose.msra.mxu0 0.0
      %1698 = vmatprep.subr.mxu0 0.0
      %1699 = vmatpush1.xpose.msra.mxu0 0.0
      %1700 = vmatprep.subr.mxu0 0.0
      %1701 = vmatpush1.xpose.msra.mxu0 0.0
      %1702 = vmatprep.subr.mxu0 0.0
      %1703 = vmatpush1.xpose.msra.mxu0 0.0
      %1704 = vmatprep.subr.mxu0 0.0
      %1705 = vmatpush1.xpose.msra.mxu0 0.0
      %1706 = vmatprep.subr.mxu0 0.0
      %1707 = vmatpush1.xpose.msra.mxu0 0.0
      %1708 = vmatprep.subr.mxu0 0.0
      %1709 = vmatpush1.xpose.msra.mxu0 0.0
      %1710 = vmatprep.subr.mxu0 0.0
      %1711 = vmatpush1.xpose.msra.mxu0 0.0
      %1712 = vmatprep.subr.mxu0 0.0
      %1713 = vmatpush1.xpose.msra.mxu0 0.0
      %1714 = vmatprep.subr.mxu0 0.0
      %1715 = vmatpush1.xpose.msra.mxu0 0.0
      %1716 = vmatprep.subr.mxu0 0.0
      %1717 = vmatpush1.xpose.msra.mxu0 0.0
      %1718 = vmatprep.subr.mxu0 0.0
      %1719 = vmatpush1.xpose.msra.mxu0 0.0
      %1720 = vmatprep.subr.mxu0 0.0
      %1721 = vmatpush1.xpose.msra.mxu0 0.0
      %1722 = vmatprep.subr.mxu0 0.0
      %1723 = vmatpush1.xpose.msra.mxu0 0.0
      %1724 = vmatprep.subr.mxu0 0.0
      %1725 = vmatpush1.xpose.msra.mxu0 0.0
      %1726 = vmatprep.subr.mxu0 0.0
      %1727 = vmatpush1.xpose.msra.mxu0 0.0
      %1728 = vmatprep.mubr.f32.mxu0 0.0
      %1729 = vmatmul.mubr.f32.gmra.mrb[0].mxu0 %v1660
      %v1730 = vpop.f32.mrb[0].mxu0
      %v1731 = vadd.f32 0.0, %v1730
      %v1732 = vpop.f32.mrb[0].mxu0
      %1733 = vdwg.mxu0
      %v1734 = vmul.f32 %v1731, 0.25
      %v1735 = vsel %vm1566, %v1734, -inf
      %1736 = vmax.xlane.f32.xlu0 %v1735
      %v1737 = vpop.xlane.xlu0 %1736
      %v1738 = vsub.f32 %v1734, %v1737
      %v1739 = vmul.f32 %v1738, 1.442695
      %v1740 = vpow.pop %v1739
      %v1741 = vsel %vm1566, %v1740, 0.0
      %1742 = vadd.xlane.f32.xlu0 %v1741
      %v1743 = vpop.xlane.xlu0 %1742
      %v1744 = vrcp.pop %v1743
      %v1745 = vmul.f32 %v1740, %v1744
      %1746 = vrot.lane.b32.xlu0 %v1477, 112
      %v1747 = vpop.permute.xlu0 %1746
      %v1749 = vsel %vm1578, %v1745, 0
      %v1751 = vsel %vm1582, %v1747, 0
      %1753 = vmatprep.subr.mxu0 0.0
      %1754 = vmatpush1.msra.mxu0 %v1751
      %1755 = vmatprep.subr.mxu0 0.0
      %1756 = vmatpush1.msra.mxu0 0.0
      %1757 = vmatprep.subr.mxu0 0.0
      %1758 = vmatpush1.msra.mxu0 0.0
      %1759 = vmatprep.subr.mxu0 0.0
      %1760 = vmatpush1.msra.mxu0 0.0
      %1761 = vmatprep.subr.mxu0 0.0
      %1762 = vmatpush1.msra.mxu0 0.0
      %1763 = vmatprep.subr.mxu0 0.0
      %1764 = vmatpush1.msra.mxu0 0.0
      %1765 = vmatprep.subr.mxu0 0.0
      %1766 = vmatpush1.msra.mxu0 0.0
      %1767 = vmatprep.subr.mxu0 0.0
      %1768 = vmatpush1.msra.mxu0 0.0
      %1769 = vmatprep.subr.mxu0 0.0
      %1770 = vmatpush1.msra.mxu0 0.0
      %1771 = vmatprep.subr.mxu0 0.0
      %1772 = vmatpush1.msra.mxu0 0.0
      %1773 = vmatprep.subr.mxu0 0.0
      %1774 = vmatpush1.msra.mxu0 0.0
      %1775 = vmatprep.subr.mxu0 0.0
      %1776 = vmatpush1.msra.mxu0 0.0
      %1777 = vmatprep.subr.mxu0 0.0
      %1778 = vmatpush1.msra.mxu0 0.0
      %1779 = vmatprep.subr.mxu0 0.0
      %1780 = vmatpush1.msra.mxu0 0.0
      %1781 = vmatprep.subr.mxu0 0.0
      %1782 = vmatpush1.msra.mxu0 0.0
      %1783 = vmatprep.subr.mxu0 0.0
      %1784 = vmatpush1.msra.mxu0 0.0
      %1785 = vmatprep.subr.mxu0 0.0
      %1786 = vmatpush1.msra.mxu0 0.0
      %1787 = vmatprep.subr.mxu0 0.0
      %1788 = vmatpush1.msra.mxu0 0.0
      %1789 = vmatprep.subr.mxu0 0.0
      %1790 = vmatpush1.msra.mxu0 0.0
      %1791 = vmatprep.subr.mxu0 0.0
      %1792 = vmatpush1.msra.mxu0 0.0
      %1793 = vmatprep.subr.mxu0 0.0
      %1794 = vmatpush1.msra.mxu0 0.0
      %1795 = vmatprep.subr.mxu0 0.0
      %1796 = vmatpush1.msra.mxu0 0.0
      %1797 = vmatprep.subr.mxu0 0.0
      %1798 = vmatpush1.msra.mxu0 0.0
      %1799 = vmatprep.subr.mxu0 0.0
      %1800 = vmatpush1.msra.mxu0 0.0
      %1801 = vmatprep.subr.mxu0 0.0
      %1802 = vmatpush1.msra.mxu0 0.0
      %1803 = vmatprep.subr.mxu0 0.0
      %1804 = vmatpush1.msra.mxu0 0.0
      %1805 = vmatprep.subr.mxu0 0.0
      %1806 = vmatpush1.msra.mxu0 0.0
      %1807 = vmatprep.subr.mxu0 0.0
      %1808 = vmatpush1.msra.mxu0 0.0
      %1809 = vmatprep.subr.mxu0 0.0
      %1810 = vmatpush1.msra.mxu0 0.0
      %1811 = vmatprep.subr.mxu0 0.0
      %1812 = vmatpush1.msra.mxu0 0.0
      %1813 = vmatprep.subr.mxu0 0.0
      %1814 = vmatpush1.msra.mxu0 0.0
      %1815 = vmatprep.subr.mxu0 0.0
      %1816 = vmatpush1.msra.mxu0 0.0
      %1817 = vmatprep.mubr.f32.mxu0 0.0
      %1818 = vmatmul.mubr.f32.gmra.mrb[0].mxu0 %v1749
      %v1819 = vpop.f32.mrb[0].mxu0
      %v1820 = vadd.f32 0.0, %v1819
      %v1821 = vpop.f32.mrb[0].mxu0
      %1822 = vdwg.mxu0
      %v1824 = vsel %vm1490, %v1820, 0
      %1826 = vmatprep.subr.mxu0 0.0
      %1827 = vmatpush1.msra.mxu0 %v1481
      %1828 = vmatprep.subr.mxu0 0.0
      %1829 = vmatpush1.msra.mxu0 %v1482
      %1830 = vmatprep.subr.mxu0 0.0
      %1831 = vmatpush1.msra.mxu0 0.0
      %1832 = vmatprep.subr.mxu0 0.0
      %1833 = vmatpush1.msra.mxu0 0.0
      %1834 = vmatprep.subr.mxu0 0.0
      %1835 = vmatpush1.msra.mxu0 0.0
      %1836 = vmatprep.subr.mxu0 0.0
      %1837 = vmatpush1.msra.mxu0 0.0
      %1838 = vmatprep.subr.mxu0 0.0
      %1839 = vmatpush1.msra.mxu0 0.0
      %1840 = vmatprep.subr.mxu0 0.0
      %1841 = vmatpush1.msra.mxu0 0.0
      %1842 = vmatprep.subr.mxu0 0.0
      %1843 = vmatpush1.msra.mxu0 0.0
      %1844 = vmatprep.subr.mxu0 0.0
      %1845 = vmatpush1.msra.mxu0 0.0
      %1846 = vmatprep.subr.mxu0 0.0
      %1847 = vmatpush1.msra.mxu0 0.0
      %1848 = vmatprep.subr.mxu0 0.0
      %1849 = vmatpush1.msra.mxu0 0.0
      %1850 = vmatprep.subr.mxu0 0.0
      %1851 = vmatpush1.msra.mxu0 0.0
      %1852 = vmatprep.subr.mxu0 0.0
      %1853 = vmatpush1.msra.mxu0 0.0
      %1854 = vmatprep.subr.mxu0 0.0
      %1855 = vmatpush1.msra.mxu0 0.0
      %1856 = vmatprep.subr.mxu0 0.0
      %1857 = vmatpush1.msra.mxu0 0.0
      %1858 = vmatprep.subr.mxu0 0.0
      %1859 = vmatpush1.msra.mxu0 0.0
      %1860 = vmatprep.subr.mxu0 0.0
      %1861 = vmatpush1.msra.mxu0 0.0
      %1862 = vmatprep.subr.mxu0 0.0
      %1863 = vmatpush1.msra.mxu0 0.0
      %1864 = vmatprep.subr.mxu0 0.0
      %1865 = vmatpush1.msra.mxu0 0.0
      %1866 = vmatprep.subr.mxu0 0.0
      %1867 = vmatpush1.msra.mxu0 0.0
      %1868 = vmatprep.subr.mxu0 0.0
      %1869 = vmatpush1.msra.mxu0 0.0
      %1870 = vmatprep.subr.mxu0 0.0
      %1871 = vmatpush1.msra.mxu0 0.0
      %1872 = vmatprep.subr.mxu0 0.0
      %1873 = vmatpush1.msra.mxu0 0.0
      %1874 = vmatprep.subr.mxu0 0.0
      %1875 = vmatpush1.msra.mxu0 0.0
      %1876 = vmatprep.subr.mxu0 0.0
      %1877 = vmatpush1.msra.mxu0 0.0
      %1878 = vmatprep.subr.mxu0 0.0
      %1879 = vmatpush1.msra.mxu0 0.0
      %1880 = vmatprep.subr.mxu0 0.0
      %1881 = vmatpush1.msra.mxu0 0.0
      %1882 = vmatprep.subr.mxu0 0.0
      %1883 = vmatpush1.msra.mxu0 0.0
      %1884 = vmatprep.subr.mxu0 0.0
      %1885 = vmatpush1.msra.mxu0 0.0
      %1886 = vmatprep.subr.mxu0 0.0
      %1887 = vmatpush1.msra.mxu0 0.0
      %1888 = vmatprep.subr.mxu0 0.0
      %1889 = vmatpush1.msra.mxu0 0.0
      %1890 = vmatprep.mubr.f32.mxu0 0.0
      %1891 = vmatmul.mubr.f32.gmra.mrb[0].mxu0 %v1824
      %v1892 = vpop.f32.mrb[0].mxu0
      %v1893 = vadd.f32 0.0, %v1892
      %v1894 = vpop.f32.mrb[0].mxu0
      %1895 = vdwg.mxu0
      %v1897 = vsel %vm1490, %v1653, 0
      %1899 = vmatprep.subr.mxu0 0.0
      %1900 = vmatpush1.msra.mxu0 %v1479
      %1901 = vmatprep.subr.mxu0 0.0
      %1902 = vmatpush1.msra.mxu0 %v1480
      %1903 = vmatprep.subr.mxu0 0.0
      %1904 = vmatpush1.msra.mxu0 0.0
      %1905 = vmatprep.subr.mxu0 0.0
      %1906 = vmatpush1.msra.mxu0 0.0
      %1907 = vmatprep.subr.mxu0 0.0
      %1908 = vmatpush1.msra.mxu0 0.0
      %1909 = vmatprep.subr.mxu0 0.0
      %1910 = vmatpush1.msra.mxu0 0.0
      %1911 = vmatprep.subr.mxu0 0.0
      %1912 = vmatpush1.msra.mxu0 0.0
      %1913 = vmatprep.subr.mxu0 0.0
      %1914 = vmatpush1.msra.mxu0 0.0
      %1915 = vmatprep.subr.mxu0 0.0
      %1916 = vmatpush1.msra.mxu0 0.0
      %1917 = vmatprep.subr.mxu0 0.0
      %1918 = vmatpush1.msra.mxu0 0.0
      %1919 = vmatprep.subr.mxu0 0.0
      %1920 = vmatpush1.msra.mxu0 0.0
      %1921 = vmatprep.subr.mxu0 0.0
      %1922 = vmatpush1.msra.mxu0 0.0
      %1923 = vmatprep.subr.mxu0 0.0
      %1924 = vmatpush1.msra.mxu0 0.0
      %1925 = vmatprep.subr.mxu0 0.0
      %1926 = vmatpush1.msra.mxu0 0.0
      %1927 = vmatprep.subr.mxu0 0.0
      %1928 = vmatpush1.msra.mxu0 0.0
      %1929 = vmatprep.subr.mxu0 0.0
      %1930 = vmatpush1.msra.mxu0 0.0
      %1931 = vmatprep.subr.mxu0 0.0
      %1932 = vmatpush1.msra.mxu0 0.0
      %1933 = vmatprep.subr.mxu0 0.0
      %1934 = vmatpush1.msra.mxu0 0.0
      %1935 = vmatprep.subr.mxu0 0.0
      %1936 = vmatpush1.msra.mxu0 0.0
      %1937 = vmatprep.subr.mxu0 0.0
      %1938 = vmatpush1.msra.mxu0 0.0
      %1939 = vmatprep.subr.mxu0 0.0
      %1940 = vmatpush1.msra.mxu0 0.0
      %1941 = vmatprep.subr.mxu0 0.0
      %1942 = vmatpush1.msra.mxu0 0.0
      %1943 = vmatprep.subr.mxu0 0.0
      %1944 = vmatpush1.msra.mxu0 0.0
      %1945 = vmatprep.subr.mxu0 0.0
      %1946 = vmatpush1.msra.mxu0 0.0
      %1947 = vmatprep.subr.mxu0 0.0
      %1948 = vmatpush1.msra.mxu0 0.0
      %1949 = vmatprep.subr.mxu0 0.0
      %1950 = vmatpush1.msra.mxu0 0.0
      %1951 = vmatprep.subr.mxu0 0.0
      %1952 = vmatpush1.msra.mxu0 0.0
      %1953 = vmatprep.subr.mxu0 0.0
      %1954 = vmatpush1.msra.mxu0 0.0
      %1955 = vmatprep.subr.mxu0 0.0
      %1956 = vmatpush1.msra.mxu0 0.0
      %1957 = vmatprep.subr.mxu0 0.0
      %1958 = vmatpush1.msra.mxu0 0.0
      %1959 = vmatprep.subr.mxu0 0.0
      %1960 = vmatpush1.msra.mxu0 0.0
      %1961 = vmatprep.subr.mxu0 0.0
      %1962 = vmatpush1.msra.mxu0 0.0
      %1963 = vmatprep.mubr.f32.mxu0 0.0
      %1964 = vmatmul.mubr.f32.gmra.mrb[0].mxu0 %v1897
      %v1965 = vpop.f32.mrb[0].mxu0
      %v1966 = vadd.f32 %v1893, %v1965
      %v1967 = vpop.f32.mrb[0].mxu0
      %1968 = vdwg.mxu0
      %1969 = vrot.lane.b32.xlu0 %v1475, 96
      %v1970 = vpop.permute.xlu0 %1969
      %1971 = vrot.lane.b32.xlu0 %v1475, 32
      %v1972 = vpop.permute.xlu0 %1971
      %v1973 = vsel %vm1490, %v1970, 0
      %v1975 = vsel %vm1490, %v1972, 0
      %1977 = vmatprep.subr.mxu0 0.0
      %1978 = vmatpush1.xpose.msra.mxu0 %v1975
      %1979 = vmatprep.subr.mxu0 0.0
      %1980 = vmatpush1.xpose.msra.mxu0 0.0
      %1981 = vmatprep.subr.mxu0 0.0
      %1982 = vmatpush1.xpose.msra.mxu0 0.0
      %1983 = vmatprep.subr.mxu0 0.0
      %1984 = vmatpush1.xpose.msra.mxu0 0.0
      %1985 = vmatprep.subr.mxu0 0.0
      %1986 = vmatpush1.xpose.msra.mxu0 0.0
      %1987 = vmatprep.subr.mxu0 0.0
      %1988 = vmatpush1.xpose.msra.mxu0 0.0
      %1989 = vmatprep.subr.mxu0 0.0
      %1990 = vmatpush1.xpose.msra.mxu0 0.0
      %1991 = vmatprep.subr.mxu0 0.0
      %1992 = vmatpush1.xpose.msra.mxu0 0.0
      %1993 = vmatprep.subr.mxu0 0.0
      %1994 = vmatpush1.xpose.msra.mxu0 0.0
      %1995 = vmatprep.subr.mxu0 0.0
      %1996 = vmatpush1.xpose.msra.mxu0 0.0
      %1997 = vmatprep.subr.mxu0 0.0
      %1998 = vmatpush1.xpose.msra.mxu0 0.0
      %1999 = vmatprep.subr.mxu0 0.0
      %2000 = vmatpush1.xpose.msra.mxu0 0.0
      %2001 = vmatprep.subr.mxu0 0.0
      %2002 = vmatpush1.xpose.msra.mxu0 0.0
      %2003 = vmatprep.subr.mxu0 0.0
      %2004 = vmatpush1.xpose.msra.mxu0 0.0
      %2005 = vmatprep.subr.mxu0 0.0
      %2006 = vmatpush1.xpose.msra.mxu0 0.0
      %2007 = vmatprep.subr.mxu0 0.0
      %2008 = vmatpush1.xpose.msra.mxu0 0.0
      %2009 = vmatprep.subr.mxu0 0.0
      %2010 = vmatpush1.xpose.msra.mxu0 0.0
      %2011 = vmatprep.subr.mxu0 0.0
      %2012 = vmatpush1.xpose.msra.mxu0 0.0
      %2013 = vmatprep.subr.mxu0 0.0
      %2014 = vmatpush1.xpose.msra.mxu0 0.0
      %2015 = vmatprep.subr.mxu0 0.0
      %2016 = vmatpush1.xpose.msra.mxu0 0.0
      %2017 = vmatprep.subr.mxu0 0.0
      %2018 = vmatpush1.xpose.msra.mxu0 0.0
      %2019 = vmatprep.subr.mxu0 0.0
      %2020 = vmatpush1.xpose.msra.mxu0 0.0
      %2021 = vmatprep.subr.mxu0 0.0
      %2022 = vmatpush1.xpose.msra.mxu0 0.0
      %2023 = vmatprep.subr.mxu0 0.0
      %2024 = vmatpush1.xpose.msra.mxu0 0.0
      %2025 = vmatprep.subr.mxu0 0.0
      %2026 = vmatpush1.xpose.msra.mxu0 0.0
      %2027 = vmatprep.subr.mxu0 0.0
      %2028 = vmatpush1.xpose.msra.mxu0 0.0
      %2029 = vmatprep.subr.mxu0 0.0
      %2030 = vmatpush1.xpose.msra.mxu0 0.0
      %2031 = vmatprep.subr.mxu0 0.0
      %2032 = vmatpush1.xpose.msra.mxu0 0.0
      %2033 = vmatprep.subr.mxu0 0.0
      %2034 = vmatpush1.xpose.msra.mxu0 0.0
      %2035 = vmatprep.subr.mxu0 0.0
      %2036 = vmatpush1.xpose.msra.mxu0 0.0
      %2037 = vmatprep.subr.mxu0 0.0
      %2038 = vmatpush1.xpose.msra.mxu0 0.0
      %2039 = vmatprep.subr.mxu0 0.0
      %2040 = vmatpush1.xpose.msra.mxu0 0.0
      %2041 = vmatprep.mubr.f32.mxu0 0.0
      %2042 = vmatmul.mubr.f32.gmra.mrb[0].mxu0 %v1973
      %v2043 = vpop.f32.mrb[0].mxu0
      %v2044 = vadd.f32 0.0, %v2043
      %v2045 = vpop.f32.mrb[0].mxu0
      %2046 = vdwg.mxu0
      %v2047 = vmul.f32 %v2044, 0.25
      %v2048 = vsel %vm1566, %v2047, -inf
      %2049 = vmax.xlane.f32.xlu0 %v2048
      %v2050 = vpop.xlane.xlu0 %2049
      %v2051 = vsub.f32 %v2047, %v2050
      %v2052 = vmul.f32 %v2051, 1.442695
      %v2053 = vpow.pop %v2052
      %v2054 = vsel %vm1566, %v2053, 0.0
      %2055 = vadd.xlane.f32.xlu0 %v2054
      %v2056 = vpop.xlane.xlu0 %2055
      %v2057 = vrcp.pop %v2056
      %v2058 = vmul.f32 %v2053, %v2057
      %2059 = vrot.lane.b32.xlu0 %v1477, 96
      %v2060 = vpop.permute.xlu0 %2059
      %v2062 = vsel %vm1578, %v2058, 0
      %v2064 = vsel %vm1582, %v2060, 0
      %2066 = vmatprep.subr.mxu0 0.0
      %2067 = vmatpush1.msra.mxu0 %v2064
      %2068 = vmatprep.subr.mxu0 0.0
      %2069 = vmatpush1.msra.mxu0 0.0
      %2070 = vmatprep.subr.mxu0 0.0
      %2071 = vmatpush1.msra.mxu0 0.0
      %2072 = vmatprep.subr.mxu0 0.0
      %2073 = vmatpush1.msra.mxu0 0.0
      %2074 = vmatprep.subr.mxu0 0.0
      %2075 = vmatpush1.msra.mxu0 0.0
      %2076 = vmatprep.subr.mxu0 0.0
      %2077 = vmatpush1.msra.mxu0 0.0
      %2078 = vmatprep.subr.mxu0 0.0
      %2079 = vmatpush1.msra.mxu0 0.0
      %2080 = vmatprep.subr.mxu0 0.0
      %2081 = vmatpush1.msra.mxu0 0.0
      %2082 = vmatprep.subr.mxu0 0.0
      %2083 = vmatpush1.msra.mxu0 0.0
      %2084 = vmatprep.subr.mxu0 0.0
      %2085 = vmatpush1.msra.mxu0 0.0
      %2086 = vmatprep.subr.mxu0 0.0
      %2087 = vmatpush1.msra.mxu0 0.0
      %2088 = vmatprep.subr.mxu0 0.0
      %2089 = vmatpush1.msra.mxu0 0.0
      %2090 = vmatprep.subr.mxu0 0.0
      %2091 = vmatpush1.msra.mxu0 0.0
      %2092 = vmatprep.subr.mxu0 0.0
      %2093 = vmatpush1.msra.mxu0 0.0
      %2094 = vmatprep.subr.mxu0 0.0
      %2095 = vmatpush1.msra.mxu0 0.0
      %2096 = vmatprep.subr.mxu0 0.0
      %2097 = vmatpush1.msra.mxu0 0.0
      %2098 = vmatprep.subr.mxu0 0.0
      %2099 = vmatpush1.msra.mxu0 0.0
      %2100 = vmatprep.subr.mxu0 0.0
      %2101 = vmatpush1.msra.mxu0 0.0
      %2102 = vmatprep.subr.mxu0 0.0
      %2103 = vmatpush1.msra.mxu0 0.0
      %2104 = vmatprep.subr.mxu0 0.0
      %2105 = vmatpush1.msra.mxu0 0.0
      %2106 = vmatprep.subr.mxu0 0.0
      %2107 = vmatpush1.msra.mxu0 0.0
      %2108 = vmatprep.subr.mxu0 0.0
      %2109 = vmatpush1.msra.mxu0 0.0
      %2110 = vmatprep.subr.mxu0 0.0
      %2111 = vmatpush1.msra.mxu0 0.0
      %2112 = vmatprep.subr.mxu0 0.0
      %2113 = vmatpush1.msra.mxu0 0.0
      %2114 = vmatprep.subr.mxu0 0.0
      %2115 = vmatpush1.msra.mxu0 0.0
      %2116 = vmatprep.subr.mxu0 0.0
      %2117 = vmatpush1.msra.mxu0 0.0
      %2118 = vmatprep.subr.mxu0 0.0
      %2119 = vmatpush1.msra.mxu0 0.0
      %2120 = vmatprep.subr.mxu0 0.0
      %2121 = vmatpush1.msra.mxu0 0.0
      %2122 = vmatprep.subr.mxu0 0.0
      %2123 = vmatpush1.msra.mxu0 0.0
      %2124 = vmatprep.subr.mxu0 0.0
      %2125 = vmatpush1.msra.mxu0 0.0
      %2126 = vmatprep.subr.mxu0 0.0
      %2127 = vmatpush1.msra.mxu0 0.0
      %2128 = vmatprep.subr.mxu0 0.0
      %2129 = vmatpush1.msra.mxu0 0.0
      %2130 = vmatprep.mubr.f32.mxu0 0.0
      %2131 = vmatmul.mubr.f32.gmra.mrb[0].mxu0 %v2062
      %v2132 = vpop.f32.mrb[0].mxu0
      %v2133 = vadd.f32 0.0, %v2132
      %v2134 = vpop.f32.mrb[0].mxu0
      %2135 = vdwg.mxu0
      %v2137 = vsel %vm1490, %v2133, 0
      %2139 = vmatprep.subr.mxu0 0.0
      %2140 = vmatpush1.msra.mxu0 %v1483
      %2141 = vmatprep.subr.mxu0 0.0
      %2142 = vmatpush1.msra.mxu0 %v1484
      %2143 = vmatprep.subr.mxu0 0.0
      %2144 = vmatpush1.msra.mxu0 0.0
      %2145 = vmatprep.subr.mxu0 0.0
      %2146 = vmatpush1.msra.mxu0 0.0
      %2147 = vmatprep.subr.mxu0 0.0
      %2148 = vmatpush1.msra.mxu0 0.0
      %2149 = vmatprep.subr.mxu0 0.0
      %2150 = vmatpush1.msra.mxu0 0.0
      %2151 = vmatprep.subr.mxu0 0.0
      %2152 = vmatpush1.msra.mxu0 0.0
      %2153 = vmatprep.subr.mxu0 0.0
      %2154 = vmatpush1.msra.mxu0 0.0
      %2155 = vmatprep.subr.mxu0 0.0
      %2156 = vmatpush1.msra.mxu0 0.0
      %2157 = vmatprep.subr.mxu0 0.0
      %2158 = vmatpush1.msra.mxu0 0.0
      %2159 = vmatprep.subr.mxu0 0.0
      %2160 = vmatpush1.msra.mxu0 0.0
      %2161 = vmatprep.subr.mxu0 0.0
      %2162 = vmatpush1.msra.mxu0 0.0
      %2163 = vmatprep.subr.mxu0 0.0
      %2164 = vmatpush1.msra.mxu0 0.0
      %2165 = vmatprep.subr.mxu0 0.0
      %2166 = vmatpush1.msra.mxu0 0.0
      %2167 = vmatprep.subr.mxu0 0.0
      %2168 = vmatpush1.msra.mxu0 0.0
      %2169 = vmatprep.subr.mxu0 0.0
      %2170 = vmatpush1.msra.mxu0 0.0
      %2171 = vmatprep.subr.mxu0 0.0
      %2172 = vmatpush1.msra.mxu0 0.0
      %2173 = vmatprep.subr.mxu0 0.0
      %2174 = vmatpush1.msra.mxu0 0.0
      %2175 = vmatprep.subr.mxu0 0.0
      %2176 = vmatpush1.msra.mxu0 0.0
      %2177 = vmatprep.subr.mxu0 0.0
      %2178 = vmatpush1.msra.mxu0 0.0
      %2179 = vmatprep.subr.mxu0 0.0
      %2180 = vmatpush1.msra.mxu0 0.0
      %2181 = vmatprep.subr.mxu0 0.0
      %2182 = vmatpush1.msra.mxu0 0.0
      %2183 = vmatprep.subr.mxu0 0.0
      %2184 = vmatpush1.msra.mxu0 0.0
      %2185 = vmatprep.subr.mxu0 0.0
      %2186 = vmatpush1.msra.mxu0 0.0
      %2187 = vmatprep.subr.mxu0 0.0
      %2188 = vmatpush1.msra.mxu0 0.0
      %2189 = vmatprep.subr.mxu0 0.0
      %2190 = vmatpush1.msra.mxu0 0.0
      %2191 = vmatprep.subr.mxu0 0.0
      %2192 = vmatpush1.msra.mxu0 0.0
      %2193 = vmatprep.subr.mxu0 0.0
      %2194 = vmatpush1.msra.mxu0 0.0
      %2195 = vmatprep.subr.mxu0 0.0
      %2196 = vmatpush1.msra.mxu0 0.0
      %2197 = vmatprep.subr.mxu0 0.0
      %2198 = vmatpush1.msra.mxu0 0.0
      %2199 = vmatprep.subr.mxu0 0.0
      %2200 = vmatpush1.msra.mxu0 0.0
      %2201 = vmatprep.subr.mxu0 0.0
      %2202 = vmatpush1.msra.mxu0 0.0
      %2203 = vmatprep.mubr.f32.mxu0 0.0
      %2204 = vmatmul.mubr.f32.gmra.mrb[0].mxu0 %v2137
      %v2205 = vpop.f32.mrb[0].mxu0
      %v2206 = vadd.f32 0.0, %v2205
      %v2207 = vpop.f32.mrb[0].mxu0
      %2208 = vdwg.mxu0
      %v2209 = vadd.f32 %v1966, %v2206
      %2210 = vrot.lane.b32.xlu0 %v1475, 80
      %v2211 = vpop.permute.xlu0 %2210
      %2212 = vrot.lane.b32.xlu0 %v1475, 16
      %v2213 = vpop.permute.xlu0 %2212
      %v2214 = vsel %vm1490, %v2211, 0
      %v2216 = vsel %vm1490, %v2213, 0
      %2218 = vmatprep.subr.mxu0 0.0
      %2219 = vmatpush1.xpose.msra.mxu0 %v2216
      %2220 = vmatprep.subr.mxu0 0.0
      %2221 = vmatpush1.xpose.msra.mxu0 0.0
      %2222 = vmatprep.subr.mxu0 0.0
      %2223 = vmatpush1.xpose.msra.mxu0 0.0
      %2224 = vmatprep.subr.mxu0 0.0
      %2225 = vmatpush1.xpose.msra.mxu0 0.0
      %2226 = vmatprep.subr.mxu0 0.0
      %2227 = vmatpush1.xpose.msra.mxu0 0.0
      %2228 = vmatprep.subr.mxu0 0.0
      %2229 = vmatpush1.xpose.msra.mxu0 0.0
      %2230 = vmatprep.subr.mxu0 0.0
      %2231 = vmatpush1.xpose.msra.mxu0 0.0
      %2232 = vmatprep.subr.mxu0 0.0
      %2233 = vmatpush1.xpose.msra.mxu0 0.0
      %2234 = vmatprep.subr.mxu0 0.0
      %2235 = vmatpush1.xpose.msra.mxu0 0.0
      %2236 = vmatprep.subr.mxu0 0.0
      %2237 = vmatpush1.xpose.msra.mxu0 0.0
      %2238 = vmatprep.subr.mxu0 0.0
      %2239 = vmatpush1.xpose.msra.mxu0 0.0
      %2240 = vmatprep.subr.mxu0 0.0
      %2241 = vmatpush1.xpose.msra.mxu0 0.0
      %2242 = vmatprep.subr.mxu0 0.0
      %2243 = vmatpush1.xpose.msra.mxu0 0.0
      %2244 = vmatprep.subr.mxu0 0.0
      %2245 = vmatpush1.xpose.msra.mxu0 0.0
      %2246 = vmatprep.subr.mxu0 0.0
      %2247 = vmatpush1.xpose.msra.mxu0 0.0
      %2248 = vmatprep.subr.mxu0 0.0
      %2249 = vmatpush1.xpose.msra.mxu0 0.0
      %2250 = vmatprep.subr.mxu0 0.0
      %2251 = vmatpush1.xpose.msra.mxu0 0.0
      %2252 = vmatprep.subr.mxu0 0.0
      %2253 = vmatpush1.xpose.msra.mxu0 0.0
      %2254 = vmatprep.subr.mxu0 0.0
      %2255 = vmatpush1.xpose.msra.mxu0 0.0
      %2256 = vmatprep.subr.mxu0 0.0
      %2257 = vmatpush1.xpose.msra.mxu0 0.0
      %2258 = vmatprep.subr.mxu0 0.0
      %2259 = vmatpush1.xpose.msra.mxu0 0.0
      %2260 = vmatprep.subr.mxu0 0.0
      %2261 = vmatpush1.xpose.msra.mxu0 0.0
      %2262 = vmatprep.subr.mxu0 0.0
      %2263 = vmatpush1.xpose.msra.mxu0 0.0
      %2264 = vmatprep.subr.mxu0 0.0
      %2265 = vmatpush1.xpose.msra.mxu0 0.0
      %2266 = vmatprep.subr.mxu0 0.0
      %2267 = vmatpush1.xpose.msra.mxu0 0.0
      %2268 = vmatprep.subr.mxu0 0.0
      %2269 = vmatpush1.xpose.msra.mxu0 0.0
      %2270 = vmatprep.subr.mxu0 0.0
      %2271 = vmatpush1.xpose.msra.mxu0 0.0
      %2272 = vmatprep.subr.mxu0 0.0
      %2273 = vmatpush1.xpose.msra.mxu0 0.0
      %2274 = vmatprep.subr.mxu0 0.0
      %2275 = vmatpush1.xpose.msra.mxu0 0.0
      %2276 = vmatprep.subr.mxu0 0.0
      %2277 = vmatpush1.xpose.msra.mxu0 0.0
      %2278 = vmatprep.subr.mxu0 0.0
      %2279 = vmatpush1.xpose.msra.mxu0 0.0
      %2280 = vmatprep.subr.mxu0 0.0
      %2281 = vmatpush1.xpose.msra.mxu0 0.0
      %2282 = vmatprep.mubr.f32.mxu0 0.0
      %2283 = vmatmul.mubr.f32.gmra.mrb[0].mxu0 %v2214
      %v2284 = vpop.f32.mrb[0].mxu0
      %v2285 = vadd.f32 0.0, %v2284
      %v2286 = vpop.f32.mrb[0].mxu0
      %2287 = vdwg.mxu0
      %v2288 = vmul.f32 %v2285, 0.25
      %v2289 = vsel %vm1566, %v2288, -inf
      %2290 = vmax.xlane.f32.xlu0 %v2289
      %v2291 = vpop.xlane.xlu0 %2290
      %v2292 = vsub.f32 %v2288, %v2291
      %v2293 = vmul.f32 %v2292, 1.442695
      %v2294 = vpow.pop %v2293
      %v2295 = vsel %vm1566, %v2294, 0.0
      %2296 = vadd.xlane.f32.xlu0 %v2295
      %v2297 = vpop.xlane.xlu0 %2296
      %v2298 = vrcp.pop %v2297
      %v2299 = vmul.f32 %v2294, %v2298
      %2300 = vrot.lane.b32.xlu0 %v1477, 80
      %v2301 = vpop.permute.xlu0 %2300
      %v2303 = vsel %vm1578, %v2299, 0
      %v2305 = vsel %vm1582, %v2301, 0
      %2307 = vmatprep.subr.mxu0 0.0
      %2308 = vmatpush1.msra.mxu0 %v2305
      %2309 = vmatprep.subr.mxu0 0.0
      %2310 = vmatpush1.msra.mxu0 0.0
      %2311 = vmatprep.subr.mxu0 0.0
      %2312 = vmatpush1.msra.mxu0 0.0
      %2313 = vmatprep.subr.mxu0 0.0
      %2314 = vmatpush1.msra.mxu0 0.0
      %2315 = vmatprep.subr.mxu0 0.0
      %2316 = vmatpush1.msra.mxu0 0.0
      %2317 = vmatprep.subr.mxu0 0.0
      %2318 = vmatpush1.msra.mxu0 0.0
      %2319 = vmatprep.subr.mxu0 0.0
      %2320 = vmatpush1.msra.mxu0 0.0
      %2321 = vmatprep.subr.mxu0 0.0
      %2322 = vmatpush1.msra.mxu0 0.0
      %2323 = vmatprep.subr.mxu0 0.0
      %2324 = vmatpush1.msra.mxu0 0.0
      %2325 = vmatprep.subr.mxu0 0.0
      %2326 = vmatpush1.msra.mxu0 0.0
      %2327 = vmatprep.subr.mxu0 0.0
      %2328 = vmatpush1.msra.mxu0 0.0
      %2329 = vmatprep.subr.mxu0 0.0
      %2330 = vmatpush1.msra.mxu0 0.0
      %2331 = vmatprep.subr.mxu0 0.0
      %2332 = vmatpush1.msra.mxu0 0.0
      %2333 = vmatprep.subr.mxu0 0.0
      %2334 = vmatpush1.msra.mxu0 0.0
      %2335 = vmatprep.subr.mxu0 0.0
      %2336 = vmatpush1.msra.mxu0 0.0
      %2337 = vmatprep.subr.mxu0 0.0
      %2338 = vmatpush1.msra.mxu0 0.0
      %2339 = vmatprep.subr.mxu0 0.0
      %2340 = vmatpush1.msra.mxu0 0.0
      %2341 = vmatprep.subr.mxu0 0.0
      %2342 = vmatpush1.msra.mxu0 0.0
      %2343 = vmatprep.subr.mxu0 0.0
      %2344 = vmatpush1.msra.mxu0 0.0
      %2345 = vmatprep.subr.mxu0 0.0
      %2346 = vmatpush1.msra.mxu0 0.0
      %2347 = vmatprep.subr.mxu0 0.0
      %2348 = vmatpush1.msra.mxu0 0.0
      %2349 = vmatprep.subr.mxu0 0.0
      %2350 = vmatpush1.msra.mxu0 0.0
      %2351 = vmatprep.subr.mxu0 0.0
      %2352 = vmatpush1.msra.mxu0 0.0
      %2353 = vmatprep.subr.mxu0 0.0
      %2354 = vmatpush1.msra.mxu0 0.0
      %2355 = vmatprep.subr.mxu0 0.0
      %2356 = vmatpush1.msra.mxu0 0.0
      %2357 = vmatprep.subr.mxu0 0.0
      %2358 = vmatpush1.msra.mxu0 0.0
      %2359 = vmatprep.subr.mxu0 0.0
      %2360 = vmatpush1.msra.mxu0 0.0
      %2361 = vmatprep.subr.mxu0 0.0
      %2362 = vmatpush1.msra.mxu0 0.0
      %2363 = vmatprep.subr.mxu0 0.0
      %2364 = vmatpush1.msra.mxu0 0.0
      %2365 = vmatprep.subr.mxu0 0.0
      %2366 = vmatpush1.msra.mxu0 0.0
      %2367 = vmatprep.subr.mxu0 0.0
      %2368 = vmatpush1.msra.mxu0 0.0
      %2369 = vmatprep.subr.mxu0 0.0
      %2370 = vmatpush1.msra.mxu0 0.0
      %2371 = vmatprep.mubr.f32.mxu0 0.0
      %2372 = vmatmul.mubr.f32.gmra.mrb[0].mxu0 %v2303
      %v2373 = vpop.f32.mrb[0].mxu0
      %v2374 = vadd.f32 0.0, %v2373
      %v2375 = vpop.f32.mrb[0].mxu0
      %2376 = vdwg.mxu0
      %v2378 = vsel %vm1490, %v2374, 0
      %2380 = vmatprep.subr.mxu0 0.0
      %2381 = vmatpush1.msra.mxu0 %v1485
      %2382 = vmatprep.subr.mxu0 0.0
      %2383 = vmatpush1.msra.mxu0 %v1486
      %2384 = vmatprep.subr.mxu0 0.0
      %2385 = vmatpush1.msra.mxu0 0.0
      %2386 = vmatprep.subr.mxu0 0.0
      %2387 = vmatpush1.msra.mxu0 0.0
      %2388 = vmatprep.subr.mxu0 0.0
      %2389 = vmatpush1.msra.mxu0 0.0
      %2390 = vmatprep.subr.mxu0 0.0
      %2391 = vmatpush1.msra.mxu0 0.0
      %2392 = vmatprep.subr.mxu0 0.0
      %2393 = vmatpush1.msra.mxu0 0.0
      %2394 = vmatprep.subr.mxu0 0.0
      %2395 = vmatpush1.msra.mxu0 0.0
      %2396 = vmatprep.subr.mxu0 0.0
      %2397 = vmatpush1.msra.mxu0 0.0
      %2398 = vmatprep.subr.mxu0 0.0
      %2399 = vmatpush1.msra.mxu0 0.0
      %2400 = vmatprep.subr.mxu0 0.0
      %2401 = vmatpush1.msra.mxu0 0.0
      %2402 = vmatprep.subr.mxu0 0.0
      %2403 = vmatpush1.msra.mxu0 0.0
      %2404 = vmatprep.subr.mxu0 0.0
      %2405 = vmatpush1.msra.mxu0 0.0
      %2406 = vmatprep.subr.mxu0 0.0
      %2407 = vmatpush1.msra.mxu0 0.0
      %2408 = vmatprep.subr.mxu0 0.0
      %2409 = vmatpush1.msra.mxu0 0.0
      %2410 = vmatprep.subr.mxu0 0.0
      %2411 = vmatpush1.msra.mxu0 0.0
      %2412 = vmatprep.subr.mxu0 0.0
      %2413 = vmatpush1.msra.mxu0 0.0
      %2414 = vmatprep.subr.mxu0 0.0
      %2415 = vmatpush1.msra.mxu0 0.0
      %2416 = vmatprep.subr.mxu0 0.0
      %2417 = vmatpush1.msra.mxu0 0.0
      %2418 = vmatprep.subr.mxu0 0.0
      %2419 = vmatpush1.msra.mxu0 0.0
      %2420 = vmatprep.subr.mxu0 0.0
      %2421 = vmatpush1.msra.mxu0 0.0
      %2422 = vmatprep.subr.mxu0 0.0
      %2423 = vmatpush1.msra.mxu0 0.0
      %2424 = vmatprep.subr.mxu0 0.0
      %2425 = vmatpush1.msra.mxu0 0.0
      %2426 = vmatprep.subr.mxu0 0.0
      %2427 = vmatpush1.msra.mxu0 0.0
      %2428 = vmatprep.subr.mxu0 0.0
      %2429 = vmatpush1.msra.mxu0 0.0
      %2430 = vmatprep.subr.mxu0 0.0
      %2431 = vmatpush1.msra.mxu0 0.0
      %2432 = vmatprep.subr.mxu0 0.0
      %2433 = vmatpush1.msra.mxu0 0.0
      %2434 = vmatprep.subr.mxu0 0.0
      %2435 = vmatpush1.msra.mxu0 0.0
      %2436 = vmatprep.subr.mxu0 0.0
      %2437 = vmatpush1.msra.mxu0 0.0
      %2438 = vmatprep.subr.mxu0 0.0
      %2439 = vmatpush1.msra.mxu0 0.0
      %2440 = vmatprep.subr.mxu0 0.0
      %2441 = vmatpush1.msra.mxu0 0.0
      %2442 = vmatprep.subr.mxu0 0.0
      %2443 = vmatpush1.msra.mxu0 0.0
      %2444 = vmatprep.mubr.f32.mxu0 0.0
      %2445 = vmatmul.mubr.f32.gmra.mrb[0].mxu0 %v2378
      %v2446 = vpop.f32.mrb[0].mxu0
      %v2447 = vadd.f32 0.0, %v2446
      %v2448 = vpop.f32.mrb[0].mxu0
      %2449 = vdwg.mxu0
      %v2450 = vadd.f32 %v2209, %v2447
      %v2451 = vadd.f32 %v1344, %v2450
      %v2452 = vld [vmem:[%s21] sm:$0x1]
      %v2454 = vlaneseq
      %v2455 = vshrl.u32 %v2454, 7
      %v2456 = vsub.s32 0, %v2455
      %v2457 = vrot.slane %v2452, %v2456
      %v2459 = vadd.f32 %v2451, %v2457
      %v2460 = vld [vmem:[%s23] sm:$0x1]
      %v2461 = vld [vmem:[%s25] sm:$0x1]
      %v2462 = vsel %vm1347, %v2459, 0.0
      %2463 = vadd.xlane.f32.xlu0 %v2462
      %v2464 = vpop.xlane.xlu0 %2463
      %v2465 = vmul.f32 %v2464, %v1351
      %v2466 = vsub.f32 %v2459, %v2465
      %v2467 = vmul.f32 %v2466, %v2466
      %v2468 = vsel %vm1347, %v2467, 0.0
      %2469 = vadd.xlane.f32.xlu0 %v2468
      %v2470 = vpop.xlane.xlu0 %2469
      %v2471 = vmul.f32 %v2470, %v1351
      %v2472 = vadd.f32 %v2471, 1e-06
      %v2473 = vrsqrt.pop %v2472
      %v2474 = vmul.f32 %v2466, %v2473
      %v2476 = vlaneseq
      %v2477 = vshrl.u32 %v2476, 7
      %v2478 = vsub.s32 0, %v2477
      %v2479 = vrot.slane %v2460, %v2478
      %v2481 = vmul.f32 %v2474, %v2479
      %v2483 = vlaneseq
      %v2484 = vshrl.u32 %v2483, 7
      %v2485 = vsub.s32 0, %v2484
      %v2486 = vrot.slane %v2461, %v2485
      %v2488 = vadd.f32 %v2481, %v2486
      %v2489 = vld [vmem:[%s27] sm:$0xff]
      %v2490 = vld [vmem:[%s27 + $0x8] sm:$0xff]
      %v2491 = vld [vmem:[%s27 + $0x10] sm:$0xff]
      %v2492 = vld [vmem:[%s27 + $0x18] sm:$0xff]
      %v2493 = vld [vmem:[%s27 + $0x20] sm:$0xff]
      %v2494 = vld [vmem:[%s27 + $0x28] sm:$0xff]
      %v2495 = vld [vmem:[%s27 + $0x30] sm:$0xff]
      %v2496 = vld [vmem:[%s27 + $0x38] sm:$0xff]
      %v2497 = vld [vmem:[%s27 + $0x40] sm:$0xff]
      %v2498 = vld [vmem:[%s27 + $0x48] sm:$0xff]
      %v2499 = vld [vmem:[%s27 + $0x50] sm:$0xff]
      %v2500 = vld [vmem:[%s27 + $0x58] sm:$0xff]
      %v2501 = vld [vmem:[%s27 + $0x60] sm:$0xff]
      %v2502 = vld [vmem:[%s27 + $0x68] sm:$0xff]
      %v2503 = vld [vmem:[%s27 + $0x70] sm:$0xff]
      %v2504 = vld [vmem:[%s27 + $0x78] sm:$0xff]
      %v2505 = vld [vmem:[%s29] sm:$0x3]
      %v2507 = vlaneseq
      %v2508 = vshrl.u32 %v2507, 7
      %v2509 = vsub.s32 0, %v2508
      %v2510 = vrot.slane %v2505, %v2509
      %v2511 = vlaneseq
      %v2512 = vshrl.u32 %v2511, 7
      %v2513 = vsub.s32 1, %v2512
      %v2514 = vrot.slane %v2505, %v2513
      %v2518 = vsel %vm1404, %v2488, 0
      %2520 = vmatprep.subr.mxu0 %v2490
      %2521 = vmatpush1.msra.mxu0 %v2489
      %2522 = vmatprep.subr.mxu0 %v2492
      %2523 = vmatpush1.msra.mxu0 %v2491
      %2524 = vmatprep.subr.mxu0 %v2494
      %2525 = vmatpush1.msra.mxu0 %v2493
      %2526 = vmatprep.subr.mxu0 %v2496
      %2527 = vmatpush1.msra.mxu0 %v2495
      %2528 = vmatprep.subr.mxu0 %v2498
      %2529 = vmatpush1.msra.mxu0 %v2497
      %2530 = vmatprep.subr.mxu0 %v2500
      %2531 = vmatpush1.msra.mxu0 %v2499
      %2532 = vmatprep.subr.mxu0 %v2502
      %2533 = vmatpush1.msra.mxu0 %v2501
      %2534 = vmatprep.subr.mxu0 %v2504
      %2535 = vmatpush1.msra.mxu0 %v2503
      %2536 = vmatprep.subr.mxu0 0.0
      %2537 = vmatpush1.msra.mxu0 0.0
      %2538 = vmatprep.subr.mxu0 0.0
      %2539 = vmatpush1.msra.mxu0 0.0
      %2540 = vmatprep.subr.mxu0 0.0
      %2541 = vmatpush1.msra.mxu0 0.0
      %2542 = vmatprep.subr.mxu0 0.0
      %2543 = vmatpush1.msra.mxu0 0.0
      %2544 = vmatprep.subr.mxu0 0.0
      %2545 = vmatpush1.msra.mxu0 0.0
      %2546 = vmatprep.subr.mxu0 0.0
      %2547 = vmatpush1.msra.mxu0 0.0
      %2548 = vmatprep.subr.mxu0 0.0
      %2549 = vmatpush1.msra.mxu0 0.0
      %2550 = vmatprep.subr.mxu0 0.0
      %2551 = vmatpush1.msra.mxu0 0.0
      %2552 = vmatprep.subr.mxu0 0.0
      %2553 = vmatpush1.msra.mxu0 0.0
      %2554 = vmatprep.subr.mxu0 0.0
      %2555 = vmatpush1.msra.mxu0 0.0
      %2556 = vmatprep.subr.mxu0 0.0
      %2557 = vmatpush1.msra.mxu0 0.0
      %2558 = vmatprep.subr.mxu0 0.0
      %2559 = vmatpush1.msra.mxu0 0.0
      %2560 = vmatprep.subr.mxu0 0.0
      %2561 = vmatpush1.msra.mxu0 0.0
      %2562 = vmatprep.subr.mxu0 0.0
      %2563 = vmatpush1.msra.mxu0 0.0
      %2564 = vmatprep.subr.mxu0 0.0
      %2565 = vmatpush1.msra.mxu0 0.0
      %2566 = vmatprep.subr.mxu0 0.0
      %2567 = vmatpush1.msra.mxu0 0.0
      %2568 = vmatprep.subr.mxu0 0.0
      %2569 = vmatpush1.msra.mxu0 0.0
      %2570 = vmatprep.subr.mxu0 0.0
      %2571 = vmatpush1.msra.mxu0 0.0
      %2572 = vmatprep.subr.mxu0 0.0
      %2573 = vmatpush1.msra.mxu0 0.0
      %2574 = vmatprep.subr.mxu0 0.0
      %2575 = vmatpush1.msra.mxu0 0.0
      %2576 = vmatprep.subr.mxu0 0.0
      %2577 = vmatpush1.msra.mxu0 0.0
      %2578 = vmatprep.subr.mxu0 0.0
      %2579 = vmatpush1.msra.mxu0 0.0
      %2580 = vmatprep.subr.mxu0 0.0
      %2581 = vmatpush1.msra.mxu0 0.0
      %2582 = vmatprep.subr.mxu0 0.0
      %2583 = vmatpush1.msra.mxu0 0.0
      %2584 = vmatprep.mubr.f32.mxu0 0.0
      %2585 = vmatmul.mubr.f32.gmra.mrb[0].mxu0 %v2518
      %v2586 = vpop.f32.mrb[0].mxu0
      %v2587 = vadd.f32 %v2510, %v2586
      %v2588 = vpop.f32.mrb[0].mxu0
      %v2589 = vadd.f32 %v2514, %v2588
      %2590 = vdwg.mxu0
      %v2591 = vmul.f32 %v2587, 0.5
      %v2592 = vmul.f32 %v2589, 0.5
      %v2593 = vmul.f32 %v2587, 0.70710677
      %v2594 = vmul.f32 %v2589, 0.70710677
      %v2595 = verf.f32.pop %v2593
      %v2596 = verf.f32.pop %v2594
      %v2597 = vadd.f32 %v2595, 1.0
      %v2598 = vadd.f32 %v2596, 1.0
      %v2599 = vmul.f32 %v2591, %v2597
      %v2600 = vmul.f32 %v2592, %v2598
      %v2601 = vld [vmem:[%s31] sm:$0xff]
      %v2602 = vld [vmem:[%s31 + $0x8] sm:$0xff]
      %v2603 = vld [vmem:[%s31 + $0x10] sm:$0xff]
      %v2604 = vld [vmem:[%s31 + $0x18] sm:$0xff]
      %v2605 = vld [vmem:[%s31 + $0x20] sm:$0xff]
      %v2606 = vld [vmem:[%s31 + $0x28] sm:$0xff]
      %v2607 = vld [vmem:[%s31 + $0x30] sm:$0xff]
      %v2608 = vld [vmem:[%s31 + $0x38] sm:$0xff]
      %v2609 = vld [vmem:[%s31 + $0x40] sm:$0xff]
      %v2610 = vld [vmem:[%s31 + $0x48] sm:$0xff]
      %v2611 = vld [vmem:[%s31 + $0x50] sm:$0xff]
      %v2612 = vld [vmem:[%s31 + $0x58] sm:$0xff]
      %v2613 = vld [vmem:[%s31 + $0x60] sm:$0xff]
      %v2614 = vld [vmem:[%s31 + $0x68] sm:$0xff]
      %v2615 = vld [vmem:[%s31 + $0x70] sm:$0xff]
      %v2616 = vld [vmem:[%s31 + $0x78] sm:$0xff]
      %v2617 = vld [vmem:[%s31 + $0x80] sm:$0xff]
      %v2618 = vld [vmem:[%s31 + $0x88] sm:$0xff]
      %v2619 = vld [vmem:[%s31 + $0x90] sm:$0xff]
      %v2620 = vld [vmem:[%s31 + $0x98] sm:$0xff]
      %v2621 = vld [vmem:[%s31 + $0xa0] sm:$0xff]
      %v2622 = vld [vmem:[%s31 + $0xa8] sm:$0xff]
      %v2623 = vld [vmem:[%s31 + $0xb0] sm:$0xff]
      %v2624 = vld [vmem:[%s31 + $0xb8] sm:$0xff]
      %v2625 = vld [vmem:[%s31 + $0xc0] sm:$0xff]
      %v2626 = vld [vmem:[%s31 + $0xc8] sm:$0xff]
      %v2627 = vld [vmem:[%s31 + $0xd0] sm:$0xff]
      %v2628 = vld [vmem:[%s31 + $0xd8] sm:$0xff]
      %v2629 = vld [vmem:[%s31 + $0xe0] sm:$0xff]
      %v2630 = vld [vmem:[%s31 + $0xe8] sm:$0xff]
      %v2631 = vld [vmem:[%s31 + $0xf0] sm:$0xff]
      %v2632 = vld [vmem:[%s31 + $0xf8] sm:$0xff]
      %v2633 = vld [vmem:[%s33] sm:$0x1]
      %v2635 = vlaneseq
      %v2636 = vshrl.u32 %v2635, 7
      %v2637 = vsub.s32 0, %v2636
      %v2638 = vrot.slane %v2633, %v2637
      %2640 = vmatprep.subr.mxu0 0.0
      %2641 = vmatpush1.msra.mxu0 %v2601
      %2642 = vmatprep.subr.mxu0 0.0
      %2643 = vmatpush1.msra.mxu0 %v2602
      %2644 = vmatprep.subr.mxu0 0.0
      %2645 = vmatpush1.msra.mxu0 %v2603
      %2646 = vmatprep.subr.mxu0 0.0
      %2647 = vmatpush1.msra.mxu0 %v2604
      %2648 = vmatprep.subr.mxu0 0.0
      %2649 = vmatpush1.msra.mxu0 %v2605
      %2650 = vmatprep.subr.mxu0 0.0
      %2651 = vmatpush1.msra.mxu0 %v2606
      %2652 = vmatprep.subr.mxu0 0.0
      %2653 = vmatpush1.msra.mxu0 %v2607
      %2654 = vmatprep.subr.mxu0 0.0
      %2655 = vmatpush1.msra.mxu0 %v2608
      %2656 = vmatprep.subr.mxu0 0.0
      %2657 = vmatpush1.msra.mxu0 %v2609
      %2658 = vmatprep.subr.mxu0 0.0
      %2659 = vmatpush1.msra.mxu0 %v2610
      %2660 = vmatprep.subr.mxu0 0.0
      %2661 = vmatpush1.msra.mxu0 %v2611
      %2662 = vmatprep.subr.mxu0 0.0
      %2663 = vmatpush1.msra.mxu0 %v2612
      %2664 = vmatprep.subr.mxu0 0.0
      %2665 = vmatpush1.msra.mxu0 %v2613
      %2666 = vmatprep.subr.mxu0 0.0
      %2667 = vmatpush1.msra.mxu0 %v2614
      %2668 = vmatprep.subr.mxu0 0.0
      %2669 = vmatpush1.msra.mxu0 %v2615
      %2670 = vmatprep.subr.mxu0 0.0
      %2671 = vmatpush1.msra.mxu0 %v2616
      %2672 = vmatprep.subr.mxu0 0.0
      %2673 = vmatpush1.msra.mxu0 %v2617
      %2674 = vmatprep.subr.mxu0 0.0
      %2675 = vmatpush1.msra.mxu0 %v2618
      %2676 = vmatprep.subr.mxu0 0.0
      %2677 = vmatpush1.msra.mxu0 %v2619
      %2678 = vmatprep.subr.mxu0 0.0
      %2679 = vmatpush1.msra.mxu0 %v2620
      %2680 = vmatprep.subr.mxu0 0.0
      %2681 = vmatpush1.msra.mxu0 %v2621
      %2682 = vmatprep.subr.mxu0 0.0
      %2683 = vmatpush1.msra.mxu0 %v2622
      %2684 = vmatprep.subr.mxu0 0.0
      %2685 = vmatpush1.msra.mxu0 %v2623
      %2686 = vmatprep.subr.mxu0 0.0
      %2687 = vmatpush1.msra.mxu0 %v2624
      %2688 = vmatprep.subr.mxu0 0.0
      %2689 = vmatpush1.msra.mxu0 %v2625
      %2690 = vmatprep.subr.mxu0 0.0
      %2691 = vmatpush1.msra.mxu0 %v2626
      %2692 = vmatprep.subr.mxu0 0.0
      %2693 = vmatpush1.msra.mxu0 %v2627
      %2694 = vmatprep.subr.mxu0 0.0
      %2695 = vmatpush1.msra.mxu0 %v2628
      %2696 = vmatprep.subr.mxu0 0.0
      %2697 = vmatpush1.msra.mxu0 %v2629
      %2698 = vmatprep.subr.mxu0 0.0
      %2699 = vmatpush1.msra.mxu0 %v2630
      %2700 = vmatprep.subr.mxu0 0.0
      %2701 = vmatpush1.msra.mxu0 %v2631
      %2702 = vmatprep.subr.mxu0 0.0
      %2703 = vmatpush1.msra.mxu0 %v2632
      %2704 = vmatprep.mubr.f32.mxu0 %v2600
      %2705 = vmatmul.mubr.f32.gmra.mrb[0].mxu0 %v2599
      %v2706 = vpop.f32.mrb[0].mxu0
      %v2707 = vadd.f32 %v2638, %v2706
      %v2708 = vpop.f32.mrb[0].mxu0
      %2709 = vdwg.mxu0
      %v2710 = vadd.f32 %v2459, %v2707
      %v2711 = vld [vmem:[%s35] sm:$0x1]
      %v2712 = vld [vmem:[%s37] sm:$0x1]
      %v2713 = vsel %vm1347, %v2710, 0.0
      %2714 = vadd.xlane.f32.xlu0 %v2713
      %v2715 = vpop.xlane.xlu0 %2714
      %v2716 = vmul.f32 %v2715, %v1351
      %v2717 = vsub.f32 %v2710, %v2716
      %v2718 = vmul.f32 %v2717, %v2717
      %v2719 = vsel %vm1347, %v2718, 0.0
      %2720 = vadd.xlane.f32.xlu0 %v2719
      %v2721 = vpop.xlane.xlu0 %2720
      %v2722 = vmul.f32 %v2721, %v1351
      %v2723 = vadd.f32 %v2722, 1e-06
      %v2724 = vrsqrt.pop %v2723
      %v2725 = vmul.f32 %v2717, %v2724
      %v2727 = vlaneseq
      %v2728 = vshrl.u32 %v2727, 7
      %v2729 = vsub.s32 0, %v2728
      %v2730 = vrot.slane %v2711, %v2729
      %v2732 = vmul.f32 %v2725, %v2730
      %v2734 = vlaneseq
      %v2735 = vshrl.u32 %v2734, 7
      %v2736 = vsub.s32 0, %v2735
      %v2737 = vrot.slane %v2712, %v2736
      %v2739 = vadd.f32 %v2732, %v2737
      %v2740 = vld [vmem:[%s39] sm:$0xff]
      %v2741 = vld [vmem:[%s39 + $0x8] sm:$0xff]
      %v2742 = vld [vmem:[%s39 + $0x10] sm:$0xff]
      %v2743 = vld [vmem:[%s39 + $0x18] sm:$0xff]
      %v2744 = vld [vmem:[%s39 + $0x20] sm:$0xff]
      %v2745 = vld [vmem:[%s39 + $0x28] sm:$0xff]
      %v2746 = vld [vmem:[%s39 + $0x30] sm:$0xff]
      %v2747 = vld [vmem:[%s39 + $0x38] sm:$0xff]
      %v2748 = vld [vmem:[%s39 + $0x40] sm:$0xff]
      %v2749 = vld [vmem:[%s39 + $0x48] sm:$0xff]
      %v2750 = vld [vmem:[%s39 + $0x50] sm:$0xff]
      %v2751 = vld [vmem:[%s39 + $0x58] sm:$0xff]
      %v2752 = vld [vmem:[%s39 + $0x60] sm:$0xff]
      %v2753 = vld [vmem:[%s39 + $0x68] sm:$0xff]
      %v2754 = vld [vmem:[%s39 + $0x70] sm:$0xff]
      %v2755 = vld [vmem:[%s39 + $0x78] sm:$0xff]
      %v2756 = vld [vmem:[%s41] sm:$0x3]
      %v2758 = vlaneseq
      %v2759 = vshrl.u32 %v2758, 7
      %v2760 = vsub.s32 0, %v2759
      %v2761 = vrot.slane %v2756, %v2760
      %v2762 = vlaneseq
      %v2763 = vshrl.u32 %v2762, 7
      %v2764 = vsub.s32 1, %v2763
      %v2765 = vrot.slane %v2756, %v2764
      %v2769 = vsel %vm1404, %v2739, 0
      %2771 = vmatprep.subr.mxu0 %v2741
      %2772 = vmatpush1.msra.mxu0 %v2740
      %2773 = vmatprep.subr.mxu0 %v2743
      %2774 = vmatpush1.msra.mxu0 %v2742
      %2775 = vmatprep.subr.mxu0 %v2745
      %2776 = vmatpush1.msra.mxu0 %v2744
      %2777 = vmatprep.subr.mxu0 %v2747
      %2778 = vmatpush1.msra.mxu0 %v2746
      %2779 = vmatprep.subr.mxu0 %v2749
      %2780 = vmatpush1.msra.mxu0 %v2748
      %2781 = vmatprep.subr.mxu0 %v2751
      %2782 = vmatpush1.msra.mxu0 %v2750
      %2783 = vmatprep.subr.mxu0 %v2753
      %2784 = vmatpush1.msra.mxu0 %v2752
      %2785 = vmatprep.subr.mxu0 %v2755
      %2786 = vmatpush1.msra.mxu0 %v2754
      %2787 = vmatprep.subr.mxu0 0.0
      %2788 = vmatpush1.msra.mxu0 0.0
      %2789 = vmatprep.subr.mxu0 0.0
      %2790 = vmatpush1.msra.mxu0 0.0
      %2791 = vmatprep.subr.mxu0 0.0
      %2792 = vmatpush1.msra.mxu0 0.0
      %2793 = vmatprep.subr.mxu0 0.0
      %2794 = vmatpush1.msra.mxu0 0.0
      %2795 = vmatprep.subr.mxu0 0.0
      %2796 = vmatpush1.msra.mxu0 0.0
      %2797 = vmatprep.subr.mxu0 0.0
      %2798 = vmatpush1.msra.mxu0 0.0
      %2799 = vmatprep.subr.mxu0 0.0
      %2800 = vmatpush1.msra.mxu0 0.0
      %2801 = vmatprep.subr.mxu0 0.0
      %2802 = vmatpush1.msra.mxu0 0.0
      %2803 = vmatprep.subr.mxu0 0.0
      %2804 = vmatpush1.msra.mxu0 0.0
      %2805 = vmatprep.subr.mxu0 0.0
      %2806 = vmatpush1.msra.mxu0 0.0
      %2807 = vmatprep.subr.mxu0 0.0
      %2808 = vmatpush1.msra.mxu0 0.0
      %2809 = vmatprep.subr.mxu0 0.0
      %2810 = vmatpush1.msra.mxu0 0.0
      %2811 = vmatprep.subr.mxu0 0.0
      %2812 = vmatpush1.msra.mxu0 0.0
      %2813 = vmatprep.subr.mxu0 0.0
      %2814 = vmatpush1.msra.mxu0 0.0
      %2815 = vmatprep.subr.mxu0 0.0
      %2816 = vmatpush1.msra.mxu0 0.0
      %2817 = vmatprep.subr.mxu0 0.0
      %2818 = vmatpush1.msra.mxu0 0.0
      %2819 = vmatprep.subr.mxu0 0.0
      %2820 = vmatpush1.msra.mxu0 0.0
      %2821 = vmatprep.subr.mxu0 0.0
      %2822 = vmatpush1.msra.mxu0 0.0
      %2823 = vmatprep.subr.mxu0 0.0
      %2824 = vmatpush1.msra.mxu0 0.0
      %2825 = vmatprep.subr.mxu0 0.0
      %2826 = vmatpush1.msra.mxu0 0.0
      %2827 = vmatprep.subr.mxu0 0.0
      %2828 = vmatpush1.msra.mxu0 0.0
      %2829 = vmatprep.subr.mxu0 0.0
      %2830 = vmatpush1.msra.mxu0 0.0
      %2831 = vmatprep.subr.mxu0 0.0
      %2832 = vmatpush1.msra.mxu0 0.0
      %2833 = vmatprep.subr.mxu0 0.0
      %2834 = vmatpush1.msra.mxu0 0.0
      %2835 = vmatprep.mubr.f32.mxu0 0.0
      %2836 = vmatmul.mubr.f32.gmra.mrb[0].mxu0 %v2769
      %v2837 = vpop.f32.mrb[0].mxu0
      %v2838 = vadd.f32 %v2761, %v2837
      %v2839 = vpop.f32.mrb[0].mxu0
      %v2840 = vadd.f32 %v2765, %v2839
      %2841 = vdwg.mxu0
      %v2842 = vld [vmem:[%s43] sm:$0xff]
      %v2843 = vld [vmem:[%s43 + $0x8] sm:$0xff]
      %v2844 = vld [vmem:[%s43 + $0x10] sm:$0xff]
      %v2845 = vld [vmem:[%s43 + $0x18] sm:$0xff]
      %v2846 = vld [vmem:[%s43 + $0x20] sm:$0xff]
      %v2847 = vld [vmem:[%s43 + $0x28] sm:$0xff]
      %v2848 = vld [vmem:[%s43 + $0x30] sm:$0xff]
      %v2849 = vld [vmem:[%s43 + $0x38] sm:$0xff]
      %2851 = vrot.lane.b32.xlu0 %v2838, 64
      %v2852 = vpop.permute.xlu0 %2851
      %v2853 = vsel %vm1490, %v2838, 0
      %v2855 = vsel %vm1490, %v2852, 0
      %2857 = vmatprep.subr.mxu0 0.0
      %2858 = vmatpush1.xpose.msra.mxu0 %v2855
      %2859 = vmatprep.subr.mxu0 0.0
      %2860 = vmatpush1.xpose.msra.mxu0 0.0
      %2861 = vmatprep.subr.mxu0 0.0
      %2862 = vmatpush1.xpose.msra.mxu0 0.0
      %2863 = vmatprep.subr.mxu0 0.0
      %2864 = vmatpush1.xpose.msra.mxu0 0.0
      %2865 = vmatprep.subr.mxu0 0.0
      %2866 = vmatpush1.xpose.msra.mxu0 0.0
      %2867 = vmatprep.subr.mxu0 0.0
      %2868 = vmatpush1.xpose.msra.mxu0 0.0
      %2869 = vmatprep.subr.mxu0 0.0
      %2870 = vmatpush1.xpose.msra.mxu0 0.0
      %2871 = vmatprep.subr.mxu0 0.0
      %2872 = vmatpush1.xpose.msra.mxu0 0.0
      %2873 = vmatprep.subr.mxu0 0.0
      %2874 = vmatpush1.xpose.msra.mxu0 0.0
      %2875 = vmatprep.subr.mxu0 0.0
      %2876 = vmatpush1.xpose.msra.mxu0 0.0
      %2877 = vmatprep.subr.mxu0 0.0
      %2878 = vmatpush1.xpose.msra.mxu0 0.0
      %2879 = vmatprep.subr.mxu0 0.0
      %2880 = vmatpush1.xpose.msra.mxu0 0.0
      %2881 = vmatprep.subr.mxu0 0.0
      %2882 = vmatpush1.xpose.msra.mxu0 0.0
      %2883 = vmatprep.subr.mxu0 0.0
      %2884 = vmatpush1.xpose.msra.mxu0 0.0
      %2885 = vmatprep.subr.mxu0 0.0
      %2886 = vmatpush1.xpose.msra.mxu0 0.0
      %2887 = vmatprep.subr.mxu0 0.0
      %2888 = vmatpush1.xpose.msra.mxu0 0.0
      %2889 = vmatprep.subr.mxu0 0.0
      %2890 = vmatpush1.xpose.msra.mxu0 0.0
      %2891 = vmatprep.subr.mxu0 0.0
      %2892 = vmatpush1.xpose.msra.mxu0 0.0
      %2893 = vmatprep.subr.mxu0 0.0
      %2894 = vmatpush1.xpose.msra.mxu0 0.0
      %2895 = vmatprep.subr.mxu0 0.0
      %2896 = vmatpush1.xpose.msra.mxu0 0.0
      %2897 = vmatprep.subr.mxu0 0.0
      %2898 = vmatpush1.xpose.msra.mxu0 0.0
      %2899 = vmatprep.subr.mxu0 0.0
      %2900 = vmatpush1.xpose.msra.mxu0 0.0
      %2901 = vmatprep.subr.mxu0 0.0
      %2902 = vmatpush1.xpose.msra.mxu0 0.0
      %2903 = vmatprep.subr.mxu0 0.0
      %2904 = vmatpush1.xpose.msra.mxu0 0.0
      %2905 = vmatprep.subr.mxu0 0.0
      %2906 = vmatpush1.xpose.msra.mxu0 0.0
      %2907 = vmatprep.subr.mxu0 0.0
      %2908 = vmatpush1.xpose.msra.mxu0 0.0
      %2909 = vmatprep.subr.mxu0 0.0
      %2910 = vmatpush1.xpose.msra.mxu0 0.0
      %2911 = vmatprep.subr.mxu0 0.0
      %2912 = vmatpush1.xpose.msra.mxu0 0.0
      %2913 = vmatprep.subr.mxu0 0.0
      %2914 = vmatpush1.xpose.msra.mxu0 0.0
      %2915 = vmatprep.subr.mxu0 0.0
      %2916 = vmatpush1.xpose.msra.mxu0 0.0
      %2917 = vmatprep.subr.mxu0 0.0
      %2918 = vmatpush1.xpose.msra.mxu0 0.0
      %2919 = vmatprep.subr.mxu0 0.0
      %2920 = vmatpush1.xpose.msra.mxu0 0.0
      %2921 = vmatprep.mubr.f32.mxu0 0.0
      %2922 = vmatmul.mubr.f32.gmra.mrb[0].mxu0 %v2853
      %v2923 = vpop.f32.mrb[0].mxu0
      %v2924 = vadd.f32 0.0, %v2923
      %v2925 = vpop.f32.mrb[0].mxu0
      %2926 = vdwg.mxu0
      %v2927 = vmul.f32 %v2924, 0.25
      %v2928 = vsel %vm1566, %v2927, -inf
      %2929 = vmax.xlane.f32.xlu0 %v2928
      %v2930 = vpop.xlane.xlu0 %2929
      %v2931 = vsub.f32 %v2927, %v2930
      %v2932 = vmul.f32 %v2931, 1.442695
      %v2933 = vpow.pop %v2932
      %v2934 = vsel %vm1566, %v2933, 0.0
      %2935 = vadd.xlane.f32.xlu0 %v2934
      %v2936 = vpop.xlane.xlu0 %2935
      %v2937 = vrcp.pop %v2936
      %v2938 = vmul.f32 %v2933, %v2937
      %v2940 = vsel %vm1578, %v2938, 0
      %v2943 = vsel %vm1582, %v2840, 0
      %2945 = vmatprep.subr.mxu0 0.0
      %2946 = vmatpush1.msra.mxu0 %v2943
      %2947 = vmatprep.subr.mxu0 0.0
      %2948 = vmatpush1.msra.mxu0 0.0
      %2949 = vmatprep.subr.mxu0 0.0
      %2950 = vmatpush1.msra.mxu0 0.0
      %2951 = vmatprep.subr.mxu0 0.0
      %2952 = vmatpush1.msra.mxu0 0.0
      %2953 = vmatprep.subr.mxu0 0.0
      %2954 = vmatpush1.msra.mxu0 0.0
      %2955 = vmatprep.subr.mxu0 0.0
      %2956 = vmatpush1.msra.mxu0 0.0
      %2957 = vmatprep.subr.mxu0 0.0
      %2958 = vmatpush1.msra.mxu0 0.0
      %2959 = vmatprep.subr.mxu0 0.0
      %2960 = vmatpush1.msra.mxu0 0.0
      %2961 = vmatprep.subr.mxu0 0.0
      %2962 = vmatpush1.msra.mxu0 0.0
      %2963 = vmatprep.subr.mxu0 0.0
      %2964 = vmatpush1.msra.mxu0 0.0
      %2965 = vmatprep.subr.mxu0 0.0
      %2966 = vmatpush1.msra.mxu0 0.0
      %2967 = vmatprep.subr.mxu0 0.0
      %2968 = vmatpush1.msra.mxu0 0.0
      %2969 = vmatprep.subr.mxu0 0.0
      %2970 = vmatpush1.msra.mxu0 0.0
      %2971 = vmatprep.subr.mxu0 0.0
      %2972 = vmatpush1.msra.mxu0 0.0
      %2973 = vmatprep.subr.mxu0 0.0
      %2974 = vmatpush1.msra.mxu0 0.0
      %2975 = vmatprep.subr.mxu0 0.0
      %2976 = vmatpush1.msra.mxu0 0.0
      %2977 = vmatprep.subr.mxu0 0.0
      %2978 = vmatpush1.msra.mxu0 0.0
      %2979 = vmatprep.subr.mxu0 0.0
      %2980 = vmatpush1.msra.mxu0 0.0
      %2981 = vmatprep.subr.mxu0 0.0
      %2982 = vmatpush1.msra.mxu0 0.0
      %2983 = vmatprep.subr.mxu0 0.0
      %2984 = vmatpush1.msra.mxu0 0.0
      %2985 = vmatprep.subr.mxu0 0.0
      %2986 = vmatpush1.msra.mxu0 0.0
      %2987 = vmatprep.subr.mxu0 0.0
      %2988 = vmatpush1.msra.mxu0 0.0
      %2989 = vmatprep.subr.mxu0 0.0
      %2990 = vmatpush1.msra.mxu0 0.0
      %2991 = vmatprep.subr.mxu0 0.0
      %2992 = vmatpush1.msra.mxu0 0.0
      %2993 = vmatprep.subr.mxu0 0.0
      %2994 = vmatpush1.msra.mxu0 0.0
      %2995 = vmatprep.subr.mxu0 0.0
      %2996 = vmatpush1.msra.mxu0 0.0
      %2997 = vmatprep.subr.mxu0 0.0
      %2998 = vmatpush1.msra.mxu0 0.0
      %2999 = vmatprep.subr.mxu0 0.0
      %3000 = vmatpush1.msra.mxu0 0.0
      %3001 = vmatprep.subr.mxu0 0.0
      %3002 = vmatpush1.msra.mxu0 0.0
      %3003 = vmatprep.subr.mxu0 0.0
      %3004 = vmatpush1.msra.mxu0 0.0
      %3005 = vmatprep.subr.mxu0 0.0
      %3006 = vmatpush1.msra.mxu0 0.0
      %3007 = vmatprep.subr.mxu0 0.0
      %3008 = vmatpush1.msra.mxu0 0.0
      %3009 = vmatprep.mubr.f32.mxu0 0.0
      %3010 = vmatmul.mubr.f32.gmra.mrb[0].mxu0 %v2940
      %v3011 = vpop.f32.mrb[0].mxu0
      %v3012 = vadd.f32 0.0, %v3011
      %v3013 = vpop.f32.mrb[0].mxu0
      %3014 = vdwg.mxu0
      %3015 = vrot.lane.b32.xlu0 %v2838, 112
      %v3016 = vpop.permute.xlu0 %3015
      %3017 = vrot.lane.b32.xlu0 %v2838, 48
      %v3018 = vpop.permute.xlu0 %3017
      %v3019 = vsel %vm1490, %v3016, 0
      %v3021 = vsel %vm1490, %v3018, 0
      %3023 = vmatprep.subr.mxu0 0.0
      %3024 = vmatpush1.xpose.msra.mxu0 %v3021
      %3025 = vmatprep.subr.mxu0 0.0
      %3026 = vmatpush1.xpose.msra.mxu0 0.0
      %3027 = vmatprep.subr.mxu0 0.0
      %3028 = vmatpush1.xpose.msra.mxu0 0.0
      %3029 = vmatprep.subr.mxu0 0.0
      %3030 = vmatpush1.xpose.msra.mxu0 0.0
      %3031 = vmatprep.subr.mxu0 0.0
      %3032 = vmatpush1.xpose.msra.mxu0 0.0
      %3033 = vmatprep.subr.mxu0 0.0
      %3034 = vmatpush1.xpose.msra.mxu0 0.0
      %3035 = vmatprep.subr.mxu0 0.0
      %3036 = vmatpush1.xpose.msra.mxu0 0.0
      %3037 = vmatprep.subr.mxu0 0.0
      %3038 = vmatpush1.xpose.msra.mxu0 0.0
      %3039 = vmatprep.subr.mxu0 0.0
      %3040 = vmatpush1.xpose.msra.mxu0 0.0
      %3041 = vmatprep.subr.mxu0 0.0
      %3042 = vmatpush1.xpose.msra.mxu0 0.0
      %3043 = vmatprep.subr.mxu0 0.0
      %3044 = vmatpush1.xpose.msra.mxu0 0.0
      %3045 = vmatprep.subr.mxu0 0.0
      %3046 = vmatpush1.xpose.msra.mxu0 0.0
      %3047 = vmatprep.subr.mxu0 0.0
      %3048 = vmatpush1.xpose.msra.mxu0 0.0
      %3049 = vmatprep.subr.mxu0 0.0
      %3050 = vmatpush1.xpose.msra.mxu0 0.0
      %3051 = vmatprep.subr.mxu0 0.0
      %3052 = vmatpush1.xpose.msra.mxu0 0.0
      %3053 = vmatprep.subr.mxu0 0.0
      %3054 = vmatpush1.xpose.msra.mxu0 0.0
      %3055 = vmatprep.subr.mxu0 0.0
      %3056 = vmatpush1.xpose.msra.mxu0 0.0
      %3057 = vmatprep.subr.mxu0 0.0
      %3058 = vmatpush1.xpose.msra.mxu0 0.0
      %3059 = vmatprep.subr.mxu0 0.0
      %3060 = vmatpush1.xpose.msra.mxu0 0.0
      %3061 = vmatprep.subr.mxu0 0.0
      %3062 = vmatpush1.xpose.msra.mxu0 0.0
      %3063 = vmatprep.subr.mxu0 0.0
      %3064 = vmatpush1.xpose.msra.mxu0 0.0
      %3065 = vmatprep.subr.mxu0 0.0
      %3066 = vmatpush1.xpose.msra.mxu0 0.0
      %3067 = vmatprep.subr.mxu0 0.0
      %3068 = vmatpush1.xpose.msra.mxu0 0.0
      %3069 = vmatprep.subr.mxu0 0.0
      %3070 = vmatpush1.xpose.msra.mxu0 0.0
      %3071 = vmatprep.subr.mxu0 0.0
      %3072 = vmatpush1.xpose.msra.mxu0 0.0
      %3073 = vmatprep.subr.mxu0 0.0
      %3074 = vmatpush1.xpose.msra.mxu0 0.0
      %3075 = vmatprep.subr.mxu0 0.0
      %3076 = vmatpush1.xpose.msra.mxu0 0.0
      %3077 = vmatprep.subr.mxu0 0.0
      %3078 = vmatpush1.xpose.msra.mxu0 0.0
      %3079 = vmatprep.subr.mxu0 0.0
      %3080 = vmatpush1.xpose.msra.mxu0 0.0
      %3081 = vmatprep.subr.mxu0 0.0
      %3082 = vmatpush1.xpose.msra.mxu0 0.0
      %3083 = vmatprep.subr.mxu0 0.0
      %3084 = vmatpush1.xpose.msra.mxu0 0.0
      %3085 = vmatprep.subr.mxu0 0.0
      %3086 = vmatpush1.xpose.msra.mxu0 0.0
      %3087 = vmatprep.mubr.f32.mxu0 0.0
      %3088 = vmatmul.mubr.f32.gmra.mrb[0].mxu0 %v3019
      %v3089 = vpop.f32.mrb[0].mxu0
      %v3090 = vadd.f32 0.0, %v3089
      %v3091 = vpop.f32.mrb[0].mxu0
      %3092 = vdwg.mxu0
      %v3093 = vmul.f32 %v3090, 0.25
      %v3094 = vsel %vm1566, %v3093, -inf
      %3095 = vmax.xlane.f32.xlu0 %v3094
      %v3096 = vpop.xlane.xlu0 %3095
      %v3097 = vsub.f32 %v3093, %v3096
      %v3098 = vmul.f32 %v3097, 1.442695
      %v3099 = vpow.pop %v3098
      %v3100 = vsel %vm1566, %v3099, 0.0
      %3101 = vadd.xlane.f32.xlu0 %v3100
      %v3102 = vpop.xlane.xlu0 %3101
      %v3103 = vrcp.pop %v3102
      %v3104 = vmul.f32 %v3099, %v3103
      %3105 = vrot.lane.b32.xlu0 %v2840, 112
      %v3106 = vpop.permute.xlu0 %3105
      %v3108 = vsel %vm1578, %v3104, 0
      %v3110 = vsel %vm1582, %v3106, 0
      %3112 = vmatprep.subr.mxu0 0.0
      %3113 = vmatpush1.msra.mxu0 %v3110
      %3114 = vmatprep.subr.mxu0 0.0
      %3115 = vmatpush1.msra.mxu0 0.0
      %3116 = vmatprep.subr.mxu0 0.0
      %3117 = vmatpush1.msra.mxu0 0.0
      %3118 = vmatprep.subr.mxu0 0.0
      %3119 = vmatpush1.msra.mxu0 0.0
      %3120 = vmatprep.subr.mxu0 0.0
      %3121 = vmatpush1.msra.mxu0 0.0
      %3122 = vmatprep.subr.mxu0 0.0
      %3123 = vmatpush1.msra.mxu0 0.0
      %3124 = vmatprep.subr.mxu0 0.0
      %3125 = vmatpush1.msra.mxu0 0.0
      %3126 = vmatprep.subr.mxu0 0.0
      %3127 = vmatpush1.msra.mxu0 0.0
      %3128 = vmatprep.subr.mxu0 0.0
      %3129 = vmatpush1.msra.mxu0 0.0
      %3130 = vmatprep.subr.mxu0 0.0
      %3131 = vmatpush1.msra.mxu0 0.0
      %3132 = vmatprep.subr.mxu0 0.0
      %3133 = vmatpush1.msra.mxu0 0.0
      %3134 = vmatprep.subr.mxu0 0.0
      %3135 = vmatpush1.msra.mxu0 0.0
      %3136 = vmatprep.subr.mxu0 0.0
      %3137 = vmatpush1.msra.mxu0 0.0
      %3138 = vmatprep.subr.mxu0 0.0
      %3139 = vmatpush1.msra.mxu0 0.0
      %3140 = vmatprep.subr.mxu0 0.0
      %3141 = vmatpush1.msra.mxu0 0.0
      %3142 = vmatprep.subr.mxu0 0.0
      %3143 = vmatpush1.msra.mxu0 0.0
      %3144 = vmatprep.subr.mxu0 0.0
      %3145 = vmatpush1.msra.mxu0 0.0
      %3146 = vmatprep.subr.mxu0 0.0
      %3147 = vmatpush1.msra.mxu0 0.0
      %3148 = vmatprep.subr.mxu0 0.0
      %3149 = vmatpush1.msra.mxu0 0.0
      %3150 = vmatprep.subr.mxu0 0.0
      %3151 = vmatpush1.msra.mxu0 0.0
      %3152 = vmatprep.subr.mxu0 0.0
      %3153 = vmatpush1.msra.mxu0 0.0
      %3154 = vmatprep.subr.mxu0 0.0
      %3155 = vmatpush1.msra.mxu0 0.0
      %3156 = vmatprep.subr.mxu0 0.0
      %3157 = vmatpush1.msra.mxu0 0.0
      %3158 = vmatprep.subr.mxu0 0.0
      %3159 = vmatpush1.msra.mxu0 0.0
      %3160 = vmatprep.subr.mxu0 0.0
      %3161 = vmatpush1.msra.mxu0 0.0
      %3162 = vmatprep.subr.mxu0 0.0
      %3163 = vmatpush1.msra.mxu0 0.0
      %3164 = vmatprep.subr.mxu0 0.0
      %3165 = vmatpush1.msra.mxu0 0.0
      %3166 = vmatprep.subr.mxu0 0.0
      %3167 = vmatpush1.msra.mxu0 0.0
      %3168 = vmatprep.subr.mxu0 0.0
      %3169 = vmatpush1.msra.mxu0 0.0
      %3170 = vmatprep.subr.mxu0 0.0
      %3171 = vmatpush1.msra.mxu0 0.0
      %3172 = vmatprep.subr.mxu0 0.0
      %3173 = vmatpush1.msra.mxu0 0.0
      %3174 = vmatprep.subr.mxu0 0.0
      %3175 = vmatpush1.msra.mxu0 0.0
      %3176 = vmatprep.mubr.f32.mxu0 0.0
      %3177 = vmatmul.mubr.f32.gmra.mrb[0].mxu0 %v3108
      %v3178 = vpop.f32.mrb[0].mxu0
      %v3179 = vadd.f32 0.0, %v3178
      %v3180 = vpop.f32.mrb[0].mxu0
      %3181 = vdwg.mxu0
      %v3183 = vsel %vm1490, %v3179, 0
      %3185 = vmatprep.subr.mxu0 0.0
      %3186 = vmatpush1.msra.mxu0 %v2844
      %3187 = vmatprep.subr.mxu0 0.0
      %3188 = vmatpush1.msra.mxu0 %v2845
      %3189 = vmatprep.subr.mxu0 0.0
      %3190 = vmatpush1.msra.mxu0 0.0
      %3191 = vmatprep.subr.mxu0 0.0
      %3192 = vmatpush1.msra.mxu0 0.0
      %3193 = vmatprep.subr.mxu0 0.0
      %3194 = vmatpush1.msra.mxu0 0.0
      %3195 = vmatprep.subr.mxu0 0.0
      %3196 = vmatpush1.msra.mxu0 0.0
      %3197 = vmatprep.subr.mxu0 0.0
      %3198 = vmatpush1.msra.mxu0 0.0
      %3199 = vmatprep.subr.mxu0 0.0
      %3200 = vmatpush1.msra.mxu0 0.0
      %3201 = vmatprep.subr.mxu0 0.0
      %3202 = vmatpush1.msra.mxu0 0.0
      %3203 = vmatprep.subr.mxu0 0.0
      %3204 = vmatpush1.msra.mxu0 0.0
      %3205 = vmatprep.subr.mxu0 0.0
      %3206 = vmatpush1.msra.mxu0 0.0
      %3207 = vmatprep.subr.mxu0 0.0
      %3208 = vmatpush1.msra.mxu0 0.0
      %3209 = vmatprep.subr.mxu0 0.0
      %3210 = vmatpush1.msra.mxu0 0.0
      %3211 = vmatprep.subr.mxu0 0.0
      %3212 = vmatpush1.msra.mxu0 0.0
      %3213 = vmatprep.subr.mxu0 0.0
      %3214 = vmatpush1.msra.mxu0 0.0
      %3215 = vmatprep.subr.mxu0 0.0
      %3216 = vmatpush1.msra.mxu0 0.0
      %3217 = vmatprep.subr.mxu0 0.0
      %3218 = vmatpush1.msra.mxu0 0.0
      %3219 = vmatprep.subr.mxu0 0.0
      %3220 = vmatpush1.msra.mxu0 0.0
      %3221 = vmatprep.subr.mxu0 0.0
      %3222 = vmatpush1.msra.mxu0 0.0
      %3223 = vmatprep.subr.mxu0 0.0
      %3224 = vmatpush1.msra.mxu0 0.0
      %3225 = vmatprep.subr.mxu0 0.0
      %3226 = vmatpush1.msra.mxu0 0.0
      %3227 = vmatprep.subr.mxu0 0.0
      %3228 = vmatpush1.msra.mxu0 0.0
      %3229 = vmatprep.subr.mxu0 0.0
      %3230 = vmatpush1.msra.mxu0 0.0
      %3231 = vmatprep.subr.mxu0 0.0
      %3232 = vmatpush1.msra.mxu0 0.0
      %3233 = vmatprep.subr.mxu0 0.0
      %3234 = vmatpush1.msra.mxu0 0.0
      %3235 = vmatprep.subr.mxu0 0.0
      %3236 = vmatpush1.msra.mxu0 0.0
      %3237 = vmatprep.subr.mxu0 0.0
      %3238 = vmatpush1.msra.mxu0 0.0
      %3239 = vmatprep.subr.mxu0 0.0
      %3240 = vmatpush1.msra.mxu0 0.0
      %3241 = vmatprep.subr.mxu0 0.0
      %3242 = vmatpush1.msra.mxu0 0.0
      %3243 = vmatprep.subr.mxu0 0.0
      %3244 = vmatpush1.msra.mxu0 0.0
      %3245 = vmatprep.subr.mxu0 0.0
      %3246 = vmatpush1.msra.mxu0 0.0
      %3247 = vmatprep.subr.mxu0 0.0
      %3248 = vmatpush1.msra.mxu0 0.0
      %3249 = vmatprep.mubr.f32.mxu0 0.0
      %3250 = vmatmul.mubr.f32.gmra.mrb[0].mxu0 %v3183
      %v3251 = vpop.f32.mrb[0].mxu0
      %v3252 = vadd.f32 0.0, %v3251
      %v3253 = vpop.f32.mrb[0].mxu0
      %3254 = vdwg.mxu0
      %v3256 = vsel %vm1490, %v3012, 0
      %3258 = vmatprep.subr.mxu0 0.0
      %3259 = vmatpush1.msra.mxu0 %v2842
      %3260 = vmatprep.subr.mxu0 0.0
      %3261 = vmatpush1.msra.mxu0 %v2843
      %3262 = vmatprep.subr.mxu0 0.0
      %3263 = vmatpush1.msra.mxu0 0.0
      %3264 = vmatprep.subr.mxu0 0.0
      %3265 = vmatpush1.msra.mxu0 0.0
      %3266 = vmatprep.subr.mxu0 0.0
      %3267 = vmatpush1.msra.mxu0 0.0
      %3268 = vmatprep.subr.mxu0 0.0
      %3269 = vmatpush1.msra.mxu0 0.0
      %3270 = vmatprep.subr.mxu0 0.0
      %3271 = vmatpush1.msra.mxu0 0.0
      %3272 = vmatprep.subr.mxu0 0.0
      %3273 = vmatpush1.msra.mxu0 0.0
      %3274 = vmatprep.subr.mxu0 0.0
      %3275 = vmatpush1.msra.mxu0 0.0
      %3276 = vmatprep.subr.mxu0 0.0
      %3277 = vmatpush1.msra.mxu0 0.0
      %3278 = vmatprep.subr.mxu0 0.0
      %3279 = vmatpush1.msra.mxu0 0.0
      %3280 = vmatprep.subr.mxu0 0.0
      %3281 = vmatpush1.msra.mxu0 0.0
      %3282 = vmatprep.subr.mxu0 0.0
      %3283 = vmatpush1.msra.mxu0 0.0
      %3284 = vmatprep.subr.mxu0 0.0
      %3285 = vmatpush1.msra.mxu0 0.0
      %3286 = vmatprep.subr.mxu0 0.0
      %3287 = vmatpush1.msra.mxu0 0.0
      %3288 = vmatprep.subr.mxu0 0.0
      %3289 = vmatpush1.msra.mxu0 0.0
      %3290 = vmatprep.subr.mxu0 0.0
      %3291 = vmatpush1.msra.mxu0 0.0
      %3292 = vmatprep.subr.mxu0 0.0
      %3293 = vmatpush1.msra.mxu0 0.0
      %3294 = vmatprep.subr.mxu0 0.0
      %3295 = vmatpush1.msra.mxu0 0.0
      %3296 = vmatprep.subr.mxu0 0.0
      %3297 = vmatpush1.msra.mxu0 0.0
      %3298 = vmatprep.subr.mxu0 0.0
      %3299 = vmatpush1.msra.mxu0 0.0
      %3300 = vmatprep.subr.mxu0 0.0
      %3301 = vmatpush1.msra.mxu0 0.0
      %3302 = vmatprep.subr.mxu0 0.0
      %3303 = vmatpush1.msra.mxu0 0.0
      %3304 = vmatprep.subr.mxu0 0.0
      %3305 = vmatpush1.msra.mxu0 0.0
      %3306 = vmatprep.subr.mxu0 0.0
      %3307 = vmatpush1.msra.mxu0 0.0
      %3308 = vmatprep.subr.mxu0 0.0
      %3309 = vmatpush1.msra.mxu0 0.0
      %3310 = vmatprep.subr.mxu0 0.0
      %3311 = vmatpush1.msra.mxu0 0.0
      %3312 = vmatprep.subr.mxu0 0.0
      %3313 = vmatpush1.msra.mxu0 0.0
      %3314 = vmatprep.subr.mxu0 0.0
      %3315 = vmatpush1.msra.mxu0 0.0
      %3316 = vmatprep.subr.mxu0 0.0
      %3317 = vmatpush1.msra.mxu0 0.0
      %3318 = vmatprep.subr.mxu0 0.0
      %3319 = vmatpush1.msra.mxu0 0.0
      %3320 = vmatprep.subr.mxu0 0.0
      %3321 = vmatpush1.msra.mxu0 0.0
      %3322 = vmatprep.mubr.f32.mxu0 0.0
      %3323 = vmatmul.mubr.f32.gmra.mrb[0].mxu0 %v3256
      %v3324 = vpop.f32.mrb[0].mxu0
      %v3325 = vadd.f32 %v3252, %v3324
      %v3326 = vpop.f32.mrb[0].mxu0
      %3327 = vdwg.mxu0
      %3328 = vrot.lane.b32.xlu0 %v2838, 96
      %v3329 = vpop.permute.xlu0 %3328
      %3330 = vrot.lane.b32.xlu0 %v2838, 32
      %v3331 = vpop.permute.xlu0 %3330
      %v3332 = vsel %vm1490, %v3329, 0
      %v3334 = vsel %vm1490, %v3331, 0
      %3336 = vmatprep.subr.mxu0 0.0
      %3337 = vmatpush1.xpose.msra.mxu0 %v3334
      %3338 = vmatprep.subr.mxu0 0.0
      %3339 = vmatpush1.xpose.msra.mxu0 0.0
      %3340 = vmatprep.subr.mxu0 0.0
      %3341 = vmatpush1.xpose.msra.mxu0 0.0
      %3342 = vmatprep.subr.mxu0 0.0
      %3343 = vmatpush1.xpose.msra.mxu0 0.0
      %3344 = vmatprep.subr.mxu0 0.0
      %3345 = vmatpush1.xpose.msra.mxu0 0.0
      %3346 = vmatprep.subr.mxu0 0.0
      %3347 = vmatpush1.xpose.msra.mxu0 0.0
      %3348 = vmatprep.subr.mxu0 0.0
      %3349 = vmatpush1.xpose.msra.mxu0 0.0
      %3350 = vmatprep.subr.mxu0 0.0
      %3351 = vmatpush1.xpose.msra.mxu0 0.0
      %3352 = vmatprep.subr.mxu0 0.0
      %3353 = vmatpush1.xpose.msra.mxu0 0.0
      %3354 = vmatprep.subr.mxu0 0.0
      %3355 = vmatpush1.xpose.msra.mxu0 0.0
      %3356 = vmatprep.subr.mxu0 0.0
      %3357 = vmatpush1.xpose.msra.mxu0 0.0
      %3358 = vmatprep.subr.mxu0 0.0
      %3359 = vmatpush1.xpose.msra.mxu0 0.0
      %3360 = vmatprep.subr.mxu0 0.0
      %3361 = vmatpush1.xpose.msra.mxu0 0.0
      %3362 = vmatprep.subr.mxu0 0.0
      %3363 = vmatpush1.xpose.msra.mxu0 0.0
      %3364 = vmatprep.subr.mxu0 0.0
      %3365 = vmatpush1.xpose.msra.mxu0 0.0
      %3366 = vmatprep.subr.mxu0 0.0
      %3367 = vmatpush1.xpose.msra.mxu0 0.0
      %3368 = vmatprep.subr.mxu0 0.0
      %3369 = vmatpush1.xpose.msra.mxu0 0.0
      %3370 = vmatprep.subr.mxu0 0.0
      %3371 = vmatpush1.xpose.msra.mxu0 0.0
      %3372 = vmatprep.subr.mxu0 0.0
      %3373 = vmatpush1.xpose.msra.mxu0 0.0
      %3374 = vmatprep.subr.mxu0 0.0
      %3375 = vmatpush1.xpose.msra.mxu0 0.0
      %3376 = vmatprep.subr.mxu0 0.0
      %3377 = vmatpush1.xpose.msra.mxu0 0.0
      %3378 = vmatprep.subr.mxu0 0.0
      %3379 = vmatpush1.xpose.msra.mxu0 0.0
      %3380 = vmatprep.subr.mxu0 0.0
      %3381 = vmatpush1.xpose.msra.mxu0 0.0
      %3382 = vmatprep.subr.mxu0 0.0
      %3383 = vmatpush1.xpose.msra.mxu0 0.0
      %3384 = vmatprep.subr.mxu0 0.0
      %3385 = vmatpush1.xpose.msra.mxu0 0.0
      %3386 = vmatprep.subr.mxu0 0.0
      %3387 = vmatpush1.xpose.msra.mxu0 0.0
      %3388 = vmatprep.subr.mxu0 0.0
      %3389 = vmatpush1.xpose.msra.mxu0 0.0
      %3390 = vmatprep.subr.mxu0 0.0
      %3391 = vmatpush1.xpose.msra.mxu0 0.0
      %3392 = vmatprep.subr.mxu0 0.0
      %3393 = vmatpush1.xpose.msra.mxu0 0.0
      %3394 = vmatprep.subr.mxu0 0.0
      %3395 = vmatpush1.xpose.msra.mxu0 0.0
      %3396 = vmatprep.subr.mxu0 0.0
      %3397 = vmatpush1.xpose.msra.mxu0 0.0
      %3398 = vmatprep.subr.mxu0 0.0
      %3399 = vmatpush1.xpose.msra.mxu0 0.0
      %3400 = vmatprep.mubr.f32.mxu0 0.0
      %3401 = vmatmul.mubr.f32.gmra.mrb[0].mxu0 %v3332
      %v3402 = vpop.f32.mrb[0].mxu0
      %v3403 = vadd.f32 0.0, %v3402
      %v3404 = vpop.f32.mrb[0].mxu0
      %3405 = vdwg.mxu0
      %v3406 = vmul.f32 %v3403, 0.25
      %v3407 = vsel %vm1566, %v3406, -inf
      %3408 = vmax.xlane.f32.xlu0 %v3407
      %v3409 = vpop.xlane.xlu0 %3408
      %v3410 = vsub.f32 %v3406, %v3409
      %v3411 = vmul.f32 %v3410, 1.442695
      %v3412 = vpow.pop %v3411
      %v3413 = vsel %vm1566, %v3412, 0.0
      %3414 = vadd.xlane.f32.xlu0 %v3413
      %v3415 = vpop.xlane.xlu0 %3414
      %v3416 = vrcp.pop %v3415
      %v3417 = vmul.f32 %v3412, %v3416
      %3418 = vrot.lane.b32.xlu0 %v2840, 96
      %v3419 = vpop.permute.xlu0 %3418
      %v3421 = vsel %vm1578, %v3417, 0
      %v3423 = vsel %vm1582, %v3419, 0
      %3425 = vmatprep.subr.mxu0 0.0
      %3426 = vmatpush1.msra.mxu0 %v3423
      %3427 = vmatprep.subr.mxu0 0.0
      %3428 = vmatpush1.msra.mxu0 0.0
      %3429 = vmatprep.subr.mxu0 0.0
      %3430 = vmatpush1.msra.mxu0 0.0
      %3431 = vmatprep.subr.mxu0 0.0
      %3432 = vmatpush1.msra.mxu0 0.0
      %3433 = vmatprep.subr.mxu0 0.0
      %3434 = vmatpush1.msra.mxu0 0.0
      %3435 = vmatprep.subr.mxu0 0.0
      %3436 = vmatpush1.msra.mxu0 0.0
      %3437 = vmatprep.subr.mxu0 0.0
      %3438 = vmatpush1.msra.mxu0 0.0
      %3439 = vmatprep.subr.mxu0 0.0
      %3440 = vmatpush1.msra.mxu0 0.0
      %3441 = vmatprep.subr.mxu0 0.0
      %3442 = vmatpush1.msra.mxu0 0.0
      %3443 = vmatprep.subr.mxu0 0.0
      %3444 = vmatpush1.msra.mxu0 0.0
      %3445 = vmatprep.subr.mxu0 0.0
      %3446 = vmatpush1.msra.mxu0 0.0
      %3447 = vmatprep.subr.mxu0 0.0
      %3448 = vmatpush1.msra.mxu0 0.0
      %3449 = vmatprep.subr.mxu0 0.0
      %3450 = vmatpush1.msra.mxu0 0.0
      %3451 = vmatprep.subr.mxu0 0.0
      %3452 = vmatpush1.msra.mxu0 0.0
      %3453 = vmatprep.subr.mxu0 0.0
      %3454 = vmatpush1.msra.mxu0 0.0
      %3455 = vmatprep.subr.mxu0 0.0
      %3456 = vmatpush1.msra.mxu0 0.0
      %3457 = vmatprep.subr.mxu0 0.0
      %3458 = vmatpush1.msra.mxu0 0.0
      %3459 = vmatprep.subr.mxu0 0.0
      %3460 = vmatpush1.msra.mxu0 0.0
      %3461 = vmatprep.subr.mxu0 0.0
      %3462 = vmatpush1.msra.mxu0 0.0
      %3463 = vmatprep.subr.mxu0 0.0
      %3464 = vmatpush1.msra.mxu0 0.0
      %3465 = vmatprep.subr.mxu0 0.0
      %3466 = vmatpush1.msra.mxu0 0.0
      %3467 = vmatprep.subr.mxu0 0.0
      %3468 = vmatpush1.msra.mxu0 0.0
      %3469 = vmatprep.subr.mxu0 0.0
      %3470 = vmatpush1.msra.mxu0 0.0
      %3471 = vmatprep.subr.mxu0 0.0
      %3472 = vmatpush1.msra.mxu0 0.0
      %3473 = vmatprep.subr.mxu0 0.0
      %3474 = vmatpush1.msra.mxu0 0.0
      %3475 = vmatprep.subr.mxu0 0.0
      %3476 = vmatpush1.msra.mxu0 0.0
      %3477 = vmatprep.subr.mxu0 0.0
      %3478 = vmatpush1.msra.mxu0 0.0
      %3479 = vmatprep.subr.mxu0 0.0
      %3480 = vmatpush1.msra.mxu0 0.0
      %3481 = vmatprep.subr.mxu0 0.0
      %3482 = vmatpush1.msra.mxu0 0.0
      %3483 = vmatprep.subr.mxu0 0.0
      %3484 = vmatpush1.msra.mxu0 0.0
      %3485 = vmatprep.subr.mxu0 0.0
      %3486 = vmatpush1.msra.mxu0 0.0
      %3487 = vmatprep.subr.mxu0 0.0
      %3488 = vmatpush1.msra.mxu0 0.0
      %3489 = vmatprep.mubr.f32.mxu0 0.0
      %3490 = vmatmul.mubr.f32.gmra.mrb[0].mxu0 %v3421
      %v3491 = vpop.f32.mrb[0].mxu0
      %v3492 = vadd.f32 0.0, %v3491
      %v3493 = vpop.f32.mrb[0].mxu0
      %3494 = vdwg.mxu0
      %v3496 = vsel %vm1490, %v3492, 0
      %3498 = vmatprep.subr.mxu0 0.0
      %3499 = vmatpush1.msra.mxu0 %v2846
      %3500 = vmatprep.subr.mxu0 0.0
      %3501 = vmatpush1.msra.mxu0 %v2847
      %3502 = vmatprep.subr.mxu0 0.0
      %3503 = vmatpush1.msra.mxu0 0.0
      %3504 = vmatprep.subr.mxu0 0.0
      %3505 = vmatpush1.msra.mxu0 0.0
      %3506 = vmatprep.subr.mxu0 0.0
      %3507 = vmatpush1.msra.mxu0 0.0
      %3508 = vmatprep.subr.mxu0 0.0
      %3509 = vmatpush1.msra.mxu0 0.0
      %3510 = vmatprep.subr.mxu0 0.0
      %3511 = vmatpush1.msra.mxu0 0.0
      %3512 = vmatprep.subr.mxu0 0.0
      %3513 = vmatpush1.msra.mxu0 0.0
      %3514 = vmatprep.subr.mxu0 0.0
      %3515 = vmatpush1.msra.mxu0 0.0
      %3516 = vmatprep.subr.mxu0 0.0
      %3517 = vmatpush1.msra.mxu0 0.0
      %3518 = vmatprep.subr.mxu0 0.0
      %3519 = vmatpush1.msra.mxu0 0.0
      %3520 = vmatprep.subr.mxu0 0.0
      %3521 = vmatpush1.msra.mxu0 0.0
      %3522 = vmatprep.subr.mxu0 0.0
      %3523 = vmatpush1.msra.mxu0 0.0
      %3524 = vmatprep.subr.mxu0 0.0
      %3525 = vmatpush1.msra.mxu0 0.0
      %3526 = vmatprep.subr.mxu0 0.0
      %3527 = vmatpush1.msra.mxu0 0.0
      %3528 = vmatprep.subr.mxu0 0.0
      %3529 = vmatpush1.msra.mxu0 0.0
      %3530 = vmatprep.subr.mxu0 0.0
      %3531 = vmatpush1.msra.mxu0 0.0
      %3532 = vmatprep.subr.mxu0 0.0
      %3533 = vmatpush1.msra.mxu0 0.0
      %3534 = vmatprep.subr.mxu0 0.0
      %3535 = vmatpush1.msra.mxu0 0.0
      %3536 = vmatprep.subr.mxu0 0.0
      %3537 = vmatpush1.msra.mxu0 0.0
      %3538 = vmatprep.subr.mxu0 0.0
      %3539 = vmatpush1.msra.mxu0 0.0
      %3540 = vmatprep.subr.mxu0 0.0
      %3541 = vmatpush1.msra.mxu0 0.0
      %3542 = vmatprep.subr.mxu0 0.0
      %3543 = vmatpush1.msra.mxu0 0.0
      %3544 = vmatprep.subr.mxu0 0.0
      %3545 = vmatpush1.msra.mxu0 0.0
      %3546 = vmatprep.subr.mxu0 0.0
      %3547 = vmatpush1.msra.mxu0 0.0
      %3548 = vmatprep.subr.mxu0 0.0
      %3549 = vmatpush1.msra.mxu0 0.0
      %3550 = vmatprep.subr.mxu0 0.0
      %3551 = vmatpush1.msra.mxu0 0.0
      %3552 = vmatprep.subr.mxu0 0.0
      %3553 = vmatpush1.msra.mxu0 0.0
      %3554 = vmatprep.subr.mxu0 0.0
      %3555 = vmatpush1.msra.mxu0 0.0
      %3556 = vmatprep.subr.mxu0 0.0
      %3557 = vmatpush1.msra.mxu0 0.0
      %3558 = vmatprep.subr.mxu0 0.0
      %3559 = vmatpush1.msra.mxu0 0.0
      %3560 = vmatprep.subr.mxu0 0.0
      %3561 = vmatpush1.msra.mxu0 0.0
      %3562 = vmatprep.mubr.f32.mxu0 0.0
      %3563 = vmatmul.mubr.f32.gmra.mrb[0].mxu0 %v3496
      %v3564 = vpop.f32.mrb[0].mxu0
      %v3565 = vadd.f32 0.0, %v3564
      %v3566 = vpop.f32.mrb[0].mxu0
      %3567 = vdwg.mxu0
      %v3568 = vadd.f32 %v3325, %v3565
      %3569 = vrot.lane.b32.xlu0 %v2838, 80
      %v3570 = vpop.permute.xlu0 %3569
      %3571 = vrot.lane.b32.xlu0 %v2838, 16
      %v3572 = vpop.permute.xlu0 %3571
      %v3573 = vsel %vm1490, %v3570, 0
      %v3575 = vsel %vm1490, %v3572, 0
      %3577 = vmatprep.subr.mxu0 0.0
      %3578 = vmatpush1.xpose.msra.mxu0 %v3575
      %3579 = vmatprep.subr.mxu0 0.0
      %3580 = vmatpush1.xpose.msra.mxu0 0.0
      %3581 = vmatprep.subr.mxu0 0.0
      %3582 = vmatpush1.xpose.msra.mxu0 0.0
      %3583 = vmatprep.subr.mxu0 0.0
      %3584 = vmatpush1.xpose.msra.mxu0 0.0
      %3585 = vmatprep.subr.mxu0 0.0
      %3586 = vmatpush1.xpose.msra.mxu0 0.0
      %3587 = vmatprep.subr.mxu0 0.0
      %3588 = vmatpush1.xpose.msra.mxu0 0.0
      %3589 = vmatprep.subr.mxu0 0.0
      %3590 = vmatpush1.xpose.msra.mxu0 0.0
      %3591 = vmatprep.subr.mxu0 0.0
      %3592 = vmatpush1.xpose.msra.mxu0 0.0
      %3593 = vmatprep.subr.mxu0 0.0
      %3594 = vmatpush1.xpose.msra.mxu0 0.0
      %3595 = vmatprep.subr.mxu0 0.0
      %3596 = vmatpush1.xpose.msra.mxu0 0.0
      %3597 = vmatprep.subr.mxu0 0.0
      %3598 = vmatpush1.xpose.msra.mxu0 0.0
      %3599 = vmatprep.subr.mxu0 0.0
      %3600 = vmatpush1.xpose.msra.mxu0 0.0
      %3601 = vmatprep.subr.mxu0 0.0
      %3602 = vmatpush1.xpose.msra.mxu0 0.0
      %3603 = vmatprep.subr.mxu0 0.0
      %3604 = vmatpush1.xpose.msra.mxu0 0.0
      %3605 = vmatprep.subr.mxu0 0.0
      %3606 = vmatpush1.xpose.msra.mxu0 0.0
      %3607 = vmatprep.subr.mxu0 0.0
      %3608 = vmatpush1.xpose.msra.mxu0 0.0
      %3609 = vmatprep.subr.mxu0 0.0
      %3610 = vmatpush1.xpose.msra.mxu0 0.0
      %3611 = vmatprep.subr.mxu0 0.0
      %3612 = vmatpush1.xpose.msra.mxu0 0.0
      %3613 = vmatprep.subr.mxu0 0.0
      %3614 = vmatpush1.xpose.msra.mxu0 0.0
      %3615 = vmatprep.subr.mxu0 0.0
      %3616 = vmatpush1.xpose.msra.mxu0 0.0
      %3617 = vmatprep.subr.mxu0 0.0
      %3618 = vmatpush1.xpose.msra.mxu0 0.0
      %3619 = vmatprep.subr.mxu0 0.0
      %3620 = vmatpush1.xpose.msra.mxu0 0.0
      %3621 = vmatprep.subr.mxu0 0.0
      %3622 = vmatpush1.xpose.msra.mxu0 0.0
      %3623 = vmatprep.subr.mxu0 0.0
      %3624 = vmatpush1.xpose.msra.mxu0 0.0
      %3625 = vmatprep.subr.mxu0 0.0
      %3626 = vmatpush1.xpose.msra.mxu0 0.0
      %3627 = vmatprep.subr.mxu0 0.0
      %3628 = vmatpush1.xpose.msra.mxu0 0.0
      %3629 = vmatprep.subr.mxu0 0.0
      %3630 = vmatpush1.xpose.msra.mxu0 0.0
      %3631 = vmatprep.subr.mxu0 0.0
      %3632 = vmatpush1.xpose.msra.mxu0 0.0
      %3633 = vmatprep.subr.mxu0 0.0
      %3634 = vmatpush1.xpose.msra.mxu0 0.0
      %3635 = vmatprep.subr.mxu0 0.0
      %3636 = vmatpush1.xpose.msra.mxu0 0.0
      %3637 = vmatprep.subr.mxu0 0.0
      %3638 = vmatpush1.xpose.msra.mxu0 0.0
      %3639 = vmatprep.subr.mxu0 0.0
      %3640 = vmatpush1.xpose.msra.mxu0 0.0
      %3641 = vmatprep.mubr.f32.mxu0 0.0
      %3642 = vmatmul.mubr.f32.gmra.mrb[0].mxu0 %v3573
      %v3643 = vpop.f32.mrb[0].mxu0
      %v3644 = vadd.f32 0.0, %v3643
      %v3645 = vpop.f32.mrb[0].mxu0
      %3646 = vdwg.mxu0
      %v3647 = vmul.f32 %v3644, 0.25
      %v3648 = vsel %vm1566, %v3647, -inf
      %3649 = vmax.xlane.f32.xlu0 %v3648
      %v3650 = vpop.xlane.xlu0 %3649
      %v3651 = vsub.f32 %v3647, %v3650
      %v3652 = vmul.f32 %v3651, 1.442695
      %v3653 = vpow.pop %v3652
      %v3654 = vsel %vm1566, %v3653, 0.0
      %3655 = vadd.xlane.f32.xlu0 %v3654
      %v3656 = vpop.xlane.xlu0 %3655
      %v3657 = vrcp.pop %v3656
      %v3658 = vmul.f32 %v3653, %v3657
      %3659 = vrot.lane.b32.xlu0 %v2840, 80
      %v3660 = vpop.permute.xlu0 %3659
      %v3662 = vsel %vm1578, %v3658, 0
      %v3664 = vsel %vm1582, %v3660, 0
      %3666 = vmatprep.subr.mxu0 0.0
      %3667 = vmatpush1.msra.mxu0 %v3664
      %3668 = vmatprep.subr.mxu0 0.0
      %3669 = vmatpush1.msra.mxu0 0.0
      %3670 = vmatprep.subr.mxu0 0.0
      %3671 = vmatpush1.msra.mxu0 0.0
      %3672 = vmatprep.subr.mxu0 0.0
      %3673 = vmatpush1.msra.mxu0 0.0
      %3674 = vmatprep.subr.mxu0 0.0
      %3675 = vmatpush1.msra.mxu0 0.0
      %3676 = vmatprep.subr.mxu0 0.0
      %3677 = vmatpush1.msra.mxu0 0.0
      %3678 = vmatprep.subr.mxu0 0.0
      %3679 = vmatpush1.msra.mxu0 0.0
      %3680 = vmatprep.subr.mxu0 0.0
      %3681 = vmatpush1.msra.mxu0 0.0
      %3682 = vmatprep.subr.mxu0 0.0
      %3683 = vmatpush1.msra.mxu0 0.0
      %3684 = vmatprep.subr.mxu0 0.0
      %3685 = vmatpush1.msra.mxu0 0.0
      %3686 = vmatprep.subr.mxu0 0.0
      %3687 = vmatpush1.msra.mxu0 0.0
      %3688 = vmatprep.subr.mxu0 0.0
      %3689 = vmatpush1.msra.mxu0 0.0
      %3690 = vmatprep.subr.mxu0 0.0
      %3691 = vmatpush1.msra.mxu0 0.0
      %3692 = vmatprep.subr.mxu0 0.0
      %3693 = vmatpush1.msra.mxu0 0.0
      %3694 = vmatprep.subr.mxu0 0.0
      %3695 = vmatpush1.msra.mxu0 0.0
      %3696 = vmatprep.subr.mxu0 0.0
      %3697 = vmatpush1.msra.mxu0 0.0
      %3698 = vmatprep.subr.mxu0 0.0
      %3699 = vmatpush1.msra.mxu0 0.0
      %3700 = vmatprep.subr.mxu0 0.0
      %3701 = vmatpush1.msra.mxu0 0.0
      %3702 = vmatprep.subr.mxu0 0.0
      %3703 = vmatpush1.msra.mxu0 0.0
      %3704 = vmatprep.subr.mxu0 0.0
      %3705 = vmatpush1.msra.mxu0 0.0
      %3706 = vmatprep.subr.mxu0 0.0
      %3707 = vmatpush1.msra.mxu0 0.0
      %3708 = vmatprep.subr.mxu0 0.0
      %3709 = vmatpush1.msra.mxu0 0.0
      %3710 = vmatprep.subr.mxu0 0.0
      %3711 = vmatpush1.msra.mxu0 0.0
      %3712 = vmatprep.subr.mxu0 0.0
      %3713 = vmatpush1.msra.mxu0 0.0
      %3714 = vmatprep.subr.mxu0 0.0
      %3715 = vmatpush1.msra.mxu0 0.0
      %3716 = vmatprep.subr.mxu0 0.0
      %3717 = vmatpush1.msra.mxu0 0.0
      %3718 = vmatprep.subr.mxu0 0.0
      %3719 = vmatpush1.msra.mxu0 0.0
      %3720 = vmatprep.subr.mxu0 0.0
      %3721 = vmatpush1.msra.mxu0 0.0
      %3722 = vmatprep.subr.mxu0 0.0
      %3723 = vmatpush1.msra.mxu0 0.0
      %3724 = vmatprep.subr.mxu0 0.0
      %3725 = vmatpush1.msra.mxu0 0.0
      %3726 = vmatprep.subr.mxu0 0.0
      %3727 = vmatpush1.msra.mxu0 0.0
      %3728 = vmatprep.subr.mxu0 0.0
      %3729 = vmatpush1.msra.mxu0 0.0
      %3730 = vmatprep.mubr.f32.mxu0 0.0
      %3731 = vmatmul.mubr.f32.gmra.mrb[0].mxu0 %v3662
      %v3732 = vpop.f32.mrb[0].mxu0
      %v3733 = vadd.f32 0.0, %v3732
      %v3734 = vpop.f32.mrb[0].mxu0
      %3735 = vdwg.mxu0
      %v3737 = vsel %vm1490, %v3733, 0
      %3739 = vmatprep.subr.mxu0 0.0
      %3740 = vmatpush1.msra.mxu0 %v2848
      %3741 = vmatprep.subr.mxu0 0.0
      %3742 = vmatpush1.msra.mxu0 %v2849
      %3743 = vmatprep.subr.mxu0 0.0
      %3744 = vmatpush1.msra.mxu0 0.0
      %3745 = vmatprep.subr.mxu0 0.0
      %3746 = vmatpush1.msra.mxu0 0.0
      %3747 = vmatprep.subr.mxu0 0.0
      %3748 = vmatpush1.msra.mxu0 0.0
      %3749 = vmatprep.subr.mxu0 0.0
      %3750 = vmatpush1.msra.mxu0 0.0
      %3751 = vmatprep.subr.mxu0 0.0
      %3752 = vmatpush1.msra.mxu0 0.0
      %3753 = vmatprep.subr.mxu0 0.0
      %3754 = vmatpush1.msra.mxu0 0.0
      %3755 = vmatprep.subr.mxu0 0.0
      %3756 = vmatpush1.msra.mxu0 0.0
      %3757 = vmatprep.subr.mxu0 0.0
      %3758 = vmatpush1.msra.mxu0 0.0
      %3759 = vmatprep.subr.mxu0 0.0
      %3760 = vmatpush1.msra.mxu0 0.0
      %3761 = vmatprep.subr.mxu0 0.0
      %3762 = vmatpush1.msra.mxu0 0.0
      %3763 = vmatprep.subr.mxu0 0.0
      %3764 = vmatpush1.msra.mxu0 0.0
      %3765 = vmatprep.subr.mxu0 0.0
      %3766 = vmatpush1.msra.mxu0 0.0
      %3767 = vmatprep.subr.mxu0 0.0
      %3768 = vmatpush1.msra.mxu0 0.0
      %3769 = vmatprep.subr.mxu0 0.0
      %3770 = vmatpush1.msra.mxu0 0.0
      %3771 = vmatprep.subr.mxu0 0.0
      %3772 = vmatpush1.msra.mxu0 0.0
      %3773 = vmatprep.subr.mxu0 0.0
      %3774 = vmatpush1.msra.mxu0 0.0
      %3775 = vmatprep.subr.mxu0 0.0
      %3776 = vmatpush1.msra.mxu0 0.0
      %3777 = vmatprep.subr.mxu0 0.0
      %3778 = vmatpush1.msra.mxu0 0.0
      %3779 = vmatprep.subr.mxu0 0.0
      %3780 = vmatpush1.msra.mxu0 0.0
      %3781 = vmatprep.subr.mxu0 0.0
      %3782 = vmatpush1.msra.mxu0 0.0
      %3783 = vmatprep.subr.mxu0 0.0
      %3784 = vmatpush1.msra.mxu0 0.0
      %3785 = vmatprep.subr.mxu0 0.0
      %3786 = vmatpush1.msra.mxu0 0.0
      %3787 = vmatprep.subr.mxu0 0.0
      %3788 = vmatpush1.msra.mxu0 0.0
      %3789 = vmatprep.subr.mxu0 0.0
      %3790 = vmatpush1.msra.mxu0 0.0
      %3791 = vmatprep.subr.mxu0 0.0
      %3792 = vmatpush1.msra.mxu0 0.0
      %3793 = vmatprep.subr.mxu0 0.0
      %3794 = vmatpush1.msra.mxu0 0.0
      %3795 = vmatprep.subr.mxu0 0.0
      %3796 = vmatpush1.msra.mxu0 0.0
      %3797 = vmatprep.subr.mxu0 0.0
      %3798 = vmatpush1.msra.mxu0 0.0
      %3799 = vmatprep.subr.mxu0 0.0
      %3800 = vmatpush1.msra.mxu0 0.0
      %3801 = vmatprep.subr.mxu0 0.0
      %3802 = vmatpush1.msra.mxu0 0.0
      %3803 = vmatprep.mubr.f32.mxu0 0.0
      %3804 = vmatmul.mubr.f32.gmra.mrb[0].mxu0 %v3737
      %v3805 = vpop.f32.mrb[0].mxu0
      %v3806 = vadd.f32 0.0, %v3805
      %v3807 = vpop.f32.mrb[0].mxu0
      %3808 = vdwg.mxu0
      %v3809 = vadd.f32 %v3568, %v3806
      %v3810 = vadd.f32 %v2710, %v3809
      %v3811 = vld [vmem:[%s45] sm:$0x1]
      %v3813 = vlaneseq
      %v3814 = vshrl.u32 %v3813, 7
      %v3815 = vsub.s32 0, %v3814
      %v3816 = vrot.slane %v3811, %v3815
      %v3818 = vadd.f32 %v3810, %v3816
      %v3819 = vld [vmem:[%s47] sm:$0x1]
      %v3820 = vld [vmem:[%s49] sm:$0x1]
      %v3821 = vsel %vm1347, %v3818, 0.0
      %3822 = vadd.xlane.f32.xlu0 %v3821
      %v3823 = vpop.xlane.xlu0 %3822
      %v3824 = vmul.f32 %v3823, %v1351
      %v3825 = vsub.f32 %v3818, %v3824
      %v3826 = vmul.f32 %v3825, %v3825
      %v3827 = vsel %vm1347, %v3826, 0.0
      %3828 = vadd.xlane.f32.xlu0 %v3827
      %v3829 = vpop.xlane.xlu0 %3828
      %v3830 = vmul.f32 %v3829, %v1351
      %v3831 = vadd.f32 %v3830, 1e-06
      %v3832 = vrsqrt.pop %v3831
      %v3833 = vmul.f32 %v3825, %v3832
      %v3835 = vlaneseq
      %v3836 = vshrl.u32 %v3835, 7
      %v3837 = vsub.s32 0, %v3836
      %v3838 = vrot.slane %v3819, %v3837
      %v3840 = vmul.f32 %v3833, %v3838
      %v3842 = vlaneseq
      %v3843 = vshrl.u32 %v3842, 7
      %v3844 = vsub.s32 0, %v3843
      %v3845 = vrot.slane %v3820, %v3844
      %v3847 = vadd.f32 %v3840, %v3845
      %v3848 = vld [vmem:[%s51] sm:$0xff]
      %v3849 = vld [vmem:[%s51 + $0x8] sm:$0xff]
      %v3850 = vld [vmem:[%s51 + $0x10] sm:$0xff]
      %v3851 = vld [vmem:[%s51 + $0x18] sm:$0xff]
      %v3852 = vld [vmem:[%s51 + $0x20] sm:$0xff]
      %v3853 = vld [vmem:[%s51 + $0x28] sm:$0xff]
      %v3854 = vld [vmem:[%s51 + $0x30] sm:$0xff]
      %v3855 = vld [vmem:[%s51 + $0x38] sm:$0xff]
      %v3856 = vld [vmem:[%s51 + $0x40] sm:$0xff]
      %v3857 = vld [vmem:[%s51 + $0x48] sm:$0xff]
      %v3858 = vld [vmem:[%s51 + $0x50] sm:$0xff]
      %v3859 = vld [vmem:[%s51 + $0x58] sm:$0xff]
      %v3860 = vld [vmem:[%s51 + $0x60] sm:$0xff]
      %v3861 = vld [vmem:[%s51 + $0x68] sm:$0xff]
      %v3862 = vld [vmem:[%s51 + $0x70] sm:$0xff]
      %v3863 = vld [vmem:[%s51 + $0x78] sm:$0xff]
      %v3864 = vld [vmem:[%s53] sm:$0x3]
      %v3866 = vlaneseq
      %v3867 = vshrl.u32 %v3866, 7
      %v3868 = vsub.s32 0, %v3867
      %v3869 = vrot.slane %v3864, %v3868
      %v3870 = vlaneseq
      %v3871 = vshrl.u32 %v3870, 7
      %v3872 = vsub.s32 1, %v3871
      %v3873 = vrot.slane %v3864, %v3872
      %v3877 = vsel %vm1404, %v3847, 0
      %3879 = vmatprep.subr.mxu0 %v3849
      %3880 = vmatpush1.msra.mxu0 %v3848
      %3881 = vmatprep.subr.mxu0 %v3851
      %3882 = vmatpush1.msra.mxu0 %v3850
      %3883 = vmatprep.subr.mxu0 %v3853
      %3884 = vmatpush1.msra.mxu0 %v3852
      %3885 = vmatprep.subr.mxu0 %v3855
      %3886 = vmatpush1.msra.mxu0 %v3854
      %3887 = vmatprep.subr.mxu0 %v3857
      %3888 = vmatpush1.msra.mxu0 %v3856
      %3889 = vmatprep.subr.mxu0 %v3859
      %3890 = vmatpush1.msra.mxu0 %v3858
      %3891 = vmatprep.subr.mxu0 %v3861
      %3892 = vmatpush1.msra.mxu0 %v3860
      %3893 = vmatprep.subr.mxu0 %v3863
      %3894 = vmatpush1.msra.mxu0 %v3862
      %3895 = vmatprep.subr.mxu0 0.0
      %3896 = vmatpush1.msra.mxu0 0.0
      %3897 = vmatprep.subr.mxu0 0.0
      %3898 = vmatpush1.msra.mxu0 0.0
      %3899 = vmatprep.subr.mxu0 0.0
      %3900 = vmatpush1.msra.mxu0 0.0
      %3901 = vmatprep.subr.mxu0 0.0
      %3902 = vmatpush1.msra.mxu0 0.0
      %3903 = vmatprep.subr.mxu0 0.0
      %3904 = vmatpush1.msra.mxu0 0.0
      %3905 = vmatprep.subr.mxu0 0.0
      %3906 = vmatpush1.msra.mxu0 0.0
      %3907 = vmatprep.subr.mxu0 0.0
      %3908 = vmatpush1.msra.mxu0 0.0
      %3909 = vmatprep.subr.mxu0 0.0
      %3910 = vmatpush1.msra.mxu0 0.0
      %3911 = vmatprep.subr.mxu0 0.0
      %3912 = vmatpush1.msra.mxu0 0.0
      %3913 = vmatprep.subr.mxu0 0.0
      %3914 = vmatpush1.msra.mxu0 0.0
      %3915 = vmatprep.subr.mxu0 0.0
      %3916 = vmatpush1.msra.mxu0 0.0
      %3917 = vmatprep.subr.mxu0 0.0
      %3918 = vmatpush1.msra.mxu0 0.0
      %3919 = vmatprep.subr.mxu0 0.0
      %3920 = vmatpush1.msra.mxu0 0.0
      %3921 = vmatprep.subr.mxu0 0.0
      %3922 = vmatpush1.msra.mxu0 0.0
      %3923 = vmatprep.subr.mxu0 0.0
      %3924 = vmatpush1.msra.mxu0 0.0
      %3925 = vmatprep.subr.mxu0 0.0
      %3926 = vmatpush1.msra.mxu0 0.0
      %3927 = vmatprep.subr.mxu0 0.0
      %3928 = vmatpush1.msra.mxu0 0.0
      %3929 = vmatprep.subr.mxu0 0.0
      %3930 = vmatpush1.msra.mxu0 0.0
      %3931 = vmatprep.subr.mxu0 0.0
      %3932 = vmatpush1.msra.mxu0 0.0
      %3933 = vmatprep.subr.mxu0 0.0
      %3934 = vmatpush1.msra.mxu0 0.0
      %3935 = vmatprep.subr.mxu0 0.0
      %3936 = vmatpush1.msra.mxu0 0.0
      %3937 = vmatprep.subr.mxu0 0.0
      %3938 = vmatpush1.msra.mxu0 0.0
      %3939 = vmatprep.subr.mxu0 0.0
      %3940 = vmatpush1.msra.mxu0 0.0
      %3941 = vmatprep.subr.mxu0 0.0
      %3942 = vmatpush1.msra.mxu0 0.0
      %3943 = vmatprep.mubr.f32.mxu0 0.0
      %3944 = vmatmul.mubr.f32.gmra.mrb[0].mxu0 %v3877
      %v3945 = vpop.f32.mrb[0].mxu0
      %v3946 = vadd.f32 %v3869, %v3945
      %v3947 = vpop.f32.mrb[0].mxu0
      %v3948 = vadd.f32 %v3873, %v3947
      %3949 = vdwg.mxu0
      %v3950 = vmul.f32 %v3946, 0.5
      %v3951 = vmul.f32 %v3948, 0.5
      %v3952 = vmul.f32 %v3946, 0.70710677
      %v3953 = vmul.f32 %v3948, 0.70710677
      %v3954 = verf.f32.pop %v3952
      %v3955 = verf.f32.pop %v3953
      %v3956 = vadd.f32 %v3954, 1.0
      %v3957 = vadd.f32 %v3955, 1.0
      %v3958 = vmul.f32 %v3950, %v3956
      %v3959 = vmul.f32 %v3951, %v3957
      %v3960 = vld [vmem:[%s55] sm:$0xff]
      %v3961 = vld [vmem:[%s55 + $0x8] sm:$0xff]
      %v3962 = vld [vmem:[%s55 + $0x10] sm:$0xff]
      %v3963 = vld [vmem:[%s55 + $0x18] sm:$0xff]
      %v3964 = vld [vmem:[%s55 + $0x20] sm:$0xff]
      %v3965 = vld [vmem:[%s55 + $0x28] sm:$0xff]
      %v3966 = vld [vmem:[%s55 + $0x30] sm:$0xff]
      %v3967 = vld [vmem:[%s55 + $0x38] sm:$0xff]
      %v3968 = vld [vmem:[%s55 + $0x40] sm:$0xff]
      %v3969 = vld [vmem:[%s55 + $0x48] sm:$0xff]
      %v3970 = vld [vmem:[%s55 + $0x50] sm:$0xff]
      %v3971 = vld [vmem:[%s55 + $0x58] sm:$0xff]
      %v3972 = vld [vmem:[%s55 + $0x60] sm:$0xff]
      %v3973 = vld [vmem:[%s55 + $0x68] sm:$0xff]
      %v3974 = vld [vmem:[%s55 + $0x70] sm:$0xff]
      %v3975 = vld [vmem:[%s55 + $0x78] sm:$0xff]
      %v3976 = vld [vmem:[%s55 + $0x80] sm:$0xff]
      %v3977 = vld [vmem:[%s55 + $0x88] sm:$0xff]
      %v3978 = vld [vmem:[%s55 + $0x90] sm:$0xff]
      %v3979 = vld [vmem:[%s55 + $0x98] sm:$0xff]
      %v3980 = vld [vmem:[%s55 + $0xa0] sm:$0xff]
      %v3981 = vld [vmem:[%s55 + $0xa8] sm:$0xff]
      %v3982 = vld [vmem:[%s55 + $0xb0] sm:$0xff]
      %v3983 = vld [vmem:[%s55 + $0xb8] sm:$0xff]
      %v3984 = vld [vmem:[%s55 + $0xc0] sm:$0xff]
      %v3985 = vld [vmem:[%s55 + $0xc8] sm:$0xff]
      %v3986 = vld [vmem:[%s55 + $0xd0] sm:$0xff]
      %v3987 = vld [vmem:[%s55 + $0xd8] sm:$0xff]
      %v3988 = vld [vmem:[%s55 + $0xe0] sm:$0xff]
      %v3989 = vld [vmem:[%s55 + $0xe8] sm:$0xff]
      %v3990 = vld [vmem:[%s55 + $0xf0] sm:$0xff]
      %v3991 = vld [vmem:[%s55 + $0xf8] sm:$0xff]
      %v3992 = vld [vmem:[%s57] sm:$0x1]
      %v3994 = vlaneseq
      %v3995 = vshrl.u32 %v3994, 7
      %v3996 = vsub.s32 0, %v3995
      %v3997 = vrot.slane %v3992, %v3996
      %3999 = vmatprep.subr.mxu0 0.0
      %4000 = vmatpush1.msra.mxu0 %v3960
      %4001 = vmatprep.subr.mxu0 0.0
      %4002 = vmatpush1.msra.mxu0 %v3961
      %4003 = vmatprep.subr.mxu0 0.0
      %4004 = vmatpush1.msra.mxu0 %v3962
      %4005 = vmatprep.subr.mxu0 0.0
      %4006 = vmatpush1.msra.mxu0 %v3963
      %4007 = vmatprep.subr.mxu0 0.0
      %4008 = vmatpush1.msra.mxu0 %v3964
      %4009 = vmatprep.subr.mxu0 0.0
      %4010 = vmatpush1.msra.mxu0 %v3965
      %4011 = vmatprep.subr.mxu0 0.0
      %4012 = vmatpush1.msra.mxu0 %v3966
      %4013 = vmatprep.subr.mxu0 0.0
      %4014 = vmatpush1.msra.mxu0 %v3967
      %4015 = vmatprep.subr.mxu0 0.0
      %4016 = vmatpush1.msra.mxu0 %v3968
      %4017 = vmatprep.subr.mxu0 0.0
      %4018 = vmatpush1.msra.mxu0 %v3969
      %4019 = vmatprep.subr.mxu0 0.0
      %4020 = vmatpush1.msra.mxu0 %v3970
      %4021 = vmatprep.subr.mxu0 0.0
      %4022 = vmatpush1.msra.mxu0 %v3971
      %4023 = vmatprep.subr.mxu0 0.0
      %4024 = vmatpush1.msra.mxu0 %v3972
      %4025 = vmatprep.subr.mxu0 0.0
      %4026 = vmatpush1.msra.mxu0 %v3973
      %4027 = vmatprep.subr.mxu0 0.0
      %4028 = vmatpush1.msra.mxu0 %v3974
      %4029 = vmatprep.subr.mxu0 0.0
      %4030 = vmatpush1.msra.mxu0 %v3975
      %4031 = vmatprep.subr.mxu0 0.0
      %4032 = vmatpush1.msra.mxu0 %v3976
      %4033 = vmatprep.subr.mxu0 0.0
      %4034 = vmatpush1.msra.mxu0 %v3977
      %4035 = vmatprep.subr.mxu0 0.0
      %4036 = vmatpush1.msra.mxu0 %v3978
      %4037 = vmatprep.subr.mxu0 0.0
      %4038 = vmatpush1.msra.mxu0 %v3979
      %4039 = vmatprep.subr.mxu0 0.0
      %4040 = vmatpush1.msra.mxu0 %v3980
      %4041 = vmatprep.subr.mxu0 0.0
      %4042 = vmatpush1.msra.mxu0 %v3981
      %4043 = vmatprep.subr.mxu0 0.0
      %4044 = vmatpush1.msra.mxu0 %v3982
      %4045 = vmatprep.subr.mxu0 0.0
      %4046 = vmatpush1.msra.mxu0 %v3983
      %4047 = vmatprep.subr.mxu0 0.0
      %4048 = vmatpush1.msra.mxu0 %v3984
      %4049 = vmatprep.subr.mxu0 0.0
      %4050 = vmatpush1.msra.mxu0 %v3985
      %4051 = vmatprep.subr.mxu0 0.0
      %4052 = vmatpush1.msra.mxu0 %v3986
      %4053 = vmatprep.subr.mxu0 0.0
      %4054 = vmatpush1.msra.mxu0 %v3987
      %4055 = vmatprep.subr.mxu0 0.0
      %4056 = vmatpush1.msra.mxu0 %v3988
      %4057 = vmatprep.subr.mxu0 0.0
      %4058 = vmatpush1.msra.mxu0 %v3989
      %4059 = vmatprep.subr.mxu0 0.0
      %4060 = vmatpush1.msra.mxu0 %v3990
      %4061 = vmatprep.subr.mxu0 0.0
      %4062 = vmatpush1.msra.mxu0 %v3991
      %4063 = vmatprep.mubr.f32.mxu0 %v3959
      %4064 = vmatmul.mubr.f32.gmra.mrb[0].mxu0 %v3958
      %v4065 = vpop.f32.mrb[0].mxu0
      %v4066 = vadd.f32 %v3997, %v4065
      %v4067 = vpop.f32.mrb[0].mxu0
      %4068 = vdwg.mxu0
      %v4069 = vadd.f32 %v3818, %v4066
      %v4070 = vld [vmem:[%s59] sm:$0x1]
      %v4071 = vld [vmem:[%s61] sm:$0x1]
      %v4072 = vsel %vm1347, %v4069, 0.0
      %4073 = vadd.xlane.f32.xlu0 %v4072
      %v4074 = vpop.xlane.xlu0 %4073
      %v4075 = vmul.f32 %v4074, %v1351
      %v4076 = vsub.f32 %v4069, %v4075
      %v4077 = vmul.f32 %v4076, %v4076
      %v4078 = vsel %vm1347, %v4077, 0.0
      %4079 = vadd.xlane.f32.xlu0 %v4078
      %v4080 = vpop.xlane.xlu0 %4079
      %v4081 = vmul.f32 %v4080, %v1351
      %v4082 = vadd.f32 %v4081, 1e-06
      %v4083 = vrsqrt.pop %v4082
      %v4084 = vmul.f32 %v4076, %v4083
      %v4086 = vlaneseq
      %v4087 = vshrl.u32 %v4086, 7
      %v4088 = vsub.s32 0, %v4087
      %v4089 = vrot.slane %v4070, %v4088
      %v4091 = vmul.f32 %v4084, %v4089
      %v4093 = vlaneseq
      %v4094 = vshrl.u32 %v4093, 7
      %v4095 = vsub.s32 0, %v4094
      %v4096 = vrot.slane %v4071, %v4095
      %v4098 = vadd.f32 %v4091, %v4096
      %v4099 = vld [vmem:[%s63] sm:$0xff]
      %v4100 = vld [vmem:[%s63 + $0x8] sm:$0xff]
      %v4101 = vld [vmem:[%s63 + $0x10] sm:$0xff]
      %v4102 = vld [vmem:[%s63 + $0x18] sm:$0xff]
      %v4103 = vld [vmem:[%s63 + $0x20] sm:$0xff]
      %v4104 = vld [vmem:[%s63 + $0x28] sm:$0xff]
      %v4105 = vld [vmem:[%s63 + $0x30] sm:$0xff]
      %v4106 = vld [vmem:[%s63 + $0x38] sm:$0xff]
      %v4107 = vld [vmem:[%s65] sm:$0x1]
      %v4109 = vlaneseq
      %v4110 = vshrl.u32 %v4109, 7
      %v4111 = vsub.s32 0, %v4110
      %v4112 = vrot.slane %v4107, %v4111
      %v4115 = vsel %vm1404, %v4098, 0
      %4117 = vmatprep.subr.mxu0 0.0
      %4118 = vmatpush1.msra.mxu0 %v4099
      %4119 = vmatprep.subr.mxu0 0.0
      %4120 = vmatpush1.msra.mxu0 %v4100
      %4121 = vmatprep.subr.mxu0 0.0
      %4122 = vmatpush1.msra.mxu0 %v4101
      %4123 = vmatprep.subr.mxu0 0.0
      %4124 = vmatpush1.msra.mxu0 %v4102
      %4125 = vmatprep.subr.mxu0 0.0
      %4126 = vmatpush1.msra.mxu0 %v4103
      %4127 = vmatprep.subr.mxu0 0.0
      %4128 = vmatpush1.msra.mxu0 %v4104
      %4129 = vmatprep.subr.mxu0 0.0
      %4130 = vmatpush1.msra.mxu0 %v4105
      %4131 = vmatprep.subr.mxu0 0.0
      %4132 = vmatpush1.msra.mxu0 %v4106
      %4133 = vmatprep.subr.mxu0 0.0
      %4134 = vmatpush1.msra.mxu0 0.0
      %4135 = vmatprep.subr.mxu0 0.0
      %4136 = vmatpush1.msra.mxu0 0.0
      %4137 = vmatprep.subr.mxu0 0.0
      %4138 = vmatpush1.msra.mxu0 0.0
      %4139 = vmatprep.subr.mxu0 0.0
      %4140 = vmatpush1.msra.mxu0 0.0
      %4141 = vmatprep.subr.mxu0 0.0
      %4142 = vmatpush1.msra.mxu0 0.0
      %4143 = vmatprep.subr.mxu0 0.0
      %4144 = vmatpush1.msra.mxu0 0.0
      %4145 = vmatprep.subr.mxu0 0.0
      %4146 = vmatpush1.msra.mxu0 0.0
      %4147 = vmatprep.subr.mxu0 0.0
      %4148 = vmatpush1.msra.mxu0 0.0
      %4149 = vmatprep.subr.mxu0 0.0
      %4150 = vmatpush1.msra.mxu0 0.0
      %4151 = vmatprep.subr.mxu0 0.0
      %4152 = vmatpush1.msra.mxu0 0.0
      %4153 = vmatprep.subr.mxu0 0.0
      %4154 = vmatpush1.msra.mxu0 0.0
      %4155 = vmatprep.subr.mxu0 0.0
      %4156 = vmatpush1.msra.mxu0 0.0
      %4157 = vmatprep.subr.mxu0 0.0
      %4158 = vmatpush1.msra.mxu0 0.0
      %4159 = vmatprep.subr.mxu0 0.0
      %4160 = vmatpush1.msra.mxu0 0.0
      %4161 = vmatprep.subr.mxu0 0.0
      %4162 = vmatpush1.msra.mxu0 0.0
      %4163 = vmatprep.subr.mxu0 0.0
      %4164 = vmatpush1.msra.mxu0 0.0
      %4165 = vmatprep.subr.mxu0 0.0
      %4166 = vmatpush1.msra.mxu0 0.0
      %4167 = vmatprep.subr.mxu0 0.0
      %4168 = vmatpush1.msra.mxu0 0.0
      %4169 = vmatprep.subr.mxu0 0.0
      %4170 = vmatpush1.msra.mxu0 0.0
      %4171 = vmatprep.subr.mxu0 0.0
      %4172 = vmatpush1.msra.mxu0 0.0
      %4173 = vmatprep.subr.mxu0 0.0
      %4174 = vmatpush1.msra.mxu0 0.0
      %4175 = vmatprep.subr.mxu0 0.0
      %4176 = vmatpush1.msra.mxu0 0.0
      %4177 = vmatprep.subr.mxu0 0.0
      %4178 = vmatpush1.msra.mxu0 0.0
      %4179 = vmatprep.subr.mxu0 0.0
      %4180 = vmatpush1.msra.mxu0 0.0
      %4181 = vmatprep.mubr.f32.mxu0 0.0
      %4182 = vmatmul.mubr.f32.gmra.mrb[0].mxu0 %v4115
      %v4183 = vpop.f32.mrb[0].mxu0
      %v4184 = vadd.f32 %v4112, %v4183
      %v4185 = vpop.f32.mrb[0].mxu0
      %4186 = vdwg.mxu0
      %4187 = vst [vmem:[%s1012] sm:$0x1f] %v4184
      %p4188 = scmp.lt.s32.totalorder %s78, 1
      %s4189 = scalar_select %p4188, %s78, 1
      %s4190 = smul.addr %s4189, 8
      %s4191 = scalar_lea.vmem %s67, %s4190
      // Predicated region
      $region153: #{vit_forward.1} parent=151 // pred_check
        %p4192 = pneg %p794
      $region154: #{vit_forward.1} parent=151 // pred_check_branch
        %4194 = sbr.rel (%p4192) target = $region156
      $region155: #{vit_forward.1} parent=151 // pred_region
        _
      $region156: #{vit_forward.1} parent=151 // pred_fallthru
        _
    $region152: #{vit_forward.1} parent=5 // pred_fallthru
      _
    %p4195 = scmp.le.s32.totalorder 2, %s73
    // Predicated region
    $region157: #{vit_forward.1} parent=5 // pred_check
      %p4196 = pneg %p4195
    $region158: #{vit_forward.1} parent=5 // pred_check_branch
      %4198 = sbr.rel (%p4196) target = $region160
    $region159: #{vit_forward.1} parent=5 // pred_region
      %s4199 = ssub.s32 %s73, 2
      // Predicated region
      $region161: #{vit_forward.1} parent=159 // pred_check
        %p4200 = pneg %p800
      $region162: #{vit_forward.1} parent=159 // pred_check_branch
        %4202 = sbr.rel (%p4200) target = $region164
      $region163: #{vit_forward.1} parent=159 // pred_region
        %p4203 = scmp.lt.s32.totalorder %s79, 1
        %s4204 = scalar_select %p4203, %s79, 1
        %s4205 = smul.addr %s4204, 8
        %s4206 = scalar_lea.vmem %s67, %s4205
      $region164: #{vit_forward.1} parent=159 // pred_fallthru
        _
    $region160: #{vit_forward.1} parent=5 // pred_fallthru
      _
  $region6: #{vit_forward.1} parent=0 // loop_footer
    %s77 = sadd.s32 1, %s73
  $region7: #{vit_forward.1} parent=0 // loop_footer_branch
    %72 = sbr.rel target = $region3
  $region8: #{vit_forward.1} parent=0 // loop_exit
    _

</llo_original>
